<compile_context>
chip_gen: v6e
topology: v6e:2x2x1
jax: 0.10.0
libtpu: 0.0.40
codegen_flags: <defaults>
</compile_context>

<pallas_src>
import functools

import jax
import jax.numpy as jnp
from jax import lax
from jax.experimental import pallas as pl
from jax.experimental.pallas import tpu as pltpu


def _lse_and_class0(conf_ref):
    """Log-sum-exp over the (small) class axis plus the class-0 logit.

    Unrolled over classes so only lane-dense 2-D (TB, TP) tiles are live —
    avoids C-on-sublane 3-D intermediates and 3-D sublane reductions.
    """
    C = conf_ref.shape[1]
    m = conf_ref[:, 0, :].astype(jnp.float32)
    for c in range(1, C):
        m = jnp.maximum(m, conf_ref[:, c, :].astype(jnp.float32))
    s = jnp.zeros_like(m)
    for c in range(C):
        s += jnp.exp(conf_ref[:, c, :].astype(jnp.float32) - m)
    lse = jnp.log(s) + m
    return lse, conf_ref[:, 0, :].astype(jnp.float32)


def _multibox_loss_kernel(conf_i_ref, lab_i_ref, ploc_ref, gloc_ref,
                          conf_j_ref, lab_j_ref,
                          out_sl1_ref, out_cls_ref,
                          rank_ref, negli_ref, lsei_ref, nposrow_ref,
                          sl1acc_ref, clsacc_ref, nposacc_ref,
                          *, neg_pos_ratio):
    bt = pl.program_id(0)
    it = pl.program_id(1)
    jt = pl.program_id(2)
    nb = pl.num_programs(0)
    ni = pl.num_programs(1)
    nj = pl.num_programs(2)

    TB, C, TPI = conf_i_ref.shape
    TPJ = conf_j_ref.shape[2]

    # ---- global accumulator init (very first grid step) --------------------
    @pl.when((bt == 0) & (it == 0) & (jt == 0))
    def _():
        sl1acc_ref[...] = jnp.zeros_like(sl1acc_ref)
        clsacc_ref[...] = jnp.zeros_like(clsacc_ref)
        nposacc_ref[...] = jnp.zeros_like(nposacc_ref)

    # ---- per-(b, i) init at the first j step --------------------------------
    @pl.when(jt == 0)
    def _():
        rank_ref[...] = jnp.zeros_like(rank_ref)
        nposrow_ref[...] = jnp.zeros_like(nposrow_ref)
        lse_i, conf0_i = _lse_and_class0(conf_i_ref)            # (TB, TPI)
        lsei_ref[...] = lse_i
        bg_i = lse_i - conf0_i                                  # -log_softmax[...,0]
        lab_i = lab_i_ref[:, 0, :]
        negli_ref[...] = jnp.where(lab_i > 0, -jnp.inf, bg_i)

    # ---- j-side background loss (every step) --------------------------------
    lse_j, conf0_j = _lse_and_class0(conf_j_ref)                # (TB, TPJ)
    bg_j = lse_j - conf0_j
    lab_j = lab_j_ref[:, 0, :]
    pos_j = lab_j > 0
    neg_loss_j = jnp.where(pos_j, -jnp.inf, bg_j)               # (TB, TPJ)

    # per-row positive count, accumulated over the whole P axis
    nposrow_ref[...] += jnp.sum(pos_j.astype(jnp.float32), axis=1, keepdims=True)

    # ---- pairwise descending-rank accumulation ------------------------------
    li = negli_ref[...][:, :, None]                             # (TB, TPI, 1)
    lj = neg_loss_j[:, None, :]                                 # (TB, 1, TPJ)

    @pl.when(jt < it)
    def _():  # every global j index precedes every i index -> ties count
        rank_ref[...] += jnp.sum((lj >= li).astype(jnp.float32), axis=2)

    @pl.when(jt > it)
    def _():  # every global j index follows every i index -> ties don't count
        rank_ref[...] += jnp.sum((lj > li).astype(jnp.float32), axis=2)

    @pl.when(jt == it)
    def _():  # diagonal tile: element-wise stable tie-break on local index
        gi = lax.broadcasted_iota(jnp.int32, (TB, TPI, TPJ), 1)
        gj = lax.broadcasted_iota(jnp.int32, (TB, TPI, TPJ), 2)
        before = (lj > li) | ((lj == li) & (gj < gi))
        rank_ref[...] += jnp.sum(before.astype(jnp.float32), axis=2)

    # ---- finalize this (b, i) tile at the last j step ------------------------
    @pl.when(jt == nj - 1)
    def _():
        lab_i = lab_i_ref[:, 0, :]                              # (TB, TPI)
        pos_i = lab_i > 0
        num_neg = nposrow_ref[...] * jnp.float32(neg_pos_ratio)  # (TB, 1)
        mask = pos_i | (rank_ref[...] < num_neg)                # (TB, TPI)

        # cross-entropy at the label class: short unroll over C, no one-hot.
        conf_at_label = jnp.zeros((TB, TPI), jnp.float32)
        for c in range(C):
            conf_at_label += jnp.where(
                lab_i == c, conf_i_ref[:, c, :].astype(jnp.float32), 0.0)
        ce = lsei_ref[...] - conf_at_label
        clsacc_ref[...] += jnp.sum(jnp.where(mask, ce, 0.0), keepdims=True)

        # smooth L1 over the 4 box coords of positive priors.
        sl1_pp = jnp.zeros((TB, TPI), jnp.float32)
        for d in range(4):
            ad = jnp.abs(ploc_ref[:, d, :].astype(jnp.float32)
                         - gloc_ref[:, d, :].astype(jnp.float32))
            sl1_pp += jnp.where(ad < 1.0, 0.5 * ad * ad, ad - 0.5)
        sl1acc_ref[...] += jnp.sum(jnp.where(pos_i, sl1_pp, 0.0), keepdims=True)

        nposacc_ref[...] += jnp.sum(pos_i.astype(jnp.float32), keepdims=True)

        # very last grid step: normalize and emit the two scalar losses.
        @pl.when((bt == nb - 1) & (it == ni - 1))
        def _():
            denom = jnp.maximum(nposacc_ref[...], 1.0)   # guard: zero positives
            out_sl1_ref[...] = sl1acc_ref[...] / denom
            out_cls_ref[...] = clsacc_ref[...] / denom


def _pick_tile(dim, pref, align):
    """Largest tile <= pref that divides `dim` and is a multiple of `align`
    (the full dim, always legal, is the fallback)."""
    if dim <= pref:
        return dim
    t = (pref // align) * align
    while t >= align:
        if dim % t == 0:
            return t
        t -= align
    return dim


def multibox_loss(confidence, predicted_locations, labels, gt_locations,
                  neg_pos_ratio=3, *, batch_tile=4, prior_tile=512):
    """Returns (smooth_l1_loss / num_pos, classification_loss / num_pos)."""
    B, P, C = confidence.shape

    # Lane-dense relayout: the big priors axis P goes last (lane axis).
    # Native dtypes are DMA'd; the kernel casts to f32 internally.
    conf = jnp.transpose(confidence, (0, 2, 1))            # (B, C, P)
    ploc = jnp.transpose(predicted_locations, (0, 2, 1))   # (B, 4, P)
    gloc = jnp.transpose(gt_locations, (0, 2, 1))          # (B, 4, P)
    lab = labels.astype(jnp.int32)[:, None, :]             # (B, 1, P)

    TB = _pick_tile(B, batch_tile, 1)
    TP = _pick_tile(P, prior_tile, 128)
    grid = (B // TB, P // TP, P // TP)

    kernel = functools.partial(_multibox_loss_kernel,
                               neg_pos_ratio=neg_pos_ratio)
    out_sl1, out_cls = pl.pallas_call(
        kernel,
        out_shape=(jax.ShapeDtypeStruct((1, 1), jnp.float32),
                   jax.ShapeDtypeStruct((1, 1), jnp.float32)),
        grid_spec=pltpu.PrefetchScalarGridSpec(
            num_scalar_prefetch=0,
            grid=grid,
            in_specs=[
                pl.BlockSpec((TB, C, TP), lambda b, i, j: (b, 0, i)),  # conf_i
                pl.BlockSpec((TB, 1, TP), lambda b, i, j: (b, 0, i)),  # labels_i
                pl.BlockSpec((TB, 4, TP), lambda b, i, j: (b, 0, i)),  # ploc_i
                pl.BlockSpec((TB, 4, TP), lambda b, i, j: (b, 0, i)),  # gloc_i
                pl.BlockSpec((TB, C, TP), lambda b, i, j: (b, 0, j)),  # conf_j
                pl.BlockSpec((TB, 1, TP), lambda b, i, j: (b, 0, j)),  # labels_j
            ],
            out_specs=[
                pl.BlockSpec((1, 1), lambda b, i, j: (0, 0)),
                pl.BlockSpec((1, 1), lambda b, i, j: (0, 0)),
            ],
            scratch_shapes=[
                pltpu.VMEM((TB, TP), jnp.float32),   # rank accumulator
                pltpu.VMEM((TB, TP), jnp.float32),   # cached neg_loss_i
                pltpu.VMEM((TB, TP), jnp.float32),   # cached logsumexp_i
                pltpu.VMEM((TB, 1), jnp.float32),    # per-row positive count
                pltpu.VMEM((1, 1), jnp.float32),     # global smooth-L1 sum
                pltpu.VMEM((1, 1), jnp.float32),     # global class-loss sum
                pltpu.VMEM((1, 1), jnp.float32),     # global num_pos
            ],
        ),
        compiler_params=pltpu.CompilerParams(
            dimension_semantics=("arbitrary", "arbitrary", "arbitrary"),
            vmem_limit_bytes=32 * 1024 * 1024,
        ),
    )(conf, lab, ploc, gloc, conf, lab)
    return out_sl1[0, 0], out_cls[0, 0]


def _reference(confidence, predicted_locations, labels, gt_locations,
               neg_pos_ratio=3):
    # Pure-JAX reference (same semantics, same rank tie-break).
    B, P, C = confidence.shape
    log_probs = jax.nn.log_softmax(confidence, axis=2)
    bg_loss = -log_probs[:, :, 0]
    pos_mask = labels > 0
    num_pos_row = jnp.sum(pos_mask, axis=1, keepdims=True)
    num_neg_row = num_pos_row * neg_pos_ratio
    neg_loss = jnp.where(pos_mask, -jnp.inf, bg_loss)
    li = neg_loss[:, :, None]
    lj = neg_loss[:, None, :]
    idx_i = lax.broadcasted_iota(jnp.int32, (B, P, P), 1)
    idx_j = lax.broadcasted_iota(jnp.int32, (B, P, P), 2)
    rank = jnp.sum((lj > li) | ((lj == li) & (idx_j < idx_i)), axis=2)
    mask = pos_mask | (rank < num_neg_row)
    lse = jax.nn.logsumexp(confidence, axis=2)
    conf_at_label = jnp.take_along_axis(confidence, labels[:, :, None],
                                        axis=2)[:, :, 0]
    ce = lse - conf_at_label
    cls_loss = jnp.sum(jnp.where(mask, ce, 0.0))
    diff = jnp.abs(predicted_locations - gt_locations)
    sl1 = jnp.where(diff < 1.0, 0.5 * diff * diff, diff - 0.5)
    sl1_loss = jnp.sum(jnp.where(pos_mask[:, :, None], sl1, 0.0))
    num_pos = jnp.maximum(jnp.sum(pos_mask).astype(jnp.float32), 1.0)
    return sl1_loss / num_pos, cls_loss / num_pos


if __name__ == "__main__":
    key = jax.random.PRNGKey(0)
    B, P, C = 2, 256, 8          # batch, num_priors, num_classes
    neg_pos_ratio = 3

    k_prior, k_conf, k_ploc, k_gloc, k_lab, k_pos = jax.random.split(key, 6)

    # Module "parameters": priors + config scalars from __init__ are not used
    # by the forward computation itself (priors matter for target encoding).
    priors = jax.random.uniform(k_prior, (P, 4), dtype=jnp.float32)
    del priors

    confidence = jax.random.normal(k_conf, (B, P, C), dtype=jnp.float32)
    predicted_locations = jax.random.normal(k_ploc, (B, P, 4),
                                            dtype=jnp.float32)
    gt_locations = jax.random.normal(k_gloc, (B, P, 4), dtype=jnp.float32)
    # ~15% positive priors so hard-negative mining actually selects a cutoff.
    lab_cls = jax.random.randint(k_lab, (B, P), 1, C, dtype=jnp.int32)
    is_pos = jax.random.uniform(k_pos, (B, P)) < 0.15
    labels = jnp.where(is_pos, lab_cls, 0).astype(jnp.int32)

    # prior_tile=128 -> grid (1, 2, 2): exercises off-diagonal / diagonal rank
    # branches and the per-tile init/finalize accumulation logic.
    sl1, cls = multibox_loss(confidence, predicted_locations, labels,
                             gt_locations, neg_pos_ratio=neg_pos_ratio,
                             prior_tile=128)
    jax.block_until_ready((sl1, cls))

    ref_sl1, ref_cls = _reference(confidence, predicted_locations, labels,
                                  gt_locations, neg_pos_ratio=neg_pos_ratio)
    assert jnp.allclose(sl1, ref_sl1, rtol=1e-4, atol=1e-4), (sl1, ref_sl1)
    assert jnp.allclose(cls, ref_cls, rtol=1e-4, atol=1e-4), (cls, ref_cls)

    print("KERNEL_OK")
</pallas_src>

<mosaic_0001>
module attributes {stable_mosaic.version = 11 : i64} {
  func.func @_multibox_loss_kernel(%arg0: i32, %arg1: i32, %arg2: i32, %arg3: memref<2x8x128xf32, #tpu.memory_space<vmem>>, %arg4: memref<2x1x128xi32, #tpu.memory_space<vmem>>, %arg5: memref<2x4x128xf32, #tpu.memory_space<vmem>>, %arg6: memref<2x4x128xf32, #tpu.memory_space<vmem>>, %arg7: memref<2x8x128xf32, #tpu.memory_space<vmem>>, %arg8: memref<2x1x128xi32, #tpu.memory_space<vmem>>, %arg9: memref<1x1xf32, #tpu.memory_space<vmem>>, %arg10: memref<1x1xf32, #tpu.memory_space<vmem>>, %arg11: memref<2x128xf32, #tpu.memory_space<vmem>>, %arg12: memref<2x128xf32, #tpu.memory_space<vmem>>, %arg13: memref<2x128xf32, #tpu.memory_space<vmem>>, %arg14: memref<2x1xf32, #tpu.memory_space<vmem>>, %arg15: memref<1x1xf32, #tpu.memory_space<vmem>>, %arg16: memref<1x1xf32, #tpu.memory_space<vmem>>, %arg17: memref<1x1xf32, #tpu.memory_space<vmem>>) attributes {dimension_semantics = [#tpu.dimension_semantics<arbitrary>, #tpu.dimension_semantics<arbitrary>, #tpu.dimension_semantics<arbitrary>], iteration_bounds = array<i64: 1, 2, 2>, scalar_prefetch = 0 : i64, scratch_operands = 7 : i64, tpu.core_type = #tpu.core_type<tc>, window_params = [{transform_indices = @transform_0, window_bounds = array<i64: 2, 8, 128>}, {transform_indices = @transform_1, window_bounds = array<i64: 2, 1, 128>}, {transform_indices = @transform_2, window_bounds = array<i64: 2, 4, 128>}, {transform_indices = @transform_3, window_bounds = array<i64: 2, 4, 128>}, {transform_indices = @transform_4, window_bounds = array<i64: 2, 8, 128>}, {transform_indices = @transform_5, window_bounds = array<i64: 2, 1, 128>}, {pipeline_mode = #tpu.pipeline_mode<synchronous>, transform_indices = @transform_6, window_bounds = array<i64: 1, 1>}, {pipeline_mode = #tpu.pipeline_mode<synchronous>, transform_indices = @transform_7, window_bounds = array<i64: 1, 1>}]} {
    %c0_i32 = arith.constant 0 : i32
    %0 = arith.cmpi eq, %arg0, %c0_i32 : i32
    %c0_i32_0 = arith.constant 0 : i32
    %1 = arith.cmpi eq, %arg1, %c0_i32_0 : i32
    %2 = arith.andi %0, %1 : i1
    %c0_i32_1 = arith.constant 0 : i32
    %3 = arith.cmpi eq, %arg2, %c0_i32_1 : i32
    %4 = arith.andi %2, %3 : i1
    %5 = arith.extui %4 : i1 to i32
    %c0_i32_2 = arith.constant 0 : i32
    %6 = arith.cmpi ne, %5, %c0_i32_2 : i32
    scf.if %6 {
      %cst_64 = arith.constant 0.000000e+00 : f32
      %107 = vector.broadcast %cst_64 : f32 to vector<1x1xf32>
      %c0_65 = arith.constant 0 : index
      %c0_66 = arith.constant 0 : index
      %108 = vector.load %arg15[%c0_65, %c0_66] : memref<1x1xf32, #tpu.memory_space<vmem>>, vector<1x1xf32>
      tpu.vector_store %arg15[%c0_65, %c0_66], %107 {strides = array<i32>} : memref<1x1xf32, #tpu.memory_space<vmem>>, vector<1x1xf32>,
      %cst_67 = arith.constant 0.000000e+00 : f32
      %109 = vector.broadcast %cst_67 : f32 to vector<1x1xf32>
      %c0_68 = arith.constant 0 : index
      %c0_69 = arith.constant 0 : index
      %110 = vector.load %arg16[%c0_68, %c0_69] : memref<1x1xf32, #tpu.memory_space<vmem>>, vector<1x1xf32>
      tpu.vector_store %arg16[%c0_68, %c0_69], %109 {strides = array<i32>} : memref<1x1xf32, #tpu.memory_space<vmem>>, vector<1x1xf32>,
      %cst_70 = arith.constant 0.000000e+00 : f32
      %111 = vector.broadcast %cst_70 : f32 to vector<1x1xf32>
      %c0_71 = arith.constant 0 : index
      %c0_72 = arith.constant 0 : index
      %112 = vector.load %arg17[%c0_71, %c0_72] : memref<1x1xf32, #tpu.memory_space<vmem>>, vector<1x1xf32>
      tpu.vector_store %arg17[%c0_71, %c0_72], %111 {strides = array<i32>} : memref<1x1xf32, #tpu.memory_space<vmem>>, vector<1x1xf32>,
    } else {
    }
    %c0_i32_3 = arith.constant 0 : i32
    %7 = arith.cmpi eq, %arg2, %c0_i32_3 : i32
    %8 = arith.extui %7 : i1 to i32
    %c0_i32_4 = arith.constant 0 : i32
    %9 = arith.cmpi ne, %8, %c0_i32_4 : i32
    scf.if %9 {
      %cst_64 = arith.constant 0.000000e+00 : f32
      %107 = vector.broadcast %cst_64 : f32 to vector<2x128xf32>
      %c0_65 = arith.constant 0 : index
      %c0_66 = arith.constant 0 : index
      %108 = vector.load %arg11[%c0_65, %c0_66] : memref<2x128xf32, #tpu.memory_space<vmem>>, vector<2x128xf32>
      tpu.vector_store %arg11[%c0_65, %c0_66], %107 {strides = array<i32>} : memref<2x128xf32, #tpu.memory_space<vmem>>, vector<2x128xf32>,
      %cst_67 = arith.constant 0.000000e+00 : f32
      %109 = vector.broadcast %cst_67 : f32 to vector<2x1xf32>
      %c0_68 = arith.constant 0 : index
      %c0_69 = arith.constant 0 : index
      %110 = vector.load %arg14[%c0_68, %c0_69] : memref<2x1xf32, #tpu.memory_space<vmem>>, vector<2x1xf32>
      tpu.vector_store %arg14[%c0_68, %c0_69], %109 {strides = array<i32>} : memref<2x1xf32, #tpu.memory_space<vmem>>, vector<2x1xf32>,
      %c0_70 = arith.constant 0 : index
      %c0_71 = arith.constant 0 : index
      %c0_72 = arith.constant 0 : index
      %111 = vector.load %arg3[%c0_70, %c0_71, %c0_72] : memref<2x8x128xf32, #tpu.memory_space<vmem>>, vector<2x1x128xf32>
      %112 = vector.shape_cast %111 : vector<2x1x128xf32> to vector<2x128xf32>
      %c0_73 = arith.constant 0 : index
      %c1_74 = arith.constant 1 : index
      %c0_75 = arith.constant 0 : index
      %113 = vector.load %arg3[%c0_73, %c1_74, %c0_75] : memref<2x8x128xf32, #tpu.memory_space<vmem>>, vector<2x1x128xf32>
      %114 = vector.shape_cast %113 : vector<2x1x128xf32> to vector<2x128xf32>
      %115 = arith.maximumf %112, %114 : vector<2x128xf32>
      %c0_76 = arith.constant 0 : index
      %c2_77 = arith.constant 2 : index
      %c0_78 = arith.constant 0 : index
      %116 = vector.load %arg3[%c0_76, %c2_77, %c0_78] : memref<2x8x128xf32, #tpu.memory_space<vmem>>, vector<2x1x128xf32>
      %117 = vector.shape_cast %116 : vector<2x1x128xf32> to vector<2x128xf32>
      %118 = arith.maximumf %115, %117 : vector<2x128xf32>
      %c0_79 = arith.constant 0 : index
      %c3_80 = arith.constant 3 : index
      %c0_81 = arith.constant 0 : index
      %119 = vector.load %arg3[%c0_79, %c3_80, %c0_81] : memref<2x8x128xf32, #tpu.memory_space<vmem>>, vector<2x1x128xf32>
      %120 = vector.shape_cast %119 : vector<2x1x128xf32> to vector<2x128xf32>
      %121 = arith.maximumf %118, %120 : vector<2x128xf32>
      %c0_82 = arith.constant 0 : index
      %c4_83 = arith.constant 4 : index
      %c0_84 = arith.constant 0 : index
      %122 = vector.load %arg3[%c0_82, %c4_83, %c0_84] : memref<2x8x128xf32, #tpu.memory_space<vmem>>, vector<2x1x128xf32>
      %123 = vector.shape_cast %122 : vector<2x1x128xf32> to vector<2x128xf32>
      %124 = arith.maximumf %121, %123 : vector<2x128xf32>
      %c0_85 = arith.constant 0 : index
      %c5_86 = arith.constant 5 : index
      %c0_87 = arith.constant 0 : index
      %125 = vector.load %arg3[%c0_85, %c5_86, %c0_87] : memref<2x8x128xf32, #tpu.memory_space<vmem>>, vector<2x1x128xf32>
      %126 = vector.shape_cast %125 : vector<2x1x128xf32> to vector<2x128xf32>
      %127 = arith.maximumf %124, %126 : vector<2x128xf32>
      %c0_88 = arith.constant 0 : index
      %c6_89 = arith.constant 6 : index
      %c0_90 = arith.constant 0 : index
      %128 = vector.load %arg3[%c0_88, %c6_89, %c0_90] : memref<2x8x128xf32, #tpu.memory_space<vmem>>, vector<2x1x128xf32>
      %129 = vector.shape_cast %128 : vector<2x1x128xf32> to vector<2x128xf32>
      %130 = arith.maximumf %127, %129 : vector<2x128xf32>
      %c0_91 = arith.constant 0 : index
      %c7_92 = arith.constant 7 : index
      %c0_93 = arith.constant 0 : index
      %131 = vector.load %arg3[%c0_91, %c7_92, %c0_93] : memref<2x8x128xf32, #tpu.memory_space<vmem>>, vector<2x1x128xf32>
      %132 = vector.shape_cast %131 : vector<2x1x128xf32> to vector<2x128xf32>
      %133 = arith.maximumf %130, %132 : vector<2x128xf32>
      %cst_94 = arith.constant 0.000000e+00 : f32
      %134 = vector.broadcast %cst_94 : f32 to vector<2x128xf32>
      %c0_95 = arith.constant 0 : index
      %c0_96 = arith.constant 0 : index
      %c0_97 = arith.constant 0 : index
      %135 = vector.load %arg3[%c0_95, %c0_96, %c0_97] : memref<2x8x128xf32, #tpu.memory_space<vmem>>, vector<2x1x128xf32>
      %136 = vector.shape_cast %135 : vector<2x1x128xf32> to vector<2x128xf32>
      %137 = arith.subf %136, %133 : vector<2x128xf32>
      %138 = math.exp %137 : vector<2x128xf32>
      %139 = arith.addf %134, %138 : vector<2x128xf32>
      %c0_98 = arith.constant 0 : index
      %c1_99 = arith.constant 1 : index
      %c0_100 = arith.constant 0 : index
      %140 = vector.load %arg3[%c0_98, %c1_99, %c0_100] : memref<2x8x128xf32, #tpu.memory_space<vmem>>, vector<2x1x128xf32>
      %141 = vector.shape_cast %140 : vector<2x1x128xf32> to vector<2x128xf32>
      %142 = arith.subf %141, %133 : vector<2x128xf32>
      %143 = math.exp %142 : vector<2x128xf32>
      %144 = arith.addf %139, %143 : vector<2x128xf32>
      %c0_101 = arith.constant 0 : index
      %c2_102 = arith.constant 2 : index
      %c0_103 = arith.constant 0 : index
      %145 = vector.load %arg3[%c0_101, %c2_102, %c0_103] : memref<2x8x128xf32, #tpu.memory_space<vmem>>, vector<2x1x128xf32>
      %146 = vector.shape_cast %145 : vector<2x1x128xf32> to vector<2x128xf32>
      %147 = arith.subf %146, %133 : vector<2x128xf32>
      %148 = math.exp %147 : vector<2x128xf32>
      %149 = arith.addf %144, %148 : vector<2x128xf32>
      %c0_104 = arith.constant 0 : index
      %c3_105 = arith.constant 3 : index
      %c0_106 = arith.constant 0 : index
      %150 = vector.load %arg3[%c0_104, %c3_105, %c0_106] : memref<2x8x128xf32, #tpu.memory_space<vmem>>, vector<2x1x128xf32>
      %151 = vector.shape_cast %150 : vector<2x1x128xf32> to vector<2x128xf32>
      %152 = arith.subf %151, %133 : vector<2x128xf32>
      %153 = math.exp %152 : vector<2x128xf32>
      %154 = arith.addf %149, %153 : vector<2x128xf32>
      %c0_107 = arith.constant 0 : index
      %c4_108 = arith.constant 4 : index
      %c0_109 = arith.constant 0 : index
      %155 = vector.load %arg3[%c0_107, %c4_108, %c0_109] : memref<2x8x128xf32, #tpu.memory_space<vmem>>, vector<2x1x128xf32>
      %156 = vector.shape_cast %155 : vector<2x1x128xf32> to vector<2x128xf32>
      %157 = arith.subf %156, %133 : vector<2x128xf32>
      %158 = math.exp %157 : vector<2x128xf32>
      %159 = arith.addf %154, %158 : vector<2x128xf32>
      %c0_110 = arith.constant 0 : index
      %c5_111 = arith.constant 5 : index
      %c0_112 = arith.constant 0 : index
      %160 = vector.load %arg3[%c0_110, %c5_111, %c0_112] : memref<2x8x128xf32, #tpu.memory_space<vmem>>, vector<2x1x128xf32>
      %161 = vector.shape_cast %160 : vector<2x1x128xf32> to vector<2x128xf32>
      %162 = arith.subf %161, %133 : vector<2x128xf32>
      %163 = math.exp %162 : vector<2x128xf32>
      %164 = arith.addf %159, %163 : vector<2x128xf32>
      %c0_113 = arith.constant 0 : index
      %c6_114 = arith.constant 6 : index
      %c0_115 = arith.constant 0 : index
      %165 = vector.load %arg3[%c0_113, %c6_114, %c0_115] : memref<2x8x128xf32, #tpu.memory_space<vmem>>, vector<2x1x128xf32>
      %166 = vector.shape_cast %165 : vector<2x1x128xf32> to vector<2x128xf32>
      %167 = arith.subf %166, %133 : vector<2x128xf32>
      %168 = math.exp %167 : vector<2x128xf32>
      %169 = arith.addf %164, %168 : vector<2x128xf32>
      %c0_116 = arith.constant 0 : index
      %c7_117 = arith.constant 7 : index
      %c0_118 = arith.constant 0 : index
      %170 = vector.load %arg3[%c0_116, %c7_117, %c0_118] : memref<2x8x128xf32, #tpu.memory_space<vmem>>, vector<2x1x128xf32>
      %171 = vector.shape_cast %170 : vector<2x1x128xf32> to vector<2x128xf32>
      %172 = arith.subf %171, %133 : vector<2x128xf32>
      %173 = math.exp %172 : vector<2x128xf32>
      %174 = arith.addf %169, %173 : vector<2x128xf32>
      %175 = math.log %174 : vector<2x128xf32>
      %176 = arith.addf %175, %133 : vector<2x128xf32>
      %c0_119 = arith.constant 0 : index
      %c0_120 = arith.constant 0 : index
      %c0_121 = arith.constant 0 : index
      %177 = vector.load %arg3[%c0_119, %c0_120, %c0_121] : memref<2x8x128xf32, #tpu.memory_space<vmem>>, vector<2x1x128xf32>
      %178 = vector.shape_cast %177 : vector<2x1x128xf32> to vector<2x128xf32>
      %c0_122 = arith.constant 0 : index
      %c0_123 = arith.constant 0 : index
      %179 = vector.load %arg13[%c0_122, %c0_123] : memref<2x128xf32, #tpu.memory_space<vmem>>, vector<2x128xf32>
      tpu.vector_store %arg13[%c0_122, %c0_123], %176 {strides = array<i32>} : memref<2x128xf32, #tpu.memory_space<vmem>>, vector<2x128xf32>,
      %180 = arith.subf %176, %178 : vector<2x128xf32>
      %c0_124 = arith.constant 0 : index
      %c0_125 = arith.constant 0 : index
      %c0_126 = arith.constant 0 : index
      %181 = vector.load %arg4[%c0_124, %c0_125, %c0_126] : memref<2x1x128xi32, #tpu.memory_space<vmem>>, vector<2x1x128xi32>
      %182 = vector.shape_cast %181 : vector<2x1x128xi32> to vector<2x128xi32>
      %c0_i32_127 = arith.constant 0 : i32
      %183 = vector.broadcast %c0_i32_127 : i32 to vector<2x128xi32>
      %184 = arith.cmpi sgt, %182, %183 : vector<2x128xi32>
      %cst_128 = arith.constant 0xFF800000 : f32
      %185 = vector.broadcast %cst_128 : f32 to vector<2x128xf32>
      %186 = arith.select %184, %185, %180 : vector<2x128xi1>, vector<2x128xf32>
      %c0_129 = arith.constant 0 : index
      %c0_130 = arith.constant 0 : index
      %187 = vector.load %arg12[%c0_129, %c0_130] : memref<2x128xf32, #tpu.memory_space<vmem>>, vector<2x128xf32>
      tpu.vector_store %arg12[%c0_129, %c0_130], %186 {strides = array<i32>} : memref<2x128xf32, #tpu.memory_space<vmem>>, vector<2x128xf32>,
    } else {
    }
    %c0 = arith.constant 0 : index
    %c0_5 = arith.constant 0 : index
    %c0_6 = arith.constant 0 : index
    %10 = vector.load %arg7[%c0, %c0_5, %c0_6] : memref<2x8x128xf32, #tpu.memory_space<vmem>>, vector<2x1x128xf32>
    %11 = vector.shape_cast %10 : vector<2x1x128xf32> to vector<2x128xf32>
    %c0_7 = arith.constant 0 : index
    %c1 = arith.constant 1 : index
    %c0_8 = arith.constant 0 : index
    %12 = vector.load %arg7[%c0_7, %c1, %c0_8] : memref<2x8x128xf32, #tpu.memory_space<vmem>>, vector<2x1x128xf32>
    %13 = vector.shape_cast %12 : vector<2x1x128xf32> to vector<2x128xf32>
    %14 = arith.maximumf %11, %13 : vector<2x128xf32>
    %c0_9 = arith.constant 0 : index
    %c2 = arith.constant 2 : index
    %c0_10 = arith.constant 0 : index
    %15 = vector.load %arg7[%c0_9, %c2, %c0_10] : memref<2x8x128xf32, #tpu.memory_space<vmem>>, vector<2x1x128xf32>
    %16 = vector.shape_cast %15 : vector<2x1x128xf32> to vector<2x128xf32>
    %17 = arith.maximumf %14, %16 : vector<2x128xf32>
    %c0_11 = arith.constant 0 : index
    %c3 = arith.constant 3 : index
    %c0_12 = arith.constant 0 : index
    %18 = vector.load %arg7[%c0_11, %c3, %c0_12] : memref<2x8x128xf32, #tpu.memory_space<vmem>>, vector<2x1x128xf32>
    %19 = vector.shape_cast %18 : vector<2x1x128xf32> to vector<2x128xf32>
    %20 = arith.maximumf %17, %19 : vector<2x128xf32>
    %c0_13 = arith.constant 0 : index
    %c4 = arith.constant 4 : index
    %c0_14 = arith.constant 0 : index
    %21 = vector.load %arg7[%c0_13, %c4, %c0_14] : memref<2x8x128xf32, #tpu.memory_space<vmem>>, vector<2x1x128xf32>
    %22 = vector.shape_cast %21 : vector<2x1x128xf32> to vector<2x128xf32>
    %23 = arith.maximumf %20, %22 : vector<2x128xf32>
    %c0_15 = arith.constant 0 : index
    %c5 = arith.constant 5 : index
    %c0_16 = arith.constant 0 : index
    %24 = vector.load %arg7[%c0_15, %c5, %c0_16] : memref<2x8x128xf32, #tpu.memory_space<vmem>>, vector<2x1x128xf32>
    %25 = vector.shape_cast %24 : vector<2x1x128xf32> to vector<2x128xf32>
    %26 = arith.maximumf %23, %25 : vector<2x128xf32>
    %c0_17 = arith.constant 0 : index
    %c6 = arith.constant 6 : index
    %c0_18 = arith.constant 0 : index
    %27 = vector.load %arg7[%c0_17, %c6, %c0_18] : memref<2x8x128xf32, #tpu.memory_space<vmem>>, vector<2x1x128xf32>
    %28 = vector.shape_cast %27 : vector<2x1x128xf32> to vector<2x128xf32>
    %29 = arith.maximumf %26, %28 : vector<2x128xf32>
    %c0_19 = arith.constant 0 : index
    %c7 = arith.constant 7 : index
    %c0_20 = arith.constant 0 : index
    %30 = vector.load %arg7[%c0_19, %c7, %c0_20] : memref<2x8x128xf32, #tpu.memory_space<vmem>>, vector<2x1x128xf32>
    %31 = vector.shape_cast %30 : vector<2x1x128xf32> to vector<2x128xf32>
    %32 = arith.maximumf %29, %31 : vector<2x128xf32>
    %cst = arith.constant 0.000000e+00 : f32
    %33 = vector.broadcast %cst : f32 to vector<2x128xf32>
    %c0_21 = arith.constant 0 : index
    %c0_22 = arith.constant 0 : index
    %c0_23 = arith.constant 0 : index
    %34 = vector.load %arg7[%c0_21, %c0_22, %c0_23] : memref<2x8x128xf32, #tpu.memory_space<vmem>>, vector<2x1x128xf32>
    %35 = vector.shape_cast %34 : vector<2x1x128xf32> to vector<2x128xf32>
    %36 = arith.subf %35, %32 : vector<2x128xf32>
    %37 = math.exp %36 : vector<2x128xf32>
    %38 = arith.addf %33, %37 : vector<2x128xf32>
    %c0_24 = arith.constant 0 : index
    %c1_25 = arith.constant 1 : index
    %c0_26 = arith.constant 0 : index
    %39 = vector.load %arg7[%c0_24, %c1_25, %c0_26] : memref<2x8x128xf32, #tpu.memory_space<vmem>>, vector<2x1x128xf32>
    %40 = vector.shape_cast %39 : vector<2x1x128xf32> to vector<2x128xf32>
    %41 = arith.subf %40, %32 : vector<2x128xf32>
    %42 = math.exp %41 : vector<2x128xf32>
    %43 = arith.addf %38, %42 : vector<2x128xf32>
    %c0_27 = arith.constant 0 : index
    %c2_28 = arith.constant 2 : index
    %c0_29 = arith.constant 0 : index
    %44 = vector.load %arg7[%c0_27, %c2_28, %c0_29] : memref<2x8x128xf32, #tpu.memory_space<vmem>>, vector<2x1x128xf32>
    %45 = vector.shape_cast %44 : vector<2x1x128xf32> to vector<2x128xf32>
    %46 = arith.subf %45, %32 : vector<2x128xf32>
    %47 = math.exp %46 : vector<2x128xf32>
    %48 = arith.addf %43, %47 : vector<2x128xf32>
    %c0_30 = arith.constant 0 : index
    %c3_31 = arith.constant 3 : index
    %c0_32 = arith.constant 0 : index
    %49 = vector.load %arg7[%c0_30, %c3_31, %c0_32] : memref<2x8x128xf32, #tpu.memory_space<vmem>>, vector<2x1x128xf32>
    %50 = vector.shape_cast %49 : vector<2x1x128xf32> to vector<2x128xf32>
    %51 = arith.subf %50, %32 : vector<2x128xf32>
    %52 = math.exp %51 : vector<2x128xf32>
    %53 = arith.addf %48, %52 : vector<2x128xf32>
    %c0_33 = arith.constant 0 : index
    %c4_34 = arith.constant 4 : index
    %c0_35 = arith.constant 0 : index
    %54 = vector.load %arg7[%c0_33, %c4_34, %c0_35] : memref<2x8x128xf32, #tpu.memory_space<vmem>>, vector<2x1x128xf32>
    %55 = vector.shape_cast %54 : vector<2x1x128xf32> to vector<2x128xf32>
    %56 = arith.subf %55, %32 : vector<2x128xf32>
    %57 = math.exp %56 : vector<2x128xf32>
    %58 = arith.addf %53, %57 : vector<2x128xf32>
    %c0_36 = arith.constant 0 : index
    %c5_37 = arith.constant 5 : index
    %c0_38 = arith.constant 0 : index
    %59 = vector.load %arg7[%c0_36, %c5_37, %c0_38] : memref<2x8x128xf32, #tpu.memory_space<vmem>>, vector<2x1x128xf32>
    %60 = vector.shape_cast %59 : vector<2x1x128xf32> to vector<2x128xf32>
    %61 = arith.subf %60, %32 : vector<2x128xf32>
    %62 = math.exp %61 : vector<2x128xf32>
    %63 = arith.addf %58, %62 : vector<2x128xf32>
    %c0_39 = arith.constant 0 : index
    %c6_40 = arith.constant 6 : index
    %c0_41 = arith.constant 0 : index
    %64 = vector.load %arg7[%c0_39, %c6_40, %c0_41] : memref<2x8x128xf32, #tpu.memory_space<vmem>>, vector<2x1x128xf32>
    %65 = vector.shape_cast %64 : vector<2x1x128xf32> to vector<2x128xf32>
    %66 = arith.subf %65, %32 : vector<2x128xf32>
    %67 = math.exp %66 : vector<2x128xf32>
    %68 = arith.addf %63, %67 : vector<2x128xf32>
    %c0_42 = arith.constant 0 : index
    %c7_43 = arith.constant 7 : index
    %c0_44 = arith.constant 0 : index
    %69 = vector.load %arg7[%c0_42, %c7_43, %c0_44] : memref<2x8x128xf32, #tpu.memory_space<vmem>>, vector<2x1x128xf32>
    %70 = vector.shape_cast %69 : vector<2x1x128xf32> to vector<2x128xf32>
    %71 = arith.subf %70, %32 : vector<2x128xf32>
    %72 = math.exp %71 : vector<2x128xf32>
    %73 = arith.addf %68, %72 : vector<2x128xf32>
    %74 = math.log %73 : vector<2x128xf32>
    %75 = arith.addf %74, %32 : vector<2x128xf32>
    %c0_45 = arith.constant 0 : index
    %c0_46 = arith.constant 0 : index
    %c0_47 = arith.constant 0 : index
    %76 = vector.load %arg7[%c0_45, %c0_46, %c0_47] : memref<2x8x128xf32, #tpu.memory_space<vmem>>, vector<2x1x128xf32>
    %77 = vector.shape_cast %76 : vector<2x1x128xf32> to vector<2x128xf32>
    %78 = arith.subf %75, %77 : vector<2x128xf32>
    %c0_48 = arith.constant 0 : index
    %c0_49 = arith.constant 0 : index
    %c0_50 = arith.constant 0 : index
    %79 = vector.load %arg8[%c0_48, %c0_49, %c0_50] : memref<2x1x128xi32, #tpu.memory_space<vmem>>, vector<2x1x128xi32>
    %80 = vector.shape_cast %79 : vector<2x1x128xi32> to vector<2x128xi32>
    %c0_i32_51 = arith.constant 0 : i32
    %81 = vector.broadcast %c0_i32_51 : i32 to vector<2x128xi32>
    %82 = arith.cmpi sgt, %80, %81 : vector<2x128xi32>
    %cst_52 = arith.constant 0xFF800000 : f32
    %83 = vector.broadcast %cst_52 : f32 to vector<2x128xf32>
    %84 = arith.select %82, %83, %78 : vector<2x128xi1>, vector<2x128xf32>
    %c0_53 = arith.constant 0 : index
    %c0_54 = arith.constant 0 : index
    %85 = vector.load %arg14[%c0_53, %c0_54] : memref<2x1xf32, #tpu.memory_space<vmem>>, vector<2x1xf32>
    %86 = arith.extui %82 : vector<2x128xi1> to vector<2x128xi32>
    %87 = arith.sitofp %86 : vector<2x128xi32> to vector<2x128xf32>
    %cst_55 = arith.constant dense<0.000000e+00> : vector<2xf32>
    %88 = vector.multi_reduction <add>, %87, %cst_55 [1] : vector<2x128xf32> to vector<2xf32>
    %89 = vector.shape_cast %88 : vector<2xf32> to vector<2x1xf32>
    %90 = arith.addf %85, %89 : vector<2x1xf32>
    %c0_56 = arith.constant 0 : index
    %c0_57 = arith.constant 0 : index
    %91 = vector.load %arg14[%c0_56, %c0_57] : memref<2x1xf32, #tpu.memory_space<vmem>>, vector<2x1xf32>
    tpu.vector_store %arg14[%c0_56, %c0_57], %90 {strides = array<i32>} : memref<2x1xf32, #tpu.memory_space<vmem>>, vector<2x1xf32>,
    %c0_58 = arith.constant 0 : index
    %c0_59 = arith.constant 0 : index
    %92 = vector.load %arg12[%c0_58, %c0_59] : memref<2x128xf32, #tpu.memory_space<vmem>>, vector<2x128xf32>
    %93 = vector.shape_cast %92 : vector<2x128xf32> to vector<2x128x1xf32>
    %94 = vector.shape_cast %84 : vector<2x128xf32> to vector<2x1x128xf32>
    %95 = arith.cmpi slt, %arg2, %arg1 : i32
    %96 = arith.extui %95 : i1 to i32
    %c0_i32_60 = arith.constant 0 : i32
    %97 = arith.cmpi ne, %96, %c0_i32_60 : i32
    scf.if %97 {
      %c0_64 = arith.constant 0 : index
      %c0_65 = arith.constant 0 : index
      %107 = vector.load %arg11[%c0_64, %c0_65] : memref<2x128xf32, #tpu.memory_space<vmem>>, vector<2x128xf32>
      %108 = vector.broadcast %94 : vector<2x1x128xf32> to vector<2x128x128xf32>
      %109 = vector.broadcast %93 : vector<2x128x1xf32> to vector<2x128x128xf32>
      %110 = arith.cmpf oge, %108, %109 : vector<2x128x128xf32>
      %111 = arith.extui %110 : vector<2x128x128xi1> to vector<2x128x128xi32>
      %112 = arith.sitofp %111 : vector<2x128x128xi32> to vector<2x128x128xf32>
      %cst_66 = arith.constant dense<0.000000e+00> : vector<2x128xf32>
      %113 = vector.multi_reduction <add>, %112, %cst_66 [2] : vector<2x128x128xf32> to vector<2x128xf32>
      %114 = arith.addf %107, %113 : vector<2x128xf32>
      %c0_67 = arith.constant 0 : index
      %c0_68 = arith.constant 0 : index
      %115 = vector.load %arg11[%c0_67, %c0_68] : memref<2x128xf32, #tpu.memory_space<vmem>>, vector<2x128xf32>
      tpu.vector_store %arg11[%c0_67, %c0_68], %114 {strides = array<i32>} : memref<2x128xf32, #tpu.memory_space<vmem>>, vector<2x128xf32>,
    } else {
    }
    %98 = arith.cmpi sgt, %arg2, %arg1 : i32
    %99 = arith.extui %98 : i1 to i32
    %c0_i32_61 = arith.constant 0 : i32
    %100 = arith.cmpi ne, %99, %c0_i32_61 : i32
    scf.if %100 {
      %c0_64 = arith.constant 0 : index
      %c0_65 = arith.constant 0 : index
      %107 = vector.load %arg11[%c0_64, %c0_65] : memref<2x128xf32, #tpu.memory_space<vmem>>, vector<2x128xf32>
      %108 = vector.broadcast %94 : vector<2x1x128xf32> to vector<2x128x128xf32>
      %109 = vector.broadcast %93 : vector<2x128x1xf32> to vector<2x128x128xf32>
      %110 = arith.cmpf ogt, %108, %109 : vector<2x128x128xf32>
      %111 = arith.extui %110 : vector<2x128x128xi1> to vector<2x128x128xi32>
      %112 = arith.sitofp %111 : vector<2x128x128xi32> to vector<2x128x128xf32>
      %cst_66 = arith.constant dense<0.000000e+00> : vector<2x128xf32>
      %113 = vector.multi_reduction <add>, %112, %cst_66 [2] : vector<2x128x128xf32> to vector<2x128xf32>
      %114 = arith.addf %107, %113 : vector<2x128xf32>
      %c0_67 = arith.constant 0 : index
      %c0_68 = arith.constant 0 : index
      %115 = vector.load %arg11[%c0_67, %c0_68] : memref<2x128xf32, #tpu.memory_space<vmem>>, vector<2x128xf32>
      tpu.vector_store %arg11[%c0_67, %c0_68], %114 {strides = array<i32>} : memref<2x128xf32, #tpu.memory_space<vmem>>, vector<2x128xf32>,
    } else {
    }
    %101 = arith.cmpi eq, %arg2, %arg1 : i32
    %102 = arith.extui %101 : i1 to i32
    %c0_i32_62 = arith.constant 0 : i32
    %103 = arith.cmpi ne, %102, %c0_i32_62 : i32
    scf.if %103 {
      %107 = tpu.iota {dimensions = array<i32: 1>} : vector<2x128x128xi32>
      %108 = tpu.iota {dimensions = array<i32: 2>} : vector<2x128x128xi32>
      %109 = vector.broadcast %94 : vector<2x1x128xf32> to vector<2x128x128xf32>
      %110 = vector.broadcast %93 : vector<2x128x1xf32> to vector<2x128x128xf32>
      %111 = arith.cmpf ogt, %109, %110 : vector<2x128x128xf32>
      %112 = vector.broadcast %94 : vector<2x1x128xf32> to vector<2x128x128xf32>
      %113 = vector.broadcast %93 : vector<2x128x1xf32> to vector<2x128x128xf32>
      %114 = arith.cmpf oeq, %112, %113 : vector<2x128x128xf32>
      %115 = arith.cmpi slt, %108, %107 : vector<2x128x128xi32>
      %116 = arith.andi %114, %115 : vector<2x128x128xi1>
      %117 = arith.ori %111, %116 : vector<2x128x128xi1>
      %c0_64 = arith.constant 0 : index
      %c0_65 = arith.constant 0 : index
      %118 = vector.load %arg11[%c0_64, %c0_65] : memref<2x128xf32, #tpu.memory_space<vmem>>, vector<2x128xf32>
      %119 = arith.extui %117 : vector<2x128x128xi1> to vector<2x128x128xi32>
      %120 = arith.sitofp %119 : vector<2x128x128xi32> to vector<2x128x128xf32>
      %cst_66 = arith.constant dense<0.000000e+00> : vector<2x128xf32>
      %121 = vector.multi_reduction <add>, %120, %cst_66 [2] : vector<2x128x128xf32> to vector<2x128xf32>
      %122 = arith.addf %118, %121 : vector<2x128xf32>
      %c0_67 = arith.constant 0 : index
      %c0_68 = arith.constant 0 : index
      %123 = vector.load %arg11[%c0_67, %c0_68] : memref<2x128xf32, #tpu.memory_space<vmem>>, vector<2x128xf32>
      tpu.vector_store %arg11[%c0_67, %c0_68], %122 {strides = array<i32>} : memref<2x128xf32, #tpu.memory_space<vmem>>, vector<2x128xf32>,
    } else {
    }
    %c1_i32 = arith.constant 1 : i32
    %104 = arith.cmpi eq, %arg2, %c1_i32 : i32
    %105 = arith.extui %104 : i1 to i32
    %c0_i32_63 = arith.constant 0 : i32
    %106 = arith.cmpi ne, %105, %c0_i32_63 : i32
    scf.if %106 {
      %c0_64 = arith.constant 0 : index
      %c0_65 = arith.constant 0 : index
      %c0_66 = arith.constant 0 : index
      %107 = vector.load %arg4[%c0_64, %c0_65, %c0_66] : memref<2x1x128xi32, #tpu.memory_space<vmem>>, vector<2x1x128xi32>
      %108 = vector.shape_cast %107 : vector<2x1x128xi32> to vector<2x128xi32>
      %c0_i32_67 = arith.constant 0 : i32
      %109 = vector.broadcast %c0_i32_67 : i32 to vector<2x128xi32>
      %110 = arith.cmpi sgt, %108, %109 : vector<2x128xi32>
      %c0_68 = arith.constant 0 : index
      %c0_69 = arith.constant 0 : index
      %111 = vector.load %arg14[%c0_68, %c0_69] : memref<2x1xf32, #tpu.memory_space<vmem>>, vector<2x1xf32>
      %cst_70 = arith.constant 3.000000e+00 : f32
      %112 = vector.broadcast %cst_70 : f32 to vector<2x1xf32>
      %113 = arith.mulf %111, %112 : vector<2x1xf32>
      %c0_71 = arith.constant 0 : index
      %c0_72 = arith.constant 0 : index
      %114 = vector.load %arg11[%c0_71, %c0_72] : memref<2x128xf32, #tpu.memory_space<vmem>>, vector<2x128xf32>
      %115 = vector.broadcast %113 : vector<2x1xf32> to vector<2x128xf32>
      %116 = arith.cmpf olt, %114, %115 : vector<2x128xf32>
      %117 = arith.ori %110, %116 : vector<2x128xi1>
      %cst_73 = arith.constant 0.000000e+00 : f32
      %118 = vector.broadcast %cst_73 : f32 to vector<2x128xf32>
      %c0_i32_74 = arith.constant 0 : i32
      %119 = vector.broadcast %c0_i32_74 : i32 to vector<2x128xi32>
      %120 = arith.cmpi eq, %108, %119 : vector<2x128xi32>
      %c0_75 = arith.constant 0 : index
      %c0_76 = arith.constant 0 : index
      %c0_77 = arith.constant 0 : index
      %121 = vector.load %arg3[%c0_75, %c0_76, %c0_77] : memref<2x8x128xf32, #tpu.memory_space<vmem>>, vector<2x1x128xf32>
      %122 = vector.shape_cast %121 : vector<2x1x128xf32> to vector<2x128xf32>
      %cst_78 = arith.constant 0.000000e+00 : f32
      %123 = vector.broadcast %cst_78 : f32 to vector<2x128xf32>
      %124 = arith.select %120, %122, %123 : vector<2x128xi1>, vector<2x128xf32>
      %125 = arith.addf %118, %124 : vector<2x128xf32>
      %c1_i32_79 = arith.constant 1 : i32
      %126 = vector.broadcast %c1_i32_79 : i32 to vector<2x128xi32>
      %127 = arith.cmpi eq, %108, %126 : vector<2x128xi32>
      %c0_80 = arith.constant 0 : index
      %c1_81 = arith.constant 1 : index
      %c0_82 = arith.constant 0 : index
      %128 = vector.load %arg3[%c0_80, %c1_81, %c0_82] : memref<2x8x128xf32, #tpu.memory_space<vmem>>, vector<2x1x128xf32>
      %129 = vector.shape_cast %128 : vector<2x1x128xf32> to vector<2x128xf32>
      %cst_83 = arith.constant 0.000000e+00 : f32
      %130 = vector.broadcast %cst_83 : f32 to vector<2x128xf32>
      %131 = arith.select %127, %129, %130 : vector<2x128xi1>, vector<2x128xf32>
      %132 = arith.addf %125, %131 : vector<2x128xf32>
      %c2_i32 = arith.constant 2 : i32
      %133 = vector.broadcast %c2_i32 : i32 to vector<2x128xi32>
      %134 = arith.cmpi eq, %108, %133 : vector<2x128xi32>
      %c0_84 = arith.constant 0 : index
      %c2_85 = arith.constant 2 : index
      %c0_86 = arith.constant 0 : index
      %135 = vector.load %arg3[%c0_84, %c2_85, %c0_86] : memref<2x8x128xf32, #tpu.memory_space<vmem>>, vector<2x1x128xf32>
      %136 = vector.shape_cast %135 : vector<2x1x128xf32> to vector<2x128xf32>
      %cst_87 = arith.constant 0.000000e+00 : f32
      %137 = vector.broadcast %cst_87 : f32 to vector<2x128xf32>
      %138 = arith.select %134, %136, %137 : vector<2x128xi1>, vector<2x128xf32>
      %139 = arith.addf %132, %138 : vector<2x128xf32>
      %c3_i32 = arith.constant 3 : i32
      %140 = vector.broadcast %c3_i32 : i32 to vector<2x128xi32>
      %141 = arith.cmpi eq, %108, %140 : vector<2x128xi32>
      %c0_88 = arith.constant 0 : index
      %c3_89 = arith.constant 3 : index
      %c0_90 = arith.constant 0 : index
      %142 = vector.load %arg3[%c0_88, %c3_89, %c0_90] : memref<2x8x128xf32, #tpu.memory_space<vmem>>, vector<2x1x128xf32>
      %143 = vector.shape_cast %142 : vector<2x1x128xf32> to vector<2x128xf32>
      %cst_91 = arith.constant 0.000000e+00 : f32
      %144 = vector.broadcast %cst_91 : f32 to vector<2x128xf32>
      %145 = arith.select %141, %143, %144 : vector<2x128xi1>, vector<2x128xf32>
      %146 = arith.addf %139, %145 : vector<2x128xf32>
      %c4_i32 = arith.constant 4 : i32
      %147 = vector.broadcast %c4_i32 : i32 to vector<2x128xi32>
      %148 = arith.cmpi eq, %108, %147 : vector<2x128xi32>
      %c0_92 = arith.constant 0 : index
      %c4_93 = arith.constant 4 : index
      %c0_94 = arith.constant 0 : index
      %149 = vector.load %arg3[%c0_92, %c4_93, %c0_94] : memref<2x8x128xf32, #tpu.memory_space<vmem>>, vector<2x1x128xf32>
      %150 = vector.shape_cast %149 : vector<2x1x128xf32> to vector<2x128xf32>
      %cst_95 = arith.constant 0.000000e+00 : f32
      %151 = vector.broadcast %cst_95 : f32 to vector<2x128xf32>
      %152 = arith.select %148, %150, %151 : vector<2x128xi1>, vector<2x128xf32>
      %153 = arith.addf %146, %152 : vector<2x128xf32>
      %c5_i32 = arith.constant 5 : i32
      %154 = vector.broadcast %c5_i32 : i32 to vector<2x128xi32>
      %155 = arith.cmpi eq, %108, %154 : vector<2x128xi32>
      %c0_96 = arith.constant 0 : index
      %c5_97 = arith.constant 5 : index
      %c0_98 = arith.constant 0 : index
      %156 = vector.load %arg3[%c0_96, %c5_97, %c0_98] : memref<2x8x128xf32, #tpu.memory_space<vmem>>, vector<2x1x128xf32>
      %157 = vector.shape_cast %156 : vector<2x1x128xf32> to vector<2x128xf32>
      %cst_99 = arith.constant 0.000000e+00 : f32
      %158 = vector.broadcast %cst_99 : f32 to vector<2x128xf32>
      %159 = arith.select %155, %157, %158 : vector<2x128xi1>, vector<2x128xf32>
      %160 = arith.addf %153, %159 : vector<2x128xf32>
      %c6_i32 = arith.constant 6 : i32
      %161 = vector.broadcast %c6_i32 : i32 to vector<2x128xi32>
      %162 = arith.cmpi eq, %108, %161 : vector<2x128xi32>
      %c0_100 = arith.constant 0 : index
      %c6_101 = arith.constant 6 : index
      %c0_102 = arith.constant 0 : index
      %163 = vector.load %arg3[%c0_100, %c6_101, %c0_102] : memref<2x8x128xf32, #tpu.memory_space<vmem>>, vector<2x1x128xf32>
      %164 = vector.shape_cast %163 : vector<2x1x128xf32> to vector<2x128xf32>
      %cst_103 = arith.constant 0.000000e+00 : f32
      %165 = vector.broadcast %cst_103 : f32 to vector<2x128xf32>
      %166 = arith.select %162, %164, %165 : vector<2x128xi1>, vector<2x128xf32>
      %167 = arith.addf %160, %166 : vector<2x128xf32>
      %c7_i32 = arith.constant 7 : i32
      %168 = vector.broadcast %c7_i32 : i32 to vector<2x128xi32>
      %169 = arith.cmpi eq, %108, %168 : vector<2x128xi32>
      %c0_104 = arith.constant 0 : index
      %c7_105 = arith.constant 7 : index
      %c0_106 = arith.constant 0 : index
      %170 = vector.load %arg3[%c0_104, %c7_105, %c0_106] : memref<2x8x128xf32, #tpu.memory_space<vmem>>, vector<2x1x128xf32>
      %171 = vector.shape_cast %170 : vector<2x1x128xf32> to vector<2x128xf32>
      %cst_107 = arith.constant 0.000000e+00 : f32
      %172 = vector.broadcast %cst_107 : f32 to vector<2x128xf32>
      %173 = arith.select %169, %171, %172 : vector<2x128xi1>, vector<2x128xf32>
      %174 = arith.addf %167, %173 : vector<2x128xf32>
      %c0_108 = arith.constant 0 : index
      %c0_109 = arith.constant 0 : index
      %175 = vector.load %arg13[%c0_108, %c0_109] : memref<2x128xf32, #tpu.memory_space<vmem>>, vector<2x128xf32>
      %176 = arith.subf %175, %174 : vector<2x128xf32>
      %c0_110 = arith.constant 0 : index
      %c0_111 = arith.constant 0 : index
      %177 = vector.load %arg16[%c0_110, %c0_111] : memref<1x1xf32, #tpu.memory_space<vmem>>, vector<1x1xf32>
      %cst_112 = arith.constant 0.000000e+00 : f32
      %178 = vector.broadcast %cst_112 : f32 to vector<2x128xf32>
      %179 = arith.select %117, %176, %178 : vector<2x128xi1>, vector<2x128xf32>
      %180 = vector.shape_cast %179 : vector<2x128xf32> to vector<1x2x128xf32>
      %cst_113 = arith.constant dense<0.000000e+00> : vector<1xf32>
      %181 = vector.multi_reduction <add>, %180, %cst_113 [1, 2] : vector<1x2x128xf32> to vector<1xf32>
      %182 = vector.shape_cast %181 : vector<1xf32> to vector<1x1x1xf32>
      %183 = vector.extract %182[0, 0, 0] : f32 from vector<1x1x1xf32>
      %184 = vector.broadcast %183 : f32 to vector<1x1xf32>
      %185 = arith.addf %177, %184 : vector<1x1xf32>
      %c0_114 = arith.constant 0 : index
      %c0_115 = arith.constant 0 : index
      %186 = vector.load %arg16[%c0_114, %c0_115] : memref<1x1xf32, #tpu.memory_space<vmem>>, vector<1x1xf32>
      tpu.vector_store %arg16[%c0_114, %c0_115], %185 {strides = array<i32>} : memref<1x1xf32, #tpu.memory_space<vmem>>, vector<1x1xf32>,
      %cst_116 = arith.constant 0.000000e+00 : f32
      %187 = vector.broadcast %cst_116 : f32 to vector<2x128xf32>
      %c0_117 = arith.constant 0 : index
      %c0_118 = arith.constant 0 : index
      %c0_119 = arith.constant 0 : index
      %188 = vector.load %arg5[%c0_117, %c0_118, %c0_119] : memref<2x4x128xf32, #tpu.memory_space<vmem>>, vector<2x1x128xf32>
      %189 = vector.shape_cast %188 : vector<2x1x128xf32> to vector<2x128xf32>
      %c0_120 = arith.constant 0 : index
      %c0_121 = arith.constant 0 : index
      %c0_122 = arith.constant 0 : index
      %190 = vector.load %arg6[%c0_120, %c0_121, %c0_122] : memref<2x4x128xf32, #tpu.memory_space<vmem>>, vector<2x1x128xf32>
      %191 = vector.shape_cast %190 : vector<2x1x128xf32> to vector<2x128xf32>
      %192 = arith.subf %189, %191 : vector<2x128xf32>
      %193 = math.absf %192 : vector<2x128xf32>
      %cst_123 = arith.constant 1.000000e+00 : f32
      %194 = vector.broadcast %cst_123 : f32 to vector<2x128xf32>
      %195 = arith.cmpf olt, %193, %194 : vector<2x128xf32>
      %cst_124 = arith.constant 5.000000e-01 : f32
      %196 = vector.broadcast %cst_124 : f32 to vector<2x128xf32>
      %197 = arith.mulf %196, %193 : vector<2x128xf32>
      %198 = arith.mulf %197, %193 : vector<2x128xf32>
      %cst_125 = arith.constant 5.000000e-01 : f32
      %199 = vector.broadcast %cst_125 : f32 to vector<2x128xf32>
      %200 = arith.subf %193, %199 : vector<2x128xf32>
      %201 = arith.select %195, %198, %200 : vector<2x128xi1>, vector<2x128xf32>
      %202 = arith.addf %187, %201 : vector<2x128xf32>
      %c0_126 = arith.constant 0 : index
      %c1_127 = arith.constant 1 : index
      %c0_128 = arith.constant 0 : index
      %203 = vector.load %arg5[%c0_126, %c1_127, %c0_128] : memref<2x4x128xf32, #tpu.memory_space<vmem>>, vector<2x1x128xf32>
      %204 = vector.shape_cast %203 : vector<2x1x128xf32> to vector<2x128xf32>
      %c0_129 = arith.constant 0 : index
      %c1_130 = arith.constant 1 : index
      %c0_131 = arith.constant 0 : index
      %205 = vector.load %arg6[%c0_129, %c1_130, %c0_131] : memref<2x4x128xf32, #tpu.memory_space<vmem>>, vector<2x1x128xf32>
      %206 = vector.shape_cast %205 : vector<2x1x128xf32> to vector<2x128xf32>
      %207 = arith.subf %204, %206 : vector<2x128xf32>
      %208 = math.absf %207 : vector<2x128xf32>
      %cst_132 = arith.constant 1.000000e+00 : f32
      %209 = vector.broadcast %cst_132 : f32 to vector<2x128xf32>
      %210 = arith.cmpf olt, %208, %209 : vector<2x128xf32>
      %cst_133 = arith.constant 5.000000e-01 : f32
      %211 = vector.broadcast %cst_133 : f32 to vector<2x128xf32>
      %212 = arith.mulf %211, %208 : vector<2x128xf32>
      %213 = arith.mulf %212, %208 : vector<2x128xf32>
      %cst_134 = arith.constant 5.000000e-01 : f32
      %214 = vector.broadcast %cst_134 : f32 to vector<2x128xf32>
      %215 = arith.subf %208, %214 : vector<2x128xf32>
      %216 = arith.select %210, %213, %215 : vector<2x128xi1>, vector<2x128xf32>
      %217 = arith.addf %202, %216 : vector<2x128xf32>
      %c0_135 = arith.constant 0 : index
      %c2_136 = arith.constant 2 : index
      %c0_137 = arith.constant 0 : index
      %218 = vector.load %arg5[%c0_135, %c2_136, %c0_137] : memref<2x4x128xf32, #tpu.memory_space<vmem>>, vector<2x1x128xf32>
      %219 = vector.shape_cast %218 : vector<2x1x128xf32> to vector<2x128xf32>
      %c0_138 = arith.constant 0 : index
      %c2_139 = arith.constant 2 : index
      %c0_140 = arith.constant 0 : index
      %220 = vector.load %arg6[%c0_138, %c2_139, %c0_140] : memref<2x4x128xf32, #tpu.memory_space<vmem>>, vector<2x1x128xf32>
      %221 = vector.shape_cast %220 : vector<2x1x128xf32> to vector<2x128xf32>
      %222 = arith.subf %219, %221 : vector<2x128xf32>
      %223 = math.absf %222 : vector<2x128xf32>
      %cst_141 = arith.constant 1.000000e+00 : f32
      %224 = vector.broadcast %cst_141 : f32 to vector<2x128xf32>
      %225 = arith.cmpf olt, %223, %224 : vector<2x128xf32>
      %cst_142 = arith.constant 5.000000e-01 : f32
      %226 = vector.broadcast %cst_142 : f32 to vector<2x128xf32>
      %227 = arith.mulf %226, %223 : vector<2x128xf32>
      %228 = arith.mulf %227, %223 : vector<2x128xf32>
      %cst_143 = arith.constant 5.000000e-01 : f32
      %229 = vector.broadcast %cst_143 : f32 to vector<2x128xf32>
      %230 = arith.subf %223, %229 : vector<2x128xf32>
      %231 = arith.select %225, %228, %230 : vector<2x128xi1>, vector<2x128xf32>
      %232 = arith.addf %217, %231 : vector<2x128xf32>
      %c0_144 = arith.constant 0 : index
      %c3_145 = arith.constant 3 : index
      %c0_146 = arith.constant 0 : index
      %233 = vector.load %arg5[%c0_144, %c3_145, %c0_146] : memref<2x4x128xf32, #tpu.memory_space<vmem>>, vector<2x1x128xf32>
      %234 = vector.shape_cast %233 : vector<2x1x128xf32> to vector<2x128xf32>
      %c0_147 = arith.constant 0 : index
      %c3_148 = arith.constant 3 : index
      %c0_149 = arith.constant 0 : index
      %235 = vector.load %arg6[%c0_147, %c3_148, %c0_149] : memref<2x4x128xf32, #tpu.memory_space<vmem>>, vector<2x1x128xf32>
      %236 = vector.shape_cast %235 : vector<2x1x128xf32> to vector<2x128xf32>
      %237 = arith.subf %234, %236 : vector<2x128xf32>
      %238 = math.absf %237 : vector<2x128xf32>
      %cst_150 = arith.constant 1.000000e+00 : f32
      %239 = vector.broadcast %cst_150 : f32 to vector<2x128xf32>
      %240 = arith.cmpf olt, %238, %239 : vector<2x128xf32>
      %cst_151 = arith.constant 5.000000e-01 : f32
      %241 = vector.broadcast %cst_151 : f32 to vector<2x128xf32>
      %242 = arith.mulf %241, %238 : vector<2x128xf32>
      %243 = arith.mulf %242, %238 : vector<2x128xf32>
      %cst_152 = arith.constant 5.000000e-01 : f32
      %244 = vector.broadcast %cst_152 : f32 to vector<2x128xf32>
      %245 = arith.subf %238, %244 : vector<2x128xf32>
      %246 = arith.select %240, %243, %245 : vector<2x128xi1>, vector<2x128xf32>
      %247 = arith.addf %232, %246 : vector<2x128xf32>
      %c0_153 = arith.constant 0 : index
      %c0_154 = arith.constant 0 : index
      %248 = vector.load %arg15[%c0_153, %c0_154] : memref<1x1xf32, #tpu.memory_space<vmem>>, vector<1x1xf32>
      %cst_155 = arith.constant 0.000000e+00 : f32
      %249 = vector.broadcast %cst_155 : f32 to vector<2x128xf32>
      %250 = arith.select %110, %247, %249 : vector<2x128xi1>, vector<2x128xf32>
      %251 = vector.shape_cast %250 : vector<2x128xf32> to vector<1x2x128xf32>
      %cst_156 = arith.constant dense<0.000000e+00> : vector<1xf32>
      %252 = vector.multi_reduction <add>, %251, %cst_156 [1, 2] : vector<1x2x128xf32> to vector<1xf32>
      %253 = vector.shape_cast %252 : vector<1xf32> to vector<1x1x1xf32>
      %254 = vector.extract %253[0, 0, 0] : f32 from vector<1x1x1xf32>
      %255 = vector.broadcast %254 : f32 to vector<1x1xf32>
      %256 = arith.addf %248, %255 : vector<1x1xf32>
      %c0_157 = arith.constant 0 : index
      %c0_158 = arith.constant 0 : index
      %257 = vector.load %arg15[%c0_157, %c0_158] : memref<1x1xf32, #tpu.memory_space<vmem>>, vector<1x1xf32>
      tpu.vector_store %arg15[%c0_157, %c0_158], %256 {strides = array<i32>} : memref<1x1xf32, #tpu.memory_space<vmem>>, vector<1x1xf32>,
      %c0_159 = arith.constant 0 : index
      %c0_160 = arith.constant 0 : index
      %258 = vector.load %arg17[%c0_159, %c0_160] : memref<1x1xf32, #tpu.memory_space<vmem>>, vector<1x1xf32>
      %259 = arith.extui %110 : vector<2x128xi1> to vector<2x128xi32>
      %260 = arith.sitofp %259 : vector<2x128xi32> to vector<2x128xf32>
      %261 = vector.shape_cast %260 : vector<2x128xf32> to vector<1x2x128xf32>
      %cst_161 = arith.constant dense<0.000000e+00> : vector<1xf32>
      %262 = vector.multi_reduction <add>, %261, %cst_161 [1, 2] : vector<1x2x128xf32> to vector<1xf32>
      %263 = vector.shape_cast %262 : vector<1xf32> to vector<1x1x1xf32>
      %264 = vector.extract %263[0, 0, 0] : f32 from vector<1x1x1xf32>
      %265 = vector.broadcast %264 : f32 to vector<1x1xf32>
      %266 = arith.addf %258, %265 : vector<1x1xf32>
      %c0_162 = arith.constant 0 : index
      %c0_163 = arith.constant 0 : index
      %267 = vector.load %arg17[%c0_162, %c0_163] : memref<1x1xf32, #tpu.memory_space<vmem>>, vector<1x1xf32>
      tpu.vector_store %arg17[%c0_162, %c0_163], %266 {strides = array<i32>} : memref<1x1xf32, #tpu.memory_space<vmem>>, vector<1x1xf32>,
      %c0_i32_164 = arith.constant 0 : i32
      %268 = arith.cmpi eq, %arg0, %c0_i32_164 : i32
      %c1_i32_165 = arith.constant 1 : i32
      %269 = arith.cmpi eq, %arg1, %c1_i32_165 : i32
      %270 = arith.andi %268, %269 : i1
      %271 = arith.extui %270 : i1 to i32
      %c0_i32_166 = arith.constant 0 : i32
      %272 = arith.cmpi ne, %271, %c0_i32_166 : i32
      scf.if %272 {
        %c0_167 = arith.constant 0 : index
        %c0_168 = arith.constant 0 : index
        %273 = vector.load %arg17[%c0_167, %c0_168] : memref<1x1xf32, #tpu.memory_space<vmem>>, vector<1x1xf32>
        %cst_169 = arith.constant 1.000000e+00 : f32
        %274 = vector.broadcast %cst_169 : f32 to vector<1x1xf32>
        %275 = arith.maximumf %273, %274 : vector<1x1xf32>
        %c0_170 = arith.constant 0 : index
        %c0_171 = arith.constant 0 : index
        %276 = vector.load %arg15[%c0_170, %c0_171] : memref<1x1xf32, #tpu.memory_space<vmem>>, vector<1x1xf32>
        %277 = arith.divf %276, %275 : vector<1x1xf32>
        %c0_172 = arith.constant 0 : index
        %c0_173 = arith.constant 0 : index
        %278 = vector.load %arg9[%c0_172, %c0_173] : memref<1x1xf32, #tpu.memory_space<vmem>>, vector<1x1xf32>
        tpu.vector_store %arg9[%c0_172, %c0_173], %277 {strides = array<i32>} : memref<1x1xf32, #tpu.memory_space<vmem>>, vector<1x1xf32>,
        %c0_174 = arith.constant 0 : index
        %c0_175 = arith.constant 0 : index
        %279 = vector.load %arg16[%c0_174, %c0_175] : memref<1x1xf32, #tpu.memory_space<vmem>>, vector<1x1xf32>
        %280 = arith.divf %279, %275 : vector<1x1xf32>
        %c0_176 = arith.constant 0 : index
        %c0_177 = arith.constant 0 : index
        %281 = vector.load %arg10[%c0_176, %c0_177] : memref<1x1xf32, #tpu.memory_space<vmem>>, vector<1x1xf32>
        tpu.vector_store %arg10[%c0_176, %c0_177], %280 {strides = array<i32>} : memref<1x1xf32, #tpu.memory_space<vmem>>, vector<1x1xf32>,
      } else {
      }
    } else {
    }
    return
  }
  func.func @transform_0(%arg0: i32, %arg1: i32, %arg2: i32) -> (i32, i32, i32) {
    %c0_i32 = arith.constant 0 : i32
    %c0_i32_0 = arith.constant 0 : i32
    return %arg0, %c0_i32, %arg1 : i32, i32, i32
  }
  func.func @transform_1(%arg0: i32, %arg1: i32, %arg2: i32) -> (i32, i32, i32) {
    %c0_i32 = arith.constant 0 : i32
    %c0_i32_0 = arith.constant 0 : i32
    return %arg0, %c0_i32, %arg1 : i32, i32, i32
  }
  func.func @transform_2(%arg0: i32, %arg1: i32, %arg2: i32) -> (i32, i32, i32) {
    %c0_i32 = arith.constant 0 : i32
    %c0_i32_0 = arith.constant 0 : i32
    return %arg0, %c0_i32, %arg1 : i32, i32, i32
  }
  func.func @transform_3(%arg0: i32, %arg1: i32, %arg2: i32) -> (i32, i32, i32) {
    %c0_i32 = arith.constant 0 : i32
    %c0_i32_0 = arith.constant 0 : i32
    return %arg0, %c0_i32, %arg1 : i32, i32, i32
  }
  func.func @transform_4(%arg0: i32, %arg1: i32, %arg2: i32) -> (i32, i32, i32) {
    %c0_i32 = arith.constant 0 : i32
    %c0_i32_0 = arith.constant 0 : i32
    return %arg0, %c0_i32, %arg2 : i32, i32, i32
  }
  func.func @transform_5(%arg0: i32, %arg1: i32, %arg2: i32) -> (i32, i32, i32) {
    %c0_i32 = arith.constant 0 : i32
    %c0_i32_0 = arith.constant 0 : i32
    return %arg0, %c0_i32, %arg2 : i32, i32, i32
  }
  func.func @transform_6(%arg0: i32, %arg1: i32, %arg2: i32) -> (i32, i32) {
    %c0_i32 = arith.constant 0 : i32
    %c0_i32_0 = arith.constant 0 : i32
    %c0_i32_1 = arith.constant 0 : i32
    return %c0_i32, %c0_i32_0 : i32, i32
  }
  func.func @transform_7(%arg0: i32, %arg1: i32, %arg2: i32) -> (i32, i32) {
    %c0_i32 = arith.constant 0 : i32
    %c0_i32_0 = arith.constant 0 : i32
    %c0_i32_1 = arith.constant 0 : i32
    return %c0_i32, %c0_i32_0 : i32, i32
  }
}

</mosaic_0001>

<llo_original>
// kernel: tpu_custom_call.1
$region0: #{tpu_custom_call.1}
  #allocation0 [shape = 'u32[]', space=smem, size = 0x4, offset = 0x4, fixed_abs, tag = 'smem constant byte address 0x4 - core index']
  #allocation1 [shape = 'u32[144,128]{1,0:T(1,128)}', space=vmem, size = 0x12000, scoped, tag = 'internal scratch']
  #allocation2 [shape = 'f32[2,128]{1,0:T(2,128)}', space=vmem, size = 0x400, scoped, tag = 'scratch operand']
  #allocation3 [shape = 'f32[2,128]{1,0:T(2,128)}', space=vmem, size = 0x400, scoped, tag = 'scratch operand']
  #allocation4 [shape = 'f32[2,128]{1,0:T(2,128)}', space=vmem, size = 0x400, scoped, tag = 'scratch operand']
  #allocation5 [shape = 'f32[2,1]{1,0:T(2,128)}', space=vmem, size = 0x400, scoped, tag = 'scratch operand']
  #allocation6 [shape = 'f32[1,1]{1,0:T(1,128)}', space=vmem, size = 0x200, scoped, tag = 'scratch operand']
  #allocation7 [shape = 'f32[1,1]{1,0:T(1,128)}', space=vmem, size = 0x200, scoped, tag = 'scratch operand']
  #allocation8 [shape = 'f32[1,1]{1,0:T(1,128)}', space=vmem, size = 0x200, scoped, tag = 'scratch operand']
  %s0 = inlined_call_operand.hbm [shape: f32[2,8,256], index: 0, kind: input, shape index: {}]
  %s1 = inlined_call_operand.hbm [shape: s32[2,1,256], index: 1, kind: input, shape index: {}]
  %s2 = inlined_call_operand.hbm [shape: f32[2,4,256], index: 2, kind: input, shape index: {}]
  %s3 = inlined_call_operand.hbm [shape: f32[2,4,256], index: 3, kind: input, shape index: {}]
  %s4 = inlined_call_operand.hbm [shape: f32[2,8,256], index: 4, kind: input, shape index: {}]
  %s5 = inlined_call_operand.vmem [shape: s32[2,1,256], index: 5, kind: input, shape index: {}]
  %s6 = inlined_call_operand.hbm [shape: f32[1,1], index: 6, kind: output, shape index: {0}]
  %s7 = inlined_call_operand.hbm [shape: f32[1,1], index: 7, kind: output, shape index: {1}]
  %8 = xla_tuple %s6, %s7
  %s9 = sld [smem:[#allocation0]]
  $region147: #{tpu_custom_call.1} parent=0
    _
  %s11 = ssub.s32 1, %s9
  %s12 = scalar_select 0, %s11, %s9
  $region1: #{tpu_custom_call.1} parent=0
    #allocation9 [shape = 'u8[16384]{0}', space=vmem, size = 0x4000, scoped, tag = 'input window, operand 0']
    #allocation10 [shape = 's32[2]{0}', space=sflag, size = 0x8, scoped, tag = 'scoped memory for tpu_custom_call.1']
    #allocation11 [shape = 's32[2]{0}', space=sflag, size = 0x8, scoped, tag = 'scoped memory for tpu_custom_call.1']
    #allocation12 [shape = 'u8[2048]{0}', space=vmem, size = 0x800, scoped, tag = 'input window, operand 1']
    #allocation13 [shape = 's32[2]{0}', space=sflag, size = 0x8, scoped, tag = 'scoped memory for tpu_custom_call.1']
    #allocation14 [shape = 'u8[8192]{0}', space=vmem, size = 0x2000, scoped, tag = 'input window, operand 2']
    #allocation15 [shape = 'u8[8192]{0}', space=vmem, size = 0x2000, scoped, tag = 'input window, operand 3']
    #allocation16 [shape = 's32[2]{0}', space=sflag, size = 0x8, scoped, tag = 'scoped memory for tpu_custom_call.1']
    #allocation17 [shape = 'u8[16384]{0}', space=vmem, size = 0x4000, scoped, tag = 'input window, operand 4']
    #allocation18 [shape = 'u8[2048]{0}', space=vmem, size = 0x800, scoped, tag = 'input window, operand 5']
    #allocation19 [shape = 'u8[512]{0}', space=vmem, size = 0x400, scoped, tag = 'output window, operand 0, single buffered']
    #allocation20 [shape = 'u8[512]{0}', space=vmem, size = 0x400, scoped, tag = 'output window, operand 1, single buffered']
    #allocation21 [shape = 's32[1]{0}', space=sflag, size = 0x4, scoped, tag = 'scoped memory for tpu_custom_call.1']
    %13 = vsyncpa [#allocation10], 0
    %s14 = scalar_lea.sflag [#allocation10], 1
    %15 = vsyncpa %s14, 0
    %16 = vsyncpa [#allocation13], 0
    %s17 = scalar_lea.sflag [#allocation13], 1
    %18 = vsyncpa %s17, 0
    %19 = vsyncpa [#allocation16], 0
    %s20 = scalar_lea.sflag [#allocation16], 1
    %21 = vsyncpa %s20, 0
    %22 = vsyncpa [#allocation11], 0
    %23 = vsyncpa [#allocation21], 0
    loop: start=0, step=1, limit=6
    $region2: #{tpu_custom_call.1} parent=1 // loop_pre_header
      _
    $region3: #{tpu_custom_call.1} parent=1 // loop_header
      %s25 = sphi 0, %s29
      %p26 = scmp.ge.s32.totalorder %s25, 6
      %s32 = sphi 0, %s51
      %s33 = sphi 0, %s47
      %s34 = sphi 0, %s43
      %s35 = sphi 0, %s32
      %s36 = sphi 0, %s33
      %s37 = sphi 0, %s34
      %s38 = sphi 0, %s35
      %s39 = sphi 0, %s36
      %s40 = sphi 0, %s37
      %s56 = sphi 0, %s58
      %s59 = sphi 0, %s56
      %s60 = sphi 0, %s59
      %s76 = sphi 0, %s60
      %s84 = sphi 0, %s86
      %s87 = sphi 0, %s84
      %s88 = sphi 0, %s87
      %s104 = sphi 0, %s88
      %s112 = sphi 0, %s114
      %s115 = sphi 0, %s112
      %s116 = sphi 0, %s115
      %s132 = sphi 0, %s116
      %s140 = sphi 0, %s142
      %s143 = sphi 0, %s140
      %s144 = sphi 0, %s143
      %s160 = sphi 0, %s144
      %s168 = sphi 0, %s170
      %s171 = sphi 0, %s168
      %s172 = sphi 0, %s171
      %s188 = sphi 0, %s172
      %s196 = sphi 0, %s198
      %s199 = sphi 0, %s196
      %s200 = sphi 0, %s199
      %s216 = sphi 0, %s200
      %s220 = sphi 0, %s220
      %s222 = sphi 0, %s220
      %s223 = sphi 0, %s222
      %s237 = sphi 0, %s223
      %s241 = sphi 0, %s241
      %s243 = sphi 0, %s241
      %s244 = sphi 0, %s243
      %s258 = sphi 0, %s244
    $region4: #{tpu_custom_call.1} parent=1 // loop_header_branch
      %28 = sbr.rel (%p26) target = $region8
    $region5: #{tpu_custom_call.1} parent=1 // loop_body
      %s30 = ssub.s32 %s25, 1
      %s31 = ssub.s32 %s25, 2
      %s41 = sadd.s32 1, %s34
      %p42 = scmp.ge.s32.totalorder %s41, 2
      %s43 = scalar_select %p42, 0, %s41
      %s44 = sadd.s32 1, %s33
      %s45 = scalar_select %p42, %s44, %s33
      %p46 = scmp.ge.s32.totalorder %s45, 2
      %s47 = scalar_select %p46, 0, %s45
      %s48 = sadd.s32 1, %s32
      %s49 = scalar_select %p46, %s48, %s32
      %p50 = scmp.ge.s32.totalorder %s49, 1
      %s51 = scalar_select %p50, 0, %s49
      %s52 = ssub.s32 %s32, %s51
      %s53 = ssub.s32 %s33, %s47
      %s54 = sor.u32 %s52, %s53
      %p55 = scmp.eq.s32.totalorder %s54, 0
      %s57 = sadd.s32 %s56, 1
      %s58 = scalar_select %p55, %s56, %s57
      %p61 = pneg %p55
      %p62 = scmp.eq.s32.totalorder %s25, 3
      %p63 = por %p61, %p62
      %p64 = scmp.ne.s32.totalorder %s56, %s59
      %p65 = scmp.eq.s32.totalorder %s25, 0
      %p66 = por %p64, %p65
      %p67 = scmp.ne.s32.totalorder %s56, %s59
      %p68 = scmp.eq.s32.totalorder %s30, 3
      %p69 = por %p67, %p68
      %p70 = scmp.ne.s32.totalorder %s59, %s60
      %p71 = scmp.eq.s32.totalorder %s30, 0
      %p72 = por %p70, %p71
      %p73 = scmp.ne.s32.totalorder %s59, %s60
      %p74 = scmp.eq.s32.totalorder %s31, 3
      %p75 = por %p73, %p74
      %p77 = scmp.ne.s32.totalorder %s60, %s76
      %p78 = scmp.eq.s32.totalorder %s31, 0
      %p79 = por %p77, %p78
      %s80 = ssub.s32 %s32, %s51
      %s81 = ssub.s32 %s33, %s47
      %s82 = sor.u32 %s80, %s81
      %p83 = scmp.eq.s32.totalorder %s82, 0
      %s85 = sadd.s32 %s84, 1
      %s86 = scalar_select %p83, %s84, %s85
      %p89 = pneg %p83
      %p90 = scmp.eq.s32.totalorder %s25, 3
      %p91 = por %p89, %p90
      %p92 = scmp.ne.s32.totalorder %s84, %s87
      %p93 = scmp.eq.s32.totalorder %s25, 0
      %p94 = por %p92, %p93
      %p95 = scmp.ne.s32.totalorder %s84, %s87
      %p96 = scmp.eq.s32.totalorder %s30, 3
      %p97 = por %p95, %p96
      %p98 = scmp.ne.s32.totalorder %s87, %s88
      %p99 = scmp.eq.s32.totalorder %s30, 0
      %p100 = por %p98, %p99
      %p101 = scmp.ne.s32.totalorder %s87, %s88
      %p102 = scmp.eq.s32.totalorder %s31, 3
      %p103 = por %p101, %p102
      %p105 = scmp.ne.s32.totalorder %s88, %s104
      %p106 = scmp.eq.s32.totalorder %s31, 0
      %p107 = por %p105, %p106
      %s108 = ssub.s32 %s32, %s51
      %s109 = ssub.s32 %s33, %s47
      %s110 = sor.u32 %s108, %s109
      %p111 = scmp.eq.s32.totalorder %s110, 0
      %s113 = sadd.s32 %s112, 1
      %s114 = scalar_select %p111, %s112, %s113
      %p117 = pneg %p111
      %p118 = scmp.eq.s32.totalorder %s25, 3
      %p119 = por %p117, %p118
      %p120 = scmp.ne.s32.totalorder %s112, %s115
      %p121 = scmp.eq.s32.totalorder %s25, 0
      %p122 = por %p120, %p121
      %p123 = scmp.ne.s32.totalorder %s112, %s115
      %p124 = scmp.eq.s32.totalorder %s30, 3
      %p125 = por %p123, %p124
      %p126 = scmp.ne.s32.totalorder %s115, %s116
      %p127 = scmp.eq.s32.totalorder %s30, 0
      %p128 = por %p126, %p127
      %p129 = scmp.ne.s32.totalorder %s115, %s116
      %p130 = scmp.eq.s32.totalorder %s31, 3
      %p131 = por %p129, %p130
      %p133 = scmp.ne.s32.totalorder %s116, %s132
      %p134 = scmp.eq.s32.totalorder %s31, 0
      %p135 = por %p133, %p134
      %s136 = ssub.s32 %s32, %s51
      %s137 = ssub.s32 %s33, %s47
      %s138 = sor.u32 %s136, %s137
      %p139 = scmp.eq.s32.totalorder %s138, 0
      %s141 = sadd.s32 %s140, 1
      %s142 = scalar_select %p139, %s140, %s141
      %p145 = pneg %p139
      %p146 = scmp.eq.s32.totalorder %s25, 3
      %p147 = por %p145, %p146
      %p148 = scmp.ne.s32.totalorder %s140, %s143
      %p149 = scmp.eq.s32.totalorder %s25, 0
      %p150 = por %p148, %p149
      %p151 = scmp.ne.s32.totalorder %s140, %s143
      %p152 = scmp.eq.s32.totalorder %s30, 3
      %p153 = por %p151, %p152
      %p154 = scmp.ne.s32.totalorder %s143, %s144
      %p155 = scmp.eq.s32.totalorder %s30, 0
      %p156 = por %p154, %p155
      %p157 = scmp.ne.s32.totalorder %s143, %s144
      %p158 = scmp.eq.s32.totalorder %s31, 3
      %p159 = por %p157, %p158
      %p161 = scmp.ne.s32.totalorder %s144, %s160
      %p162 = scmp.eq.s32.totalorder %s31, 0
      %p163 = por %p161, %p162
      %s164 = ssub.s32 %s32, %s51
      %s165 = ssub.s32 %s34, %s43
      %s166 = sor.u32 %s164, %s165
      %p167 = scmp.eq.s32.totalorder %s166, 0
      %s169 = sadd.s32 %s168, 1
      %s170 = scalar_select %p167, %s168, %s169
      %p173 = pneg %p167
      %p174 = scmp.eq.s32.totalorder %s25, 3
      %p175 = por %p173, %p174
      %p176 = scmp.ne.s32.totalorder %s168, %s171
      %p177 = scmp.eq.s32.totalorder %s25, 0
      %p178 = por %p176, %p177
      %p179 = scmp.ne.s32.totalorder %s168, %s171
      %p180 = scmp.eq.s32.totalorder %s30, 3
      %p181 = por %p179, %p180
      %p182 = scmp.ne.s32.totalorder %s171, %s172
      %p183 = scmp.eq.s32.totalorder %s30, 0
      %p184 = por %p182, %p183
      %p185 = scmp.ne.s32.totalorder %s171, %s172
      %p186 = scmp.eq.s32.totalorder %s31, 3
      %p187 = por %p185, %p186
      %p189 = scmp.ne.s32.totalorder %s172, %s188
      %p190 = scmp.eq.s32.totalorder %s31, 0
      %p191 = por %p189, %p190
      %s192 = ssub.s32 %s32, %s51
      %s193 = ssub.s32 %s34, %s43
      %s194 = sor.u32 %s192, %s193
      %p195 = scmp.eq.s32.totalorder %s194, 0
      %s197 = sadd.s32 %s196, 1
      %s198 = scalar_select %p195, %s196, %s197
      %p201 = pneg %p195
      %p202 = scmp.eq.s32.totalorder %s25, 3
      %p203 = por %p201, %p202
      %p204 = scmp.ne.s32.totalorder %s196, %s199
      %p205 = scmp.eq.s32.totalorder %s25, 0
      %p206 = por %p204, %p205
      %p207 = scmp.ne.s32.totalorder %s196, %s199
      %p208 = scmp.eq.s32.totalorder %s30, 3
      %p209 = por %p207, %p208
      %p210 = scmp.ne.s32.totalorder %s199, %s200
      %p211 = scmp.eq.s32.totalorder %s30, 0
      %p212 = por %p210, %p211
      %p213 = scmp.ne.s32.totalorder %s199, %s200
      %p214 = scmp.eq.s32.totalorder %s31, 3
      %p215 = por %p213, %p214
      %p217 = scmp.ne.s32.totalorder %s200, %s216
      %p218 = scmp.eq.s32.totalorder %s31, 0
      %p219 = por %p217, %p218
      %s221 = sadd.s32 %s220, 1
      %p224 = scmp.eq.s32.totalorder %s25, 3
      %p225 = scmp.ne.s32.totalorder %s220, %s222
      %p226 = scmp.eq.s32.totalorder %s25, 0
      %p227 = por %p225, %p226
      %p228 = scmp.ne.s32.totalorder %s220, %s222
      %p229 = scmp.eq.s32.totalorder %s30, 3
      %p230 = por %p228, %p229
      %p231 = scmp.ne.s32.totalorder %s222, %s223
      %p232 = scmp.eq.s32.totalorder %s30, 0
      %p233 = por %p231, %p232
      %p234 = scmp.ne.s32.totalorder %s222, %s223
      %p235 = scmp.eq.s32.totalorder %s31, 3
      %p236 = por %p234, %p235
      %p238 = scmp.ne.s32.totalorder %s223, %s237
      %p239 = scmp.eq.s32.totalorder %s31, 0
      %p240 = por %p238, %p239
      %s242 = sadd.s32 %s241, 1
      %p245 = scmp.eq.s32.totalorder %s25, 3
      %p246 = scmp.ne.s32.totalorder %s241, %s243
      %p247 = scmp.eq.s32.totalorder %s25, 0
      %p248 = por %p246, %p247
      %p249 = scmp.ne.s32.totalorder %s241, %s243
      %p250 = scmp.eq.s32.totalorder %s30, 3
      %p251 = por %p249, %p250
      %p252 = scmp.ne.s32.totalorder %s243, %s244
      %p253 = scmp.eq.s32.totalorder %s30, 0
      %p254 = por %p252, %p253
      %p255 = scmp.ne.s32.totalorder %s243, %s244
      %p256 = scmp.eq.s32.totalorder %s31, 3
      %p257 = por %p255, %p256
      %p259 = scmp.ne.s32.totalorder %s244, %s258
      %p260 = scmp.eq.s32.totalorder %s31, 0
      %p261 = por %p259, %p260
      %p262 = scmp.le.s32.totalorder 1, %s25
      %p263 = scmp.lt.s32.totalorder %s25, 5
      %p264 = pnand %p262, %p263
      %p265 = pneg %p264
      // Predicated region
      $region9: #{tpu_custom_call.1} parent=5 // pred_check
        _
      $region10: #{tpu_custom_call.1} parent=5 // pred_check_branch
        %267 = sbr.rel (%p264) target = $region12
      $region11: #{tpu_custom_call.1} parent=5 // pred_region
        %s268 = ssub.s32 %s25, 1
      $region12: #{tpu_custom_call.1} parent=5 // pred_fallthru
        _
      %p269 = scmp.lt.s32.totalorder %s25, 4
      // Predicated region
      $region13: #{tpu_custom_call.1} parent=5 // pred_check
        %p270 = pneg %p269
      $region14: #{tpu_custom_call.1} parent=5 // pred_check_branch
        %272 = sbr.rel (%p270) target = $region16
      $region15: #{tpu_custom_call.1} parent=5 // pred_region
        // Predicated region
        $region17: #{tpu_custom_call.1} parent=15 // pred_check
          %p273 = pneg %p66
        $region18: #{tpu_custom_call.1} parent=15 // pred_check_branch
          %275 = sbr.rel (%p273) target = $region20
        $region19: #{tpu_custom_call.1} parent=15 // pred_region
          %s276 = sand.u32 %s56, 1
          %s277 = scalar_lea.sflag [#allocation10], %s276
          %s278 = sand.u32 %s56, 1
          %s279 = smul.addr %s278, 16
          %s280 = scalar_lea.vmem [#allocation9], %s279
          %s281 = smul.u32 2, %s32
          %s283 = ssub.s32 256, 256
          %284 = vsyncadd %s277, %s283
          %s285 = smul.addr %s281, 2
          %s286 = sadd.s32 %s33, %s285
          %s287 = smul.addr %s286, 128
          %s288 = scalar_lea.hbm %s0, %s287
          %s289 = sshll.u32 %s280, 4
          %s290 = int_to_ptr.vmem [resolvable:$true] %s289
          %295 = dma.hbm_to_vmem [thread:$0]  %s288, 256, %s290, %s277, 256, 128, 8
        $region20: #{tpu_custom_call.1} parent=15 // pred_fallthru
          _
        // Predicated region
        $region21: #{tpu_custom_call.1} parent=15 // pred_check
          %p296 = pneg %p94
        $region22: #{tpu_custom_call.1} parent=15 // pred_check_branch
          %298 = sbr.rel (%p296) target = $region24
        $region23: #{tpu_custom_call.1} parent=15 // pred_region
          %s299 = sand.u32 %s25, 1
          %s300 = scalar_lea.sflag [#allocation13], %s299
          %s301 = sand.u32 %s84, 1
          %s302 = smul.addr %s301, 2
          %s303 = scalar_lea.vmem [#allocation12], %s302
          %s304 = smul.u32 2, %s32
          %s306 = ssub.s32 32, 32
          %307 = vsyncadd %s300, %s306
          %s308 = smul.addr %s304, 2
          %s309 = sadd.s32 %s33, %s308
          %s310 = smul.addr %s309, 16
          %s311 = scalar_lea.hbm %s1, %s310
          %s312 = sshll.u32 %s303, 4
          %s313 = int_to_ptr.vmem [resolvable:$true] %s312
          %318 = dma.hbm_to_vmem [thread:$0]  %s311, 32, %s313, %s300, 32, 16, 1
        $region24: #{tpu_custom_call.1} parent=15 // pred_fallthru
          _
        // Predicated region
        $region25: #{tpu_custom_call.1} parent=15 // pred_check
          %p319 = pneg %p122
        $region26: #{tpu_custom_call.1} parent=15 // pred_check_branch
          %321 = sbr.rel (%p319) target = $region28
        $region27: #{tpu_custom_call.1} parent=15 // pred_region
          %s322 = sand.u32 %s25, 1
          %s323 = scalar_lea.sflag [#allocation13], %s322
          %s324 = sand.u32 %s112, 1
          %s325 = smul.addr %s324, 8
          %s326 = scalar_lea.vmem [#allocation14], %s325
          %s327 = smul.u32 2, %s32
          %s329 = ssub.s32 128, 128
          %330 = vsyncadd %s323, %s329
          %s331 = smul.addr %s327, 2
          %s332 = sadd.s32 %s33, %s331
          %s333 = smul.addr %s332, 64
          %s334 = scalar_lea.hbm %s2, %s333
          %s335 = sshll.u32 %s326, 4
          %s336 = int_to_ptr.vmem [resolvable:$true] %s335
          %341 = dma.hbm_to_vmem [thread:$0]  %s334, 128, %s336, %s323, 128, 64, 4
        $region28: #{tpu_custom_call.1} parent=15 // pred_fallthru
          _
        // Predicated region
        $region29: #{tpu_custom_call.1} parent=15 // pred_check
          %p342 = pneg %p150
        $region30: #{tpu_custom_call.1} parent=15 // pred_check_branch
          %344 = sbr.rel (%p342) target = $region32
        $region31: #{tpu_custom_call.1} parent=15 // pred_region
          %s345 = sand.u32 %s25, 1
          %s346 = scalar_lea.sflag [#allocation16], %s345
          %s347 = sand.u32 %s140, 1
          %s348 = smul.addr %s347, 8
          %s349 = scalar_lea.vmem [#allocation15], %s348
          %s350 = smul.u32 2, %s32
          %s352 = ssub.s32 128, 128
          %353 = vsyncadd %s346, %s352
          %s354 = smul.addr %s350, 2
          %s355 = sadd.s32 %s33, %s354
          %s356 = smul.addr %s355, 64
          %s357 = scalar_lea.hbm %s3, %s356
          %s358 = sshll.u32 %s349, 4
          %s359 = int_to_ptr.vmem [resolvable:$true] %s358
          %364 = dma.hbm_to_vmem [thread:$0]  %s357, 128, %s359, %s346, 128, 64, 4
        $region32: #{tpu_custom_call.1} parent=15 // pred_fallthru
          _
        // Predicated region
        $region33: #{tpu_custom_call.1} parent=15 // pred_check
          %p365 = pneg %p178
        $region34: #{tpu_custom_call.1} parent=15 // pred_check_branch
          %367 = sbr.rel (%p365) target = $region36
        $region35: #{tpu_custom_call.1} parent=15 // pred_region
          %s368 = sand.u32 %s25, 1
          %s369 = scalar_lea.sflag [#allocation16], %s368
          %s370 = sand.u32 %s168, 1
          %s371 = smul.addr %s370, 16
          %s372 = scalar_lea.vmem [#allocation17], %s371
          %s373 = smul.u32 2, %s32
          %s375 = ssub.s32 256, 256
          %376 = vsyncadd %s369, %s375
          %s377 = smul.addr %s373, 2
          %s378 = sadd.s32 %s34, %s377
          %s379 = smul.addr %s378, 128
          %s380 = scalar_lea.hbm %s4, %s379
          %s381 = sshll.u32 %s372, 4
          %s382 = int_to_ptr.vmem [resolvable:$true] %s381
          %387 = dma.hbm_to_vmem [thread:$0]  %s380, 256, %s382, %s369, 256, 128, 8
        $region36: #{tpu_custom_call.1} parent=15 // pred_fallthru
          _
        // Predicated region
        $region37: #{tpu_custom_call.1} parent=15 // pred_check
          %p388 = pneg %p206
        $region38: #{tpu_custom_call.1} parent=15 // pred_check_branch
          %390 = sbr.rel (%p388) target = $region40
        $region39: #{tpu_custom_call.1} parent=15 // pred_region
          %s391 = sand.u32 %s196, 1
          %s392 = sand.u32 %s196, 1
          %s393 = smul.addr %s392, 2
          %s394 = scalar_lea.vmem [#allocation18], %s393
          %s395 = smul.u32 2, %s32
          %s396 = smul.addr %s395, 2
          %s397 = sadd.s32 %s34, %s396
          %s398 = scalar_lea.vmem %s5, %s397
          // Predicated region
          $region41: #{tpu_custom_call.1} parent=39 // pred_check
            _
          $region42: #{tpu_custom_call.1} parent=39 // pred_check_branch
            %400 = sbr.rel (0) target = $region44
          $region43: #{tpu_custom_call.1} parent=39 // pred_region
            // Predicated region
            $region45: #{tpu_custom_call.1} parent=43 // pred_check
              _
            $region46: #{tpu_custom_call.1} parent=43 // pred_check_branch
              %402 = sbr.rel target = $region48
            $region47: #{tpu_custom_call.1} parent=43 // pred_region
              // Predicated region
              $region60: #{tpu_custom_call.1} parent=47 // pred_check
                _
              $region61: #{tpu_custom_call.1} parent=47 // pred_check_branch
                %420 = sbr.rel (0) target = $region63
              $region62: #{tpu_custom_call.1} parent=47 // pred_region
                %s422 = ssub.s32 2, 1
                loop: start=0, step=1, limit=1
                $region64: #{tpu_custom_call.1} parent=62 // loop_pre_header
                  _
                $region65: #{tpu_custom_call.1} parent=62 // loop_header
                  %s424 = sphi 0, %s428
                  %p425 = scmp.ge.s32.totalorder %s424, 1
                  %s429 = sphi %s398, %s398
                  %s430 = sphi %s394, %s394
                $region66: #{tpu_custom_call.1} parent=62 // loop_header_branch
                  %427 = sbr.rel (%p425) target = $region70
                $region67: #{tpu_custom_call.1} parent=62 // loop_body
                  %v431 = vld [vmem:[%s429] sm:%s422]
                  %432 = vst [vmem:[%s430] sm:%s422] %v431
                  %v433 = vld [vmem:[%s429 + $0x2] sm:%s422]
                  %434 = vst [vmem:[%s430 + $0x1] sm:%s422] %v433
                $region68: #{tpu_custom_call.1} parent=62 // loop_footer
                  %s428 = sadd.s32 1, %s424
                $region69: #{tpu_custom_call.1} parent=62 // loop_footer_branch
                  %423 = sbr.rel target = $region65
                $region70: #{tpu_custom_call.1} parent=62 // loop_exit
                  _
              $region63: #{tpu_custom_call.1} parent=47 // pred_fallthru
                _
            $region48: #{tpu_custom_call.1} parent=43 // pred_fallthru
              _
            // Predicated region
            $region49: #{tpu_custom_call.1} parent=43 // pred_check
              _
            $region50: #{tpu_custom_call.1} parent=43 // pred_check_branch
              %404 = sbr.rel (0) target = $region52
            $region51: #{tpu_custom_call.1} parent=43 // pred_region
              %s406 = ssub.s32 2, 1
              loop: start=0, step=1, limit=1
              $region53: #{tpu_custom_call.1} parent=51 // loop_pre_header
                _
              $region54: #{tpu_custom_call.1} parent=51 // loop_header
                %s408 = sphi 0, %s412
                %p409 = scmp.ge.s32.totalorder %s408, 1
                %s413 = sphi %s398, %s398
                %s414 = sphi %s394, %s394
              $region55: #{tpu_custom_call.1} parent=51 // loop_header_branch
                %411 = sbr.rel (%p409) target = $region59
              $region56: #{tpu_custom_call.1} parent=51 // loop_body
                %v415 = vld [vmem:[%s413] sm:%s406]
                %416 = vst [vmem:[%s414] sm:%s406] %v415
                %v417 = vld [vmem:[%s413 + $0x2] sm:%s406]
                %418 = vst [vmem:[%s414 + $0x1] sm:%s406] %v417
              $region57: #{tpu_custom_call.1} parent=51 // loop_footer
                %s412 = sadd.s32 1, %s408
              $region58: #{tpu_custom_call.1} parent=51 // loop_footer_branch
                %407 = sbr.rel target = $region54
              $region59: #{tpu_custom_call.1} parent=51 // loop_exit
                _
            $region52: #{tpu_custom_call.1} parent=43 // pred_fallthru
              _
          $region44: #{tpu_custom_call.1} parent=39 // pred_fallthru
            _
          %435 = vnop
        $region40: #{tpu_custom_call.1} parent=15 // pred_fallthru
          _
      $region16: #{tpu_custom_call.1} parent=5 // pred_fallthru
        _
      %p436 = scmp.le.s32.totalorder 1, %s25
      %p437 = scmp.lt.s32.totalorder %s25, 5
      %p438 = pnand %p436, %p437
      %p439 = pneg %p438
      // Predicated region
      $region71: #{tpu_custom_call.1} parent=5 // pred_check
        _
      $region72: #{tpu_custom_call.1} parent=5 // pred_check_branch
        %441 = sbr.rel (%p438) target = $region74
      $region73: #{tpu_custom_call.1} parent=5 // pred_region
        %s442 = ssub.s32 %s25, 1
        %s443 = sand.u32 %s59, 1
        %s444 = scalar_lea.sflag [#allocation10], %s443
        %s445 = sand.u32 %s59, 1
        %s446 = smul.addr %s445, 16
        %s447 = scalar_lea.vmem [#allocation9], %s446
        // Predicated region
        $region75: #{tpu_custom_call.1} parent=73 // pred_check
          %p448 = pneg %p72
        $region76: #{tpu_custom_call.1} parent=73 // pred_check_branch
          %450 = sbr.rel (%p448) target = $region78
        $region77: #{tpu_custom_call.1} parent=73 // pred_region
          %451 = dma.done %s444, 256
        $region78: #{tpu_custom_call.1} parent=73 // pred_fallthru
          _
        %s452 = sand.u32 %s30, 1
        %s453 = scalar_lea.sflag [#allocation13], %s452
        %s454 = sand.u32 %s87, 1
        %s455 = smul.addr %s454, 2
        %s456 = scalar_lea.vmem [#allocation12], %s455
        // Predicated region
        $region79: #{tpu_custom_call.1} parent=73 // pred_check
          %p457 = pneg %p100
        $region80: #{tpu_custom_call.1} parent=73 // pred_check_branch
          %459 = sbr.rel (%p457) target = $region82
        $region81: #{tpu_custom_call.1} parent=73 // pred_region
          %460 = dma.done %s453, 32
        $region82: #{tpu_custom_call.1} parent=73 // pred_fallthru
          _
        %s461 = sand.u32 %s30, 1
        %s462 = scalar_lea.sflag [#allocation13], %s461
        %s463 = sand.u32 %s115, 1
        %s464 = smul.addr %s463, 8
        %s465 = scalar_lea.vmem [#allocation14], %s464
        // Predicated region
        $region83: #{tpu_custom_call.1} parent=73 // pred_check
          %p466 = pneg %p128
        $region84: #{tpu_custom_call.1} parent=73 // pred_check_branch
          %468 = sbr.rel (%p466) target = $region86
        $region85: #{tpu_custom_call.1} parent=73 // pred_region
          %469 = dma.done %s462, 128
        $region86: #{tpu_custom_call.1} parent=73 // pred_fallthru
          _
        %s470 = sand.u32 %s30, 1
        %s471 = scalar_lea.sflag [#allocation16], %s470
        %s472 = sand.u32 %s143, 1
        %s473 = smul.addr %s472, 8
        %s474 = scalar_lea.vmem [#allocation15], %s473
        // Predicated region
        $region87: #{tpu_custom_call.1} parent=73 // pred_check
          %p475 = pneg %p156
        $region88: #{tpu_custom_call.1} parent=73 // pred_check_branch
          %477 = sbr.rel (%p475) target = $region90
        $region89: #{tpu_custom_call.1} parent=73 // pred_region
          %478 = dma.done %s471, 128
        $region90: #{tpu_custom_call.1} parent=73 // pred_fallthru
          _
        %s479 = sand.u32 %s30, 1
        %s480 = scalar_lea.sflag [#allocation16], %s479
        %s481 = sand.u32 %s171, 1
        %s482 = smul.addr %s481, 16
        %s483 = scalar_lea.vmem [#allocation17], %s482
        // Predicated region
        $region91: #{tpu_custom_call.1} parent=73 // pred_check
          %p484 = pneg %p184
        $region92: #{tpu_custom_call.1} parent=73 // pred_check_branch
          %486 = sbr.rel (%p484) target = $region94
        $region93: #{tpu_custom_call.1} parent=73 // pred_region
          %487 = dma.done %s480, 256
        $region94: #{tpu_custom_call.1} parent=73 // pred_fallthru
          _
        %s488 = sand.u32 %s199, 1
        %s489 = sand.u32 %s199, 1
        %s490 = smul.addr %s489, 2
        %s491 = scalar_lea.vmem [#allocation18], %s490
        // Predicated region
        $region95: #{tpu_custom_call.1} parent=73 // pred_check
          %p492 = pneg %p212
        $region96: #{tpu_custom_call.1} parent=73 // pred_check_branch
          %494 = sbr.rel (%p492) target = $region98
        $region97: #{tpu_custom_call.1} parent=73 // pred_region
          _
        $region98: #{tpu_custom_call.1} parent=73 // pred_fallthru
          _
        %s495 = sand.u32 %s59, 1
        %s496 = scalar_lea.sflag [#allocation10], %s495
        %s497 = sand.u32 %s59, 1
        %s498 = smul.addr %s497, 16
        %s499 = scalar_lea.vmem [#allocation9], %s498
        %p500 = pneg %p72
        %p501 = pneg %p69
        %s502 = sand.u32 %s30, 1
        %s503 = scalar_lea.sflag [#allocation13], %s502
        %s504 = sand.u32 %s87, 1
        %s505 = smul.addr %s504, 2
        %s506 = scalar_lea.vmem [#allocation12], %s505
        %p507 = pneg %p100
        %p508 = pneg %p97
        %s509 = sand.u32 %s30, 1
        %s510 = scalar_lea.sflag [#allocation13], %s509
        %s511 = sand.u32 %s115, 1
        %s512 = smul.addr %s511, 8
        %s513 = scalar_lea.vmem [#allocation14], %s512
        %p514 = pneg %p128
        %p515 = pneg %p125
        %s516 = sand.u32 %s30, 1
        %s517 = scalar_lea.sflag [#allocation16], %s516
        %s518 = sand.u32 %s143, 1
        %s519 = smul.addr %s518, 8
        %s520 = scalar_lea.vmem [#allocation15], %s519
        %p521 = pneg %p156
        %p522 = pneg %p153
        %s523 = sand.u32 %s30, 1
        %s524 = scalar_lea.sflag [#allocation16], %s523
        %s525 = sand.u32 %s171, 1
        %s526 = smul.addr %s525, 16
        %s527 = scalar_lea.vmem [#allocation17], %s526
        %p528 = pneg %p184
        %p529 = pneg %p181
        %s530 = sand.u32 %s199, 1
        %s531 = sand.u32 %s199, 1
        %s532 = smul.addr %s531, 2
        %s533 = scalar_lea.vmem [#allocation18], %s532
        %p534 = pneg %p212
        %p535 = pneg %p209
        %p536 = pneg %p233
        %p537 = pneg %p230
        %p538 = pneg %p254
        %p539 = pneg %p251
        %s540 = smul.u32 2, %s35
        %s541 = smul.u32 2, %s35
        %s542 = smul.u32 2, %s35
        %s543 = smul.u32 2, %s35
        %s544 = smul.u32 2, %s35
        %s545 = smul.u32 2, %s35
        %p546 = scmp.eq.s32.totalorder %s35, 0
        %p547 = scmp.eq.s32.totalorder %s36, 0
        %p548 = pnand %p546, %p547
        %p549 = pneg %p548
        %p550 = scmp.eq.s32.totalorder %s37, 0
        %p551 = pnand %p549, %p550
        %p552 = pneg %p551
        // Predicated region
        $region99: #{tpu_custom_call.1} parent=73 // pred_check
          _
        $region100: #{tpu_custom_call.1} parent=73 // pred_check_branch
          %554 = sbr.rel (%p551) target = $region102
        $region101: #{tpu_custom_call.1} parent=73 // pred_region
          %vm555 = vcmask 0
          %556 = vst.msk [vmem:[#allocation6] sm:$0x1] %vm555, 0.0
          %557 = vst.msk [vmem:[#allocation7] sm:$0x1] %vm555, 0.0
          %558 = vst.msk [vmem:[#allocation8] sm:$0x1] %vm555, 0.0
        $region102: #{tpu_custom_call.1} parent=73 // pred_fallthru
          _
        // Predicated region
        $region103: #{tpu_custom_call.1} parent=73 // pred_check
          %p559 = pneg %p550
        $region104: #{tpu_custom_call.1} parent=73 // pred_check_branch
          %561 = sbr.rel (%p559) target = $region106
        $region105: #{tpu_custom_call.1} parent=73 // pred_region
          %562 = vst [vmem:[#allocation2] sm:$0x3] 0.0
          %vm563 = vcmask 1024
          %564 = vst.msk [vmem:[#allocation5] sm:$0x3] %vm563, 0.0
          %v565 = vld [vmem:[%s447] sm:$0x1]
          %v566 = vld [vmem:[%s447 + $0x8] sm:$0x1]
          %v567 = vld [vmem:[%s447 + $0x1] sm:$0x1]
          %v568 = vld [vmem:[%s447 + $0x9] sm:$0x1]
          %v569 = vmax.f32 %v565, %v567
          %v570 = vmax.f32 %v566, %v568
          %v571 = vld [vmem:[%s447 + $0x2] sm:$0x1]
          %v572 = vld [vmem:[%s447 + $0xa] sm:$0x1]
          %v573 = vmax.f32 %v569, %v571
          %v574 = vmax.f32 %v570, %v572
          %v575 = vld [vmem:[%s447 + $0x3] sm:$0x1]
          %v576 = vld [vmem:[%s447 + $0xb] sm:$0x1]
          %v577 = vmax.f32 %v573, %v575
          %v578 = vmax.f32 %v574, %v576
          %v579 = vld [vmem:[%s447 + $0x4] sm:$0x1]
          %v580 = vld [vmem:[%s447 + $0xc] sm:$0x1]
          %v581 = vmax.f32 %v577, %v579
          %v582 = vmax.f32 %v578, %v580
          %v583 = vld [vmem:[%s447 + $0x5] sm:$0x1]
          %v584 = vld [vmem:[%s447 + $0xd] sm:$0x1]
          %v585 = vmax.f32 %v581, %v583
          %v586 = vmax.f32 %v582, %v584
          %v587 = vld [vmem:[%s447 + $0x6] sm:$0x1]
          %v588 = vld [vmem:[%s447 + $0xe] sm:$0x1]
          %v589 = vmax.f32 %v585, %v587
          %v590 = vmax.f32 %v586, %v588
          %v591 = vld [vmem:[%s447 + $0x7] sm:$0x1]
          %v592 = vld [vmem:[%s447 + $0xf] sm:$0x1]
          %v593 = vmax.f32 %v589, %v591
          %v594 = vmax.f32 %v590, %v592
          %v595 = vsub.f32 %v565, %v593
          %v596 = vsub.f32 %v566, %v594
          %v597 = vmul.f32 %v595, 1.442695
          %v598 = vpow.pop %v597
          %v599 = vmul.f32 %v596, 1.442695
          %v600 = vpow.pop %v599
          %v601 = vadd.f32 %v598, 0.0
          %v602 = vadd.f32 %v600, 0.0
          %v603 = vsub.f32 %v567, %v593
          %v604 = vsub.f32 %v568, %v594
          %v605 = vmul.f32 %v603, 1.442695
          %v606 = vpow.pop %v605
          %v607 = vmul.f32 %v604, 1.442695
          %v608 = vpow.pop %v607
          %v609 = vadd.f32 %v601, %v606
          %v610 = vadd.f32 %v602, %v608
          %v611 = vsub.f32 %v571, %v593
          %v612 = vsub.f32 %v572, %v594
          %v613 = vmul.f32 %v611, 1.442695
          %v614 = vpow.pop %v613
          %v615 = vmul.f32 %v612, 1.442695
          %v616 = vpow.pop %v615
          %v617 = vadd.f32 %v609, %v614
          %v618 = vadd.f32 %v610, %v616
          %v619 = vsub.f32 %v575, %v593
          %v620 = vsub.f32 %v576, %v594
          %v621 = vmul.f32 %v619, 1.442695
          %v622 = vpow.pop %v621
          %v623 = vmul.f32 %v620, 1.442695
          %v624 = vpow.pop %v623
          %v625 = vadd.f32 %v617, %v622
          %v626 = vadd.f32 %v618, %v624
          %v627 = vsub.f32 %v579, %v593
          %v628 = vsub.f32 %v580, %v594
          %v629 = vmul.f32 %v627, 1.442695
          %v630 = vpow.pop %v629
          %v631 = vmul.f32 %v628, 1.442695
          %v632 = vpow.pop %v631
          %v633 = vadd.f32 %v625, %v630
          %v634 = vadd.f32 %v626, %v632
          %v635 = vsub.f32 %v583, %v593
          %v636 = vsub.f32 %v584, %v594
          %v637 = vmul.f32 %v635, 1.442695
          %v638 = vpow.pop %v637
          %v639 = vmul.f32 %v636, 1.442695
          %v640 = vpow.pop %v639
          %v641 = vadd.f32 %v633, %v638
          %v642 = vadd.f32 %v634, %v640
          %v643 = vsub.f32 %v587, %v593
          %v644 = vsub.f32 %v588, %v594
          %v645 = vmul.f32 %v643, 1.442695
          %v646 = vpow.pop %v645
          %v647 = vmul.f32 %v644, 1.442695
          %v648 = vpow.pop %v647
          %v649 = vadd.f32 %v641, %v646
          %v650 = vadd.f32 %v642, %v648
          %v651 = vsub.f32 %v591, %v593
          %v652 = vsub.f32 %v592, %v594
          %v653 = vmul.f32 %v651, 1.442695
          %v654 = vpow.pop %v653
          %v655 = vmul.f32 %v652, 1.442695
          %v656 = vpow.pop %v655
          %v657 = vadd.f32 %v649, %v654
          %v658 = vadd.f32 %v650, %v656
          %v659 = vlog2.pop %v657
          %v660 = vmul.f32 %v659, 0.6931472
          %v661 = vlog2.pop %v658
          %v662 = vmul.f32 %v661, 0.6931472
          %v663 = vadd.f32 %v660, %v593
          %v664 = vadd.f32 %v662, %v594
          %v667 = vrot.slane %v664, 7
          %vm668 = vcmask 1041409
          %v669 = vsel %vm668, %v667, %v663
          %671 = vst [vmem:[#allocation4] sm:$0x3] %v669
          %v672 = vsub.f32 %v663, %v565
          %v673 = vsub.f32 %v664, %v566
          %v674 = vld [vmem:[%s456] sm:$0x1]
          %v675 = vld [vmem:[%s456 + $0x1] sm:$0x1]
          %vm676 = vcmp.gt.s32.totalorder %v674, 0
          %vm677 = vcmp.gt.s32.totalorder %v675, 0
          %v678 = vsel %vm676, -inf, %v672
          %v679 = vsel %vm677, -inf, %v673
          %v682 = vcombine.low %v678, %v679
          %v684 = vunpack.c.l.s4 1966171168
          %v685 = vunpack.c.0.s8 %v684
          %v686 = vlaneseq
          %v687 = vshrl.u32 %v686, 7
          %v688 = vsub.s32 %v685, %v687
          %v689 = vrot.slane %v682, %v688
          %v691 = vunpack.c.l.s4 1966171168
          %v692 = vunpack.c.0.s8 %v691
          %v693 = vlaneseq
          %v694 = vshrl.u32 %v693, 7
          %v695 = vsub.s32 %v692, %v694
          %v696 = vrot.slane %v689, %v695
          %698 = vst [vmem:[#allocation3] sm:$0x3] %v696
        $region106: #{tpu_custom_call.1} parent=73 // pred_fallthru
          _
        %v699 = vld [vmem:[%s483] sm:$0x1]
        %v700 = vld [vmem:[%s483 + $0x8] sm:$0x1]
        %v701 = vld [vmem:[%s483 + $0x1] sm:$0x1]
        %v702 = vld [vmem:[%s483 + $0x9] sm:$0x1]
        %v703 = vmax.f32 %v699, %v701
        %v704 = vmax.f32 %v700, %v702
        %v705 = vld [vmem:[%s483 + $0x2] sm:$0x1]
        %v706 = vld [vmem:[%s483 + $0xa] sm:$0x1]
        %v707 = vmax.f32 %v703, %v705
        %v708 = vmax.f32 %v704, %v706
        %v709 = vld [vmem:[%s483 + $0x3] sm:$0x1]
        %v710 = vld [vmem:[%s483 + $0xb] sm:$0x1]
        %v711 = vmax.f32 %v707, %v709
        %v712 = vmax.f32 %v708, %v710
        %v713 = vld [vmem:[%s483 + $0x4] sm:$0x1]
        %v714 = vld [vmem:[%s483 + $0xc] sm:$0x1]
        %v715 = vmax.f32 %v711, %v713
        %v716 = vmax.f32 %v712, %v714
        %v717 = vld [vmem:[%s483 + $0x5] sm:$0x1]
        %v718 = vld [vmem:[%s483 + $0xd] sm:$0x1]
        %v719 = vmax.f32 %v715, %v717
        %v720 = vmax.f32 %v716, %v718
        %v721 = vld [vmem:[%s483 + $0x6] sm:$0x1]
        %v722 = vld [vmem:[%s483 + $0xe] sm:$0x1]
        %v723 = vmax.f32 %v719, %v721
        %v724 = vmax.f32 %v720, %v722
        %v725 = vld [vmem:[%s483 + $0x7] sm:$0x1]
        %v726 = vld [vmem:[%s483 + $0xf] sm:$0x1]
        %v727 = vmax.f32 %v723, %v725
        %v728 = vmax.f32 %v724, %v726
        %v729 = vsub.f32 %v699, %v727
        %v730 = vsub.f32 %v700, %v728
        %v731 = vmul.f32 %v729, 1.442695
        %v732 = vpow.pop %v731
        %v733 = vmul.f32 %v730, 1.442695
        %v734 = vpow.pop %v733
        %v735 = vadd.f32 %v732, 0.0
        %v736 = vadd.f32 %v734, 0.0
        %v737 = vsub.f32 %v701, %v727
        %v738 = vsub.f32 %v702, %v728
        %v739 = vmul.f32 %v737, 1.442695
        %v740 = vpow.pop %v739
        %v741 = vmul.f32 %v738, 1.442695
        %v742 = vpow.pop %v741
        %v743 = vadd.f32 %v735, %v740
        %v744 = vadd.f32 %v736, %v742
        %v745 = vsub.f32 %v705, %v727
        %v746 = vsub.f32 %v706, %v728
        %v747 = vmul.f32 %v745, 1.442695
        %v748 = vpow.pop %v747
        %v749 = vmul.f32 %v746, 1.442695
        %v750 = vpow.pop %v749
        %v751 = vadd.f32 %v743, %v748
        %v752 = vadd.f32 %v744, %v750
        %v753 = vsub.f32 %v709, %v727
        %v754 = vsub.f32 %v710, %v728
        %v755 = vmul.f32 %v753, 1.442695
        %v756 = vpow.pop %v755
        %v757 = vmul.f32 %v754, 1.442695
        %v758 = vpow.pop %v757
        %v759 = vadd.f32 %v751, %v756
        %v760 = vadd.f32 %v752, %v758
        %v761 = vsub.f32 %v713, %v727
        %v762 = vsub.f32 %v714, %v728
        %v763 = vmul.f32 %v761, 1.442695
        %v764 = vpow.pop %v763
        %v765 = vmul.f32 %v762, 1.442695
        %v766 = vpow.pop %v765
        %v767 = vadd.f32 %v759, %v764
        %v768 = vadd.f32 %v760, %v766
        %v769 = vsub.f32 %v717, %v727
        %v770 = vsub.f32 %v718, %v728
        %v771 = vmul.f32 %v769, 1.442695
        %v772 = vpow.pop %v771
        %v773 = vmul.f32 %v770, 1.442695
        %v774 = vpow.pop %v773
        %v775 = vadd.f32 %v767, %v772
        %v776 = vadd.f32 %v768, %v774
        %v777 = vsub.f32 %v721, %v727
        %v778 = vsub.f32 %v722, %v728
        %v779 = vmul.f32 %v777, 1.442695
        %v780 = vpow.pop %v779
        %v781 = vmul.f32 %v778, 1.442695
        %v782 = vpow.pop %v781
        %v783 = vadd.f32 %v775, %v780
        %v784 = vadd.f32 %v776, %v782
        %v785 = vsub.f32 %v725, %v727
        %v786 = vsub.f32 %v726, %v728
        %v787 = vmul.f32 %v785, 1.442695
        %v788 = vpow.pop %v787
        %v789 = vmul.f32 %v786, 1.442695
        %v790 = vpow.pop %v789
        %v791 = vadd.f32 %v783, %v788
        %v792 = vadd.f32 %v784, %v790
        %v793 = vlog2.pop %v791
        %v794 = vmul.f32 %v793, 0.6931472
        %v795 = vlog2.pop %v792
        %v796 = vmul.f32 %v795, 0.6931472
        %v797 = vadd.f32 %v794, %v727
        %v798 = vadd.f32 %v796, %v728
        %v799 = vsub.f32 %v797, %v699
        %v800 = vsub.f32 %v798, %v700
        %v801 = vld [vmem:[%s491] sm:$0x1]
        %v802 = vld [vmem:[%s491 + $0x1] sm:$0x1]
        %vm803 = vcmp.gt.s32.totalorder %v801, 0
        %vm804 = vcmp.gt.s32.totalorder %v802, 0
        %v805 = vsel %vm803, -inf, %v799
        %v806 = vsel %vm804, -inf, %v800
        %v807 = vld [vmem:[#allocation5] sm:$0x3]
        %v808 = vsel %vm803, 1, 0
        %v809 = vsel %vm804, 1, 0
        %v810 = vcvt.s32.f32 %v808
        %v811 = vcvt.s32.f32 %v809
        %v814 = vcombine.low %v810, %v811
        %v816 = vunpack.c.l.s4 1966171168
        %v817 = vunpack.c.0.s8 %v816
        %v818 = vlaneseq
        %v819 = vshrl.u32 %v818, 7
        %v820 = vsub.s32 %v817, %v819
        %v821 = vrot.slane %v814, %v820
        %v823 = vunpack.c.l.s4 1966171168
        %v824 = vunpack.c.0.s8 %v823
        %v825 = vlaneseq
        %v826 = vshrl.u32 %v825, 7
        %v827 = vsub.s32 %v824, %v826
        %v828 = vrot.slane %v821, %v827
        %vm830 = vcmask 1041408
        %v831 = vsel %vm830, %v828, 0.0
        %832 = vadd.xlane.f32.xlu0 %v831
        %v833 = vpop.xlane.xlu0 %832
        %v834 = vadd.f32 %v807, %v833
        %vm835 = vcmask 1024
        %836 = vst.msk [vmem:[#allocation5] sm:$0x3] %vm835, %v834
        %v837 = vld [vmem:[#allocation3] sm:$0x3]
        %v838 = vlaneseq
        %v839 = vshrl.u32 %v838, 7
        %v840 = vsub.s32 0, %v839
        %v841 = vrot.slane %v837, %v840
        %843 = vbcast.lane.b32.xlu0 %v841, 256
        %v844 = vpop.permute.xlu0 %843
        %s846 = sor.u32 256, 8
        %847 = vbcast.lane.b32.xlu0 %v841, %s846
        %v848 = vpop.permute.xlu0 %847
        %s850 = sor.u32 256, 16
        %851 = vbcast.lane.b32.xlu0 %v841, %s850
        %v852 = vpop.permute.xlu0 %851
        %s854 = sor.u32 256, 24
        %855 = vbcast.lane.b32.xlu0 %v841, %s854
        %v856 = vpop.permute.xlu0 %855
        %s858 = sor.u32 256, 32
        %859 = vbcast.lane.b32.xlu0 %v841, %s858
        %v860 = vpop.permute.xlu0 %859
        %s862 = sor.u32 256, 40
        %863 = vbcast.lane.b32.xlu0 %v841, %s862
        %v864 = vpop.permute.xlu0 %863
        %s866 = sor.u32 256, 48
        %867 = vbcast.lane.b32.xlu0 %v841, %s866
        %v868 = vpop.permute.xlu0 %867
        %s870 = sor.u32 256, 56
        %871 = vbcast.lane.b32.xlu0 %v841, %s870
        %v872 = vpop.permute.xlu0 %871
        %s874 = sor.u32 256, 64
        %875 = vbcast.lane.b32.xlu0 %v841, %s874
        %v876 = vpop.permute.xlu0 %875
        %s878 = sor.u32 256, 72
        %879 = vbcast.lane.b32.xlu0 %v841, %s878
        %v880 = vpop.permute.xlu0 %879
        %s882 = sor.u32 256, 80
        %883 = vbcast.lane.b32.xlu0 %v841, %s882
        %v884 = vpop.permute.xlu0 %883
        %s886 = sor.u32 256, 88
        %887 = vbcast.lane.b32.xlu0 %v841, %s886
        %v888 = vpop.permute.xlu0 %887
        %s890 = sor.u32 256, 96
        %891 = vbcast.lane.b32.xlu0 %v841, %s890
        %v892 = vpop.permute.xlu0 %891
        %s894 = sor.u32 256, 104
        %895 = vbcast.lane.b32.xlu0 %v841, %s894
        %v896 = vpop.permute.xlu0 %895
        %s898 = sor.u32 256, 112
        %899 = vbcast.lane.b32.xlu0 %v841, %s898
        %v900 = vpop.permute.xlu0 %899
        %s902 = sor.u32 256, 120
        %903 = vbcast.lane.b32.xlu0 %v841, %s902
        %v904 = vpop.permute.xlu0 %903
        %v905 = vlaneseq
        %v906 = vshrl.u32 %v905, 7
        %v907 = vsub.s32 1, %v906
        %v908 = vrot.slane %v837, %v907
        %910 = vbcast.lane.b32.xlu0 %v908, 256
        %v911 = vpop.permute.xlu0 %910
        %s913 = sor.u32 256, 8
        %914 = vbcast.lane.b32.xlu0 %v908, %s913
        %v915 = vpop.permute.xlu0 %914
        %s917 = sor.u32 256, 16
        %918 = vbcast.lane.b32.xlu0 %v908, %s917
        %v919 = vpop.permute.xlu0 %918
        %s921 = sor.u32 256, 24
        %922 = vbcast.lane.b32.xlu0 %v908, %s921
        %v923 = vpop.permute.xlu0 %922
        %s925 = sor.u32 256, 32
        %926 = vbcast.lane.b32.xlu0 %v908, %s925
        %v927 = vpop.permute.xlu0 %926
        %s929 = sor.u32 256, 40
        %930 = vbcast.lane.b32.xlu0 %v908, %s929
        %v931 = vpop.permute.xlu0 %930
        %s933 = sor.u32 256, 48
        %934 = vbcast.lane.b32.xlu0 %v908, %s933
        %v935 = vpop.permute.xlu0 %934
        %s937 = sor.u32 256, 56
        %938 = vbcast.lane.b32.xlu0 %v908, %s937
        %v939 = vpop.permute.xlu0 %938
        %s941 = sor.u32 256, 64
        %942 = vbcast.lane.b32.xlu0 %v908, %s941
        %v943 = vpop.permute.xlu0 %942
        %s945 = sor.u32 256, 72
        %946 = vbcast.lane.b32.xlu0 %v908, %s945
        %v947 = vpop.permute.xlu0 %946
        %s949 = sor.u32 256, 80
        %950 = vbcast.lane.b32.xlu0 %v908, %s949
        %v951 = vpop.permute.xlu0 %950
        %s953 = sor.u32 256, 88
        %954 = vbcast.lane.b32.xlu0 %v908, %s953
        %v955 = vpop.permute.xlu0 %954
        %s957 = sor.u32 256, 96
        %958 = vbcast.lane.b32.xlu0 %v908, %s957
        %v959 = vpop.permute.xlu0 %958
        %s961 = sor.u32 256, 104
        %962 = vbcast.lane.b32.xlu0 %v908, %s961
        %v963 = vpop.permute.xlu0 %962
        %s965 = sor.u32 256, 112
        %966 = vbcast.lane.b32.xlu0 %v908, %s965
        %v967 = vpop.permute.xlu0 %966
        %s969 = sor.u32 256, 120
        %970 = vbcast.lane.b32.xlu0 %v908, %s969
        %v971 = vpop.permute.xlu0 %970
        %p972 = scmp.lt.s32.totalorder %s37, %s36
        // Predicated region
        $region107: #{tpu_custom_call.1} parent=73 // pred_check
          %p973 = pneg %p972
        $region108: #{tpu_custom_call.1} parent=73 // pred_check_branch
          %975 = sbr.rel (%p973) target = $region110
        $region109: #{tpu_custom_call.1} parent=73 // pred_region
          %v976 = vld [vmem:[#allocation2] sm:$0x3]
          %v979 = vlaneseq
          %v980 = vshrl.u32 %v979, 7
          %v981 = vsub.s32 0, %v980
          %v982 = vrot.slane %v805, %v981
          %v983 = vlaneseq
          %v984 = vshrl.u32 %v983, 7
          %v985 = vsub.s32 0, %v984
          %v986 = vrot.slane %v806, %v985
          %vm989 = vcmp.ge.f32.partialorder %v982, %v844
          %vm990 = vcmp.ge.f32.partialorder %v982, %v848
          %vm991 = vcmp.ge.f32.partialorder %v982, %v852
          %vm992 = vcmp.ge.f32.partialorder %v982, %v856
          %vm993 = vcmp.ge.f32.partialorder %v982, %v860
          %vm994 = vcmp.ge.f32.partialorder %v982, %v864
          %vm995 = vcmp.ge.f32.partialorder %v982, %v868
          %vm996 = vcmp.ge.f32.partialorder %v982, %v872
          %vm997 = vcmp.ge.f32.partialorder %v982, %v876
          %vm998 = vcmp.ge.f32.partialorder %v982, %v880
          %vm999 = vcmp.ge.f32.partialorder %v982, %v884
          %vm1000 = vcmp.ge.f32.partialorder %v982, %v888
          %vm1001 = vcmp.ge.f32.partialorder %v982, %v892
          %vm1002 = vcmp.ge.f32.partialorder %v982, %v896
          %vm1003 = vcmp.ge.f32.partialorder %v982, %v900
          %vm1004 = vcmp.ge.f32.partialorder %v982, %v904
          %vm1005 = vcmp.ge.f32.partialorder %v986, %v911
          %vm1006 = vcmp.ge.f32.partialorder %v986, %v915
          %vm1007 = vcmp.ge.f32.partialorder %v986, %v919
          %vm1008 = vcmp.ge.f32.partialorder %v986, %v923
          %vm1009 = vcmp.ge.f32.partialorder %v986, %v927
          %vm1010 = vcmp.ge.f32.partialorder %v986, %v931
          %vm1011 = vcmp.ge.f32.partialorder %v986, %v935
          %vm1012 = vcmp.ge.f32.partialorder %v986, %v939
          %vm1013 = vcmp.ge.f32.partialorder %v986, %v943
          %vm1014 = vcmp.ge.f32.partialorder %v986, %v947
          %vm1015 = vcmp.ge.f32.partialorder %v986, %v951
          %vm1016 = vcmp.ge.f32.partialorder %v986, %v955
          %vm1017 = vcmp.ge.f32.partialorder %v986, %v959
          %vm1018 = vcmp.ge.f32.partialorder %v986, %v963
          %vm1019 = vcmp.ge.f32.partialorder %v986, %v967
          %vm1020 = vcmp.ge.f32.partialorder %v986, %v971
          %v1021 = vsel %vm989, 1, 0
          %v1022 = vsel %vm990, 1, 0
          %v1023 = vsel %vm991, 1, 0
          %v1024 = vsel %vm992, 1, 0
          %v1025 = vsel %vm993, 1, 0
          %v1026 = vsel %vm994, 1, 0
          %v1027 = vsel %vm995, 1, 0
          %v1028 = vsel %vm996, 1, 0
          %v1029 = vsel %vm997, 1, 0
          %v1030 = vsel %vm998, 1, 0
          %v1031 = vsel %vm999, 1, 0
          %v1032 = vsel %vm1000, 1, 0
          %v1033 = vsel %vm1001, 1, 0
          %v1034 = vsel %vm1002, 1, 0
          %v1035 = vsel %vm1003, 1, 0
          %v1036 = vsel %vm1004, 1, 0
          %v1037 = vsel %vm1005, 1, 0
          %v1038 = vsel %vm1006, 1, 0
          %v1039 = vsel %vm1007, 1, 0
          %v1040 = vsel %vm1008, 1, 0
          %v1041 = vsel %vm1009, 1, 0
          %v1042 = vsel %vm1010, 1, 0
          %v1043 = vsel %vm1011, 1, 0
          %v1044 = vsel %vm1012, 1, 0
          %v1045 = vsel %vm1013, 1, 0
          %v1046 = vsel %vm1014, 1, 0
          %v1047 = vsel %vm1015, 1, 0
          %v1048 = vsel %vm1016, 1, 0
          %v1049 = vsel %vm1017, 1, 0
          %v1050 = vsel %vm1018, 1, 0
          %v1051 = vsel %vm1019, 1, 0
          %v1052 = vsel %vm1020, 1, 0
          %v1053 = vcvt.s32.f32 %v1021
          %v1054 = vcvt.s32.f32 %v1022
          %v1055 = vcvt.s32.f32 %v1023
          %v1056 = vcvt.s32.f32 %v1024
          %v1057 = vcvt.s32.f32 %v1025
          %v1058 = vcvt.s32.f32 %v1026
          %v1059 = vcvt.s32.f32 %v1027
          %v1060 = vcvt.s32.f32 %v1028
          %v1061 = vcvt.s32.f32 %v1029
          %v1062 = vcvt.s32.f32 %v1030
          %v1063 = vcvt.s32.f32 %v1031
          %v1064 = vcvt.s32.f32 %v1032
          %v1065 = vcvt.s32.f32 %v1033
          %v1066 = vcvt.s32.f32 %v1034
          %v1067 = vcvt.s32.f32 %v1035
          %v1068 = vcvt.s32.f32 %v1036
          %v1069 = vcvt.s32.f32 %v1037
          %v1070 = vcvt.s32.f32 %v1038
          %v1071 = vcvt.s32.f32 %v1039
          %v1072 = vcvt.s32.f32 %v1040
          %v1073 = vcvt.s32.f32 %v1041
          %v1074 = vcvt.s32.f32 %v1042
          %v1075 = vcvt.s32.f32 %v1043
          %v1076 = vcvt.s32.f32 %v1044
          %v1077 = vcvt.s32.f32 %v1045
          %v1078 = vcvt.s32.f32 %v1046
          %v1079 = vcvt.s32.f32 %v1047
          %v1080 = vcvt.s32.f32 %v1048
          %v1081 = vcvt.s32.f32 %v1049
          %v1082 = vcvt.s32.f32 %v1050
          %v1083 = vcvt.s32.f32 %v1051
          %v1084 = vcvt.s32.f32 %v1052
          %1085 = vadd.xlane.f32.xlu0 %v1053
          %v1086 = vpop.xlane.xlu0 %1085
          %1087 = vadd.xlane.f32.xlu0 %v1054
          %v1088 = vpop.xlane.xlu0 %1087
          %1089 = vadd.xlane.f32.xlu0 %v1055
          %v1090 = vpop.xlane.xlu0 %1089
          %1091 = vadd.xlane.f32.xlu0 %v1056
          %v1092 = vpop.xlane.xlu0 %1091
          %1093 = vadd.xlane.f32.xlu0 %v1057
          %v1094 = vpop.xlane.xlu0 %1093
          %1095 = vadd.xlane.f32.xlu0 %v1058
          %v1096 = vpop.xlane.xlu0 %1095
          %1097 = vadd.xlane.f32.xlu0 %v1059
          %v1098 = vpop.xlane.xlu0 %1097
          %1099 = vadd.xlane.f32.xlu0 %v1060
          %v1100 = vpop.xlane.xlu0 %1099
          %1101 = vadd.xlane.f32.xlu0 %v1061
          %v1102 = vpop.xlane.xlu0 %1101
          %1103 = vadd.xlane.f32.xlu0 %v1062
          %v1104 = vpop.xlane.xlu0 %1103
          %1105 = vadd.xlane.f32.xlu0 %v1063
          %v1106 = vpop.xlane.xlu0 %1105
          %1107 = vadd.xlane.f32.xlu0 %v1064
          %v1108 = vpop.xlane.xlu0 %1107
          %1109 = vadd.xlane.f32.xlu0 %v1065
          %v1110 = vpop.xlane.xlu0 %1109
          %1111 = vadd.xlane.f32.xlu0 %v1066
          %v1112 = vpop.xlane.xlu0 %1111
          %1113 = vadd.xlane.f32.xlu0 %v1067
          %v1114 = vpop.xlane.xlu0 %1113
          %1115 = vadd.xlane.f32.xlu0 %v1068
          %v1116 = vpop.xlane.xlu0 %1115
          %1117 = vadd.xlane.f32.xlu0 %v1069
          %v1118 = vpop.xlane.xlu0 %1117
          %1119 = vadd.xlane.f32.xlu0 %v1070
          %v1120 = vpop.xlane.xlu0 %1119
          %1121 = vadd.xlane.f32.xlu0 %v1071
          %v1122 = vpop.xlane.xlu0 %1121
          %1123 = vadd.xlane.f32.xlu0 %v1072
          %v1124 = vpop.xlane.xlu0 %1123
          %1125 = vadd.xlane.f32.xlu0 %v1073
          %v1126 = vpop.xlane.xlu0 %1125
          %1127 = vadd.xlane.f32.xlu0 %v1074
          %v1128 = vpop.xlane.xlu0 %1127
          %1129 = vadd.xlane.f32.xlu0 %v1075
          %v1130 = vpop.xlane.xlu0 %1129
          %1131 = vadd.xlane.f32.xlu0 %v1076
          %v1132 = vpop.xlane.xlu0 %1131
          %1133 = vadd.xlane.f32.xlu0 %v1077
          %v1134 = vpop.xlane.xlu0 %1133
          %1135 = vadd.xlane.f32.xlu0 %v1078
          %v1136 = vpop.xlane.xlu0 %1135
          %1137 = vadd.xlane.f32.xlu0 %v1079
          %v1138 = vpop.xlane.xlu0 %1137
          %1139 = vadd.xlane.f32.xlu0 %v1080
          %v1140 = vpop.xlane.xlu0 %1139
          %1141 = vadd.xlane.f32.xlu0 %v1081
          %v1142 = vpop.xlane.xlu0 %1141
          %1143 = vadd.xlane.f32.xlu0 %v1082
          %v1144 = vpop.xlane.xlu0 %1143
          %1145 = vadd.xlane.f32.xlu0 %v1083
          %v1146 = vpop.xlane.xlu0 %1145
          %1147 = vadd.xlane.f32.xlu0 %v1084
          %v1148 = vpop.xlane.xlu0 %1147
          %v1181 = vlaneseq
          %v1182 = vand.u32 %v1181, 127
          %v1183 = vlaneseq
          %v1184 = vshrl.u32 %v1183, 7
          %v1185 = vsub.s32 %v1182, %v1184
          %v1186 = vrot.slane %v1086, %v1185
          %v1187 = vadd.s32 %v1182, 4294967288
          %v1188 = vlaneseq
          %v1189 = vshrl.u32 %v1188, 7
          %v1190 = vsub.s32 %v1187, %v1189
          %v1191 = vrot.slane %v1088, %v1190
          %vm1192 = vcmask 130112
          %v1193 = vsel %vm1192, %v1191, %v1186
          %v1194 = vadd.s32 %v1182, 4294967280
          %v1195 = vlaneseq
          %v1196 = vshrl.u32 %v1195, 7
          %v1197 = vsub.s32 %v1194, %v1196
          %v1198 = vrot.slane %v1090, %v1197
          %vm1199 = vcmask 195712
          %v1200 = vsel %vm1199, %v1198, %v1193
          %v1201 = vadd.s32 %v1182, 4294967272
          %v1202 = vlaneseq
          %v1203 = vshrl.u32 %v1202, 7
          %v1204 = vsub.s32 %v1201, %v1203
          %v1205 = vrot.slane %v1092, %v1204
          %vm1206 = vcmask 261312
          %v1207 = vsel %vm1206, %v1205, %v1200
          %v1208 = vadd.s32 %v1182, 4294967264
          %v1209 = vlaneseq
          %v1210 = vshrl.u32 %v1209, 7
          %v1211 = vsub.s32 %v1208, %v1210
          %v1212 = vrot.slane %v1094, %v1211
          %vm1213 = vcmask 326912
          %v1214 = vsel %vm1213, %v1212, %v1207
          %v1215 = vadd.s32 %v1182, 4294967256
          %v1216 = vlaneseq
          %v1217 = vshrl.u32 %v1216, 7
          %v1218 = vsub.s32 %v1215, %v1217
          %v1219 = vrot.slane %v1096, %v1218
          %vm1220 = vcmask 392512
          %v1221 = vsel %vm1220, %v1219, %v1214
          %v1222 = vadd.s32 %v1182, 4294967248
          %v1223 = vlaneseq
          %v1224 = vshrl.u32 %v1223, 7
          %v1225 = vsub.s32 %v1222, %v1224
          %v1226 = vrot.slane %v1098, %v1225
          %vm1227 = vcmask 458112
          %v1228 = vsel %vm1227, %v1226, %v1221
          %v1229 = vadd.s32 %v1182, 4294967240
          %v1230 = vlaneseq
          %v1231 = vshrl.u32 %v1230, 7
          %v1232 = vsub.s32 %v1229, %v1231
          %v1233 = vrot.slane %v1100, %v1232
          %vm1234 = vcmask 523712
          %v1235 = vsel %vm1234, %v1233, %v1228
          %v1236 = vadd.s32 %v1182, 4294967232
          %v1237 = vlaneseq
          %v1238 = vshrl.u32 %v1237, 7
          %v1239 = vsub.s32 %v1236, %v1238
          %v1240 = vrot.slane %v1102, %v1239
          %vm1241 = vcmask 589312
          %v1242 = vsel %vm1241, %v1240, %v1235
          %v1243 = vadd.s32 %v1182, 4294967224
          %v1244 = vlaneseq
          %v1245 = vshrl.u32 %v1244, 7
          %v1246 = vsub.s32 %v1243, %v1245
          %v1247 = vrot.slane %v1104, %v1246
          %vm1248 = vcmask 654912
          %v1249 = vsel %vm1248, %v1247, %v1242
          %v1250 = vadd.s32 %v1182, 4294967216
          %v1251 = vlaneseq
          %v1252 = vshrl.u32 %v1251, 7
          %v1253 = vsub.s32 %v1250, %v1252
          %v1254 = vrot.slane %v1106, %v1253
          %vm1255 = vcmask 720512
          %v1256 = vsel %vm1255, %v1254, %v1249
          %v1257 = vadd.s32 %v1182, 4294967208
          %v1258 = vlaneseq
          %v1259 = vshrl.u32 %v1258, 7
          %v1260 = vsub.s32 %v1257, %v1259
          %v1261 = vrot.slane %v1108, %v1260
          %vm1262 = vcmask 786112
          %v1263 = vsel %vm1262, %v1261, %v1256
          %v1264 = vadd.s32 %v1182, 4294967200
          %v1265 = vlaneseq
          %v1266 = vshrl.u32 %v1265, 7
          %v1267 = vsub.s32 %v1264, %v1266
          %v1268 = vrot.slane %v1110, %v1267
          %vm1269 = vcmask 851712
          %v1270 = vsel %vm1269, %v1268, %v1263
          %v1271 = vadd.s32 %v1182, 4294967192
          %v1272 = vlaneseq
          %v1273 = vshrl.u32 %v1272, 7
          %v1274 = vsub.s32 %v1271, %v1273
          %v1275 = vrot.slane %v1112, %v1274
          %vm1276 = vcmask 917312
          %v1277 = vsel %vm1276, %v1275, %v1270
          %v1278 = vadd.s32 %v1182, 4294967184
          %v1279 = vlaneseq
          %v1280 = vshrl.u32 %v1279, 7
          %v1281 = vsub.s32 %v1278, %v1280
          %v1282 = vrot.slane %v1114, %v1281
          %vm1283 = vcmask 982912
          %v1284 = vsel %vm1283, %v1282, %v1277
          %v1285 = vadd.s32 %v1182, 4294967176
          %v1286 = vlaneseq
          %v1287 = vshrl.u32 %v1286, 7
          %v1288 = vsub.s32 %v1285, %v1287
          %v1289 = vrot.slane %v1116, %v1288
          %vm1290 = vcmask 1048512
          %v1291 = vsel %vm1290, %v1289, %v1284
          %v1292 = vlaneseq
          %v1293 = vshrl.u32 %v1292, 7
          %v1294 = vsub.s32 %v1182, %v1293
          %v1295 = vrot.slane %v1118, %v1294
          %v1296 = vlaneseq
          %v1297 = vshrl.u32 %v1296, 7
          %v1298 = vsub.s32 %v1187, %v1297
          %v1299 = vrot.slane %v1120, %v1298
          %v1300 = vsel %vm1192, %v1299, %v1295
          %v1301 = vlaneseq
          %v1302 = vshrl.u32 %v1301, 7
          %v1303 = vsub.s32 %v1194, %v1302
          %v1304 = vrot.slane %v1122, %v1303
          %v1305 = vsel %vm1199, %v1304, %v1300
          %v1306 = vlaneseq
          %v1307 = vshrl.u32 %v1306, 7
          %v1308 = vsub.s32 %v1201, %v1307
          %v1309 = vrot.slane %v1124, %v1308
          %v1310 = vsel %vm1206, %v1309, %v1305
          %v1311 = vlaneseq
          %v1312 = vshrl.u32 %v1311, 7
          %v1313 = vsub.s32 %v1208, %v1312
          %v1314 = vrot.slane %v1126, %v1313
          %v1315 = vsel %vm1213, %v1314, %v1310
          %v1316 = vlaneseq
          %v1317 = vshrl.u32 %v1316, 7
          %v1318 = vsub.s32 %v1215, %v1317
          %v1319 = vrot.slane %v1128, %v1318
          %v1320 = vsel %vm1220, %v1319, %v1315
          %v1321 = vlaneseq
          %v1322 = vshrl.u32 %v1321, 7
          %v1323 = vsub.s32 %v1222, %v1322
          %v1324 = vrot.slane %v1130, %v1323
          %v1325 = vsel %vm1227, %v1324, %v1320
          %v1326 = vlaneseq
          %v1327 = vshrl.u32 %v1326, 7
          %v1328 = vsub.s32 %v1229, %v1327
          %v1329 = vrot.slane %v1132, %v1328
          %v1330 = vsel %vm1234, %v1329, %v1325
          %v1331 = vlaneseq
          %v1332 = vshrl.u32 %v1331, 7
          %v1333 = vsub.s32 %v1236, %v1332
          %v1334 = vrot.slane %v1134, %v1333
          %v1335 = vsel %vm1241, %v1334, %v1330
          %v1336 = vlaneseq
          %v1337 = vshrl.u32 %v1336, 7
          %v1338 = vsub.s32 %v1243, %v1337
          %v1339 = vrot.slane %v1136, %v1338
          %v1340 = vsel %vm1248, %v1339, %v1335
          %v1341 = vlaneseq
          %v1342 = vshrl.u32 %v1341, 7
          %v1343 = vsub.s32 %v1250, %v1342
          %v1344 = vrot.slane %v1138, %v1343
          %v1345 = vsel %vm1255, %v1344, %v1340
          %v1346 = vlaneseq
          %v1347 = vshrl.u32 %v1346, 7
          %v1348 = vsub.s32 %v1257, %v1347
          %v1349 = vrot.slane %v1140, %v1348
          %v1350 = vsel %vm1262, %v1349, %v1345
          %v1351 = vlaneseq
          %v1352 = vshrl.u32 %v1351, 7
          %v1353 = vsub.s32 %v1264, %v1352
          %v1354 = vrot.slane %v1142, %v1353
          %v1355 = vsel %vm1269, %v1354, %v1350
          %v1356 = vlaneseq
          %v1357 = vshrl.u32 %v1356, 7
          %v1358 = vsub.s32 %v1271, %v1357
          %v1359 = vrot.slane %v1144, %v1358
          %v1360 = vsel %vm1276, %v1359, %v1355
          %v1361 = vlaneseq
          %v1362 = vshrl.u32 %v1361, 7
          %v1363 = vsub.s32 %v1278, %v1362
          %v1364 = vrot.slane %v1146, %v1363
          %v1365 = vsel %vm1283, %v1364, %v1360
          %v1366 = vlaneseq
          %v1367 = vshrl.u32 %v1366, 7
          %v1368 = vsub.s32 %v1285, %v1367
          %v1369 = vrot.slane %v1148, %v1368
          %v1370 = vsel %vm1290, %v1369, %v1365
          %vm1371 = vcmask 1041409
          %v1372 = vsel %vm1371, %v1370, %v1291
          %v1374 = vadd.f32 %v976, %v1372
          %1375 = vst [vmem:[#allocation2] sm:$0x3] %v1374
        $region110: #{tpu_custom_call.1} parent=73 // pred_fallthru
          _
        %p1376 = scmp.gt.s32.totalorder %s37, %s36
        // Predicated region
        $region111: #{tpu_custom_call.1} parent=73 // pred_check
          %p1377 = pneg %p1376
        $region112: #{tpu_custom_call.1} parent=73 // pred_check_branch
          %1379 = sbr.rel (%p1377) target = $region114
        $region113: #{tpu_custom_call.1} parent=73 // pred_region
          %v1380 = vld [vmem:[#allocation2] sm:$0x3]
          %v1383 = vlaneseq
          %v1384 = vshrl.u32 %v1383, 7
          %v1385 = vsub.s32 0, %v1384
          %v1386 = vrot.slane %v805, %v1385
          %v1387 = vlaneseq
          %v1388 = vshrl.u32 %v1387, 7
          %v1389 = vsub.s32 0, %v1388
          %v1390 = vrot.slane %v806, %v1389
          %vm1393 = vcmp.gt.f32.partialorder %v1386, %v844
          %vm1394 = vcmp.gt.f32.partialorder %v1386, %v848
          %vm1395 = vcmp.gt.f32.partialorder %v1386, %v852
          %vm1396 = vcmp.gt.f32.partialorder %v1386, %v856
          %vm1397 = vcmp.gt.f32.partialorder %v1386, %v860
          %vm1398 = vcmp.gt.f32.partialorder %v1386, %v864
          %vm1399 = vcmp.gt.f32.partialorder %v1386, %v868
          %vm1400 = vcmp.gt.f32.partialorder %v1386, %v872
          %vm1401 = vcmp.gt.f32.partialorder %v1386, %v876
          %vm1402 = vcmp.gt.f32.partialorder %v1386, %v880
          %vm1403 = vcmp.gt.f32.partialorder %v1386, %v884
          %vm1404 = vcmp.gt.f32.partialorder %v1386, %v888
          %vm1405 = vcmp.gt.f32.partialorder %v1386, %v892
          %vm1406 = vcmp.gt.f32.partialorder %v1386, %v896
          %vm1407 = vcmp.gt.f32.partialorder %v1386, %v900
          %vm1408 = vcmp.gt.f32.partialorder %v1386, %v904
          %vm1409 = vcmp.gt.f32.partialorder %v1390, %v911
          %vm1410 = vcmp.gt.f32.partialorder %v1390, %v915
          %vm1411 = vcmp.gt.f32.partialorder %v1390, %v919
          %vm1412 = vcmp.gt.f32.partialorder %v1390, %v923
          %vm1413 = vcmp.gt.f32.partialorder %v1390, %v927
          %vm1414 = vcmp.gt.f32.partialorder %v1390, %v931
          %vm1415 = vcmp.gt.f32.partialorder %v1390, %v935
          %vm1416 = vcmp.gt.f32.partialorder %v1390, %v939
          %vm1417 = vcmp.gt.f32.partialorder %v1390, %v943
          %vm1418 = vcmp.gt.f32.partialorder %v1390, %v947
          %vm1419 = vcmp.gt.f32.partialorder %v1390, %v951
          %vm1420 = vcmp.gt.f32.partialorder %v1390, %v955
          %vm1421 = vcmp.gt.f32.partialorder %v1390, %v959
          %vm1422 = vcmp.gt.f32.partialorder %v1390, %v963
          %vm1423 = vcmp.gt.f32.partialorder %v1390, %v967
          %vm1424 = vcmp.gt.f32.partialorder %v1390, %v971
          %v1425 = vsel %vm1393, 1, 0
          %v1426 = vsel %vm1394, 1, 0
          %v1427 = vsel %vm1395, 1, 0
          %v1428 = vsel %vm1396, 1, 0
          %v1429 = vsel %vm1397, 1, 0
          %v1430 = vsel %vm1398, 1, 0
          %v1431 = vsel %vm1399, 1, 0
          %v1432 = vsel %vm1400, 1, 0
          %v1433 = vsel %vm1401, 1, 0
          %v1434 = vsel %vm1402, 1, 0
          %v1435 = vsel %vm1403, 1, 0
          %v1436 = vsel %vm1404, 1, 0
          %v1437 = vsel %vm1405, 1, 0
          %v1438 = vsel %vm1406, 1, 0
          %v1439 = vsel %vm1407, 1, 0
          %v1440 = vsel %vm1408, 1, 0
          %v1441 = vsel %vm1409, 1, 0
          %v1442 = vsel %vm1410, 1, 0
          %v1443 = vsel %vm1411, 1, 0
          %v1444 = vsel %vm1412, 1, 0
          %v1445 = vsel %vm1413, 1, 0
          %v1446 = vsel %vm1414, 1, 0
          %v1447 = vsel %vm1415, 1, 0
          %v1448 = vsel %vm1416, 1, 0
          %v1449 = vsel %vm1417, 1, 0
          %v1450 = vsel %vm1418, 1, 0
          %v1451 = vsel %vm1419, 1, 0
          %v1452 = vsel %vm1420, 1, 0
          %v1453 = vsel %vm1421, 1, 0
          %v1454 = vsel %vm1422, 1, 0
          %v1455 = vsel %vm1423, 1, 0
          %v1456 = vsel %vm1424, 1, 0
          %v1457 = vcvt.s32.f32 %v1425
          %v1458 = vcvt.s32.f32 %v1426
          %v1459 = vcvt.s32.f32 %v1427
          %v1460 = vcvt.s32.f32 %v1428
          %v1461 = vcvt.s32.f32 %v1429
          %v1462 = vcvt.s32.f32 %v1430
          %v1463 = vcvt.s32.f32 %v1431
          %v1464 = vcvt.s32.f32 %v1432
          %v1465 = vcvt.s32.f32 %v1433
          %v1466 = vcvt.s32.f32 %v1434
          %v1467 = vcvt.s32.f32 %v1435
          %v1468 = vcvt.s32.f32 %v1436
          %v1469 = vcvt.s32.f32 %v1437
          %v1470 = vcvt.s32.f32 %v1438
          %v1471 = vcvt.s32.f32 %v1439
          %v1472 = vcvt.s32.f32 %v1440
          %v1473 = vcvt.s32.f32 %v1441
          %v1474 = vcvt.s32.f32 %v1442
          %v1475 = vcvt.s32.f32 %v1443
          %v1476 = vcvt.s32.f32 %v1444
          %v1477 = vcvt.s32.f32 %v1445
          %v1478 = vcvt.s32.f32 %v1446
          %v1479 = vcvt.s32.f32 %v1447
          %v1480 = vcvt.s32.f32 %v1448
          %v1481 = vcvt.s32.f32 %v1449
          %v1482 = vcvt.s32.f32 %v1450
          %v1483 = vcvt.s32.f32 %v1451
          %v1484 = vcvt.s32.f32 %v1452
          %v1485 = vcvt.s32.f32 %v1453
          %v1486 = vcvt.s32.f32 %v1454
          %v1487 = vcvt.s32.f32 %v1455
          %v1488 = vcvt.s32.f32 %v1456
          %1489 = vadd.xlane.f32.xlu0 %v1457
          %v1490 = vpop.xlane.xlu0 %1489
          %1491 = vadd.xlane.f32.xlu0 %v1458
          %v1492 = vpop.xlane.xlu0 %1491
          %1493 = vadd.xlane.f32.xlu0 %v1459
          %v1494 = vpop.xlane.xlu0 %1493
          %1495 = vadd.xlane.f32.xlu0 %v1460
          %v1496 = vpop.xlane.xlu0 %1495
          %1497 = vadd.xlane.f32.xlu0 %v1461
          %v1498 = vpop.xlane.xlu0 %1497
          %1499 = vadd.xlane.f32.xlu0 %v1462
          %v1500 = vpop.xlane.xlu0 %1499
          %1501 = vadd.xlane.f32.xlu0 %v1463
          %v1502 = vpop.xlane.xlu0 %1501
          %1503 = vadd.xlane.f32.xlu0 %v1464
          %v1504 = vpop.xlane.xlu0 %1503
          %1505 = vadd.xlane.f32.xlu0 %v1465
          %v1506 = vpop.xlane.xlu0 %1505
          %1507 = vadd.xlane.f32.xlu0 %v1466
          %v1508 = vpop.xlane.xlu0 %1507
          %1509 = vadd.xlane.f32.xlu0 %v1467
          %v1510 = vpop.xlane.xlu0 %1509
          %1511 = vadd.xlane.f32.xlu0 %v1468
          %v1512 = vpop.xlane.xlu0 %1511
          %1513 = vadd.xlane.f32.xlu0 %v1469
          %v1514 = vpop.xlane.xlu0 %1513
          %1515 = vadd.xlane.f32.xlu0 %v1470
          %v1516 = vpop.xlane.xlu0 %1515
          %1517 = vadd.xlane.f32.xlu0 %v1471
          %v1518 = vpop.xlane.xlu0 %1517
          %1519 = vadd.xlane.f32.xlu0 %v1472
          %v1520 = vpop.xlane.xlu0 %1519
          %1521 = vadd.xlane.f32.xlu0 %v1473
          %v1522 = vpop.xlane.xlu0 %1521
          %1523 = vadd.xlane.f32.xlu0 %v1474
          %v1524 = vpop.xlane.xlu0 %1523
          %1525 = vadd.xlane.f32.xlu0 %v1475
          %v1526 = vpop.xlane.xlu0 %1525
          %1527 = vadd.xlane.f32.xlu0 %v1476
          %v1528 = vpop.xlane.xlu0 %1527
          %1529 = vadd.xlane.f32.xlu0 %v1477
          %v1530 = vpop.xlane.xlu0 %1529
          %1531 = vadd.xlane.f32.xlu0 %v1478
          %v1532 = vpop.xlane.xlu0 %1531
          %1533 = vadd.xlane.f32.xlu0 %v1479
          %v1534 = vpop.xlane.xlu0 %1533
          %1535 = vadd.xlane.f32.xlu0 %v1480
          %v1536 = vpop.xlane.xlu0 %1535
          %1537 = vadd.xlane.f32.xlu0 %v1481
          %v1538 = vpop.xlane.xlu0 %1537
          %1539 = vadd.xlane.f32.xlu0 %v1482
          %v1540 = vpop.xlane.xlu0 %1539
          %1541 = vadd.xlane.f32.xlu0 %v1483
          %v1542 = vpop.xlane.xlu0 %1541
          %1543 = vadd.xlane.f32.xlu0 %v1484
          %v1544 = vpop.xlane.xlu0 %1543
          %1545 = vadd.xlane.f32.xlu0 %v1485
          %v1546 = vpop.xlane.xlu0 %1545
          %1547 = vadd.xlane.f32.xlu0 %v1486
          %v1548 = vpop.xlane.xlu0 %1547
          %1549 = vadd.xlane.f32.xlu0 %v1487
          %v1550 = vpop.xlane.xlu0 %1549
          %1551 = vadd.xlane.f32.xlu0 %v1488
          %v1552 = vpop.xlane.xlu0 %1551
          %v1585 = vlaneseq
          %v1586 = vand.u32 %v1585, 127
          %v1587 = vlaneseq
          %v1588 = vshrl.u32 %v1587, 7
          %v1589 = vsub.s32 %v1586, %v1588
          %v1590 = vrot.slane %v1490, %v1589
          %v1591 = vadd.s32 %v1586, 4294967288
          %v1592 = vlaneseq
          %v1593 = vshrl.u32 %v1592, 7
          %v1594 = vsub.s32 %v1591, %v1593
          %v1595 = vrot.slane %v1492, %v1594
          %vm1596 = vcmask 130112
          %v1597 = vsel %vm1596, %v1595, %v1590
          %v1598 = vadd.s32 %v1586, 4294967280
          %v1599 = vlaneseq
          %v1600 = vshrl.u32 %v1599, 7
          %v1601 = vsub.s32 %v1598, %v1600
          %v1602 = vrot.slane %v1494, %v1601
          %vm1603 = vcmask 195712
          %v1604 = vsel %vm1603, %v1602, %v1597
          %v1605 = vadd.s32 %v1586, 4294967272
          %v1606 = vlaneseq
          %v1607 = vshrl.u32 %v1606, 7
          %v1608 = vsub.s32 %v1605, %v1607
          %v1609 = vrot.slane %v1496, %v1608
          %vm1610 = vcmask 261312
          %v1611 = vsel %vm1610, %v1609, %v1604
          %v1612 = vadd.s32 %v1586, 4294967264
          %v1613 = vlaneseq
          %v1614 = vshrl.u32 %v1613, 7
          %v1615 = vsub.s32 %v1612, %v1614
          %v1616 = vrot.slane %v1498, %v1615
          %vm1617 = vcmask 326912
          %v1618 = vsel %vm1617, %v1616, %v1611
          %v1619 = vadd.s32 %v1586, 4294967256
          %v1620 = vlaneseq
          %v1621 = vshrl.u32 %v1620, 7
          %v1622 = vsub.s32 %v1619, %v1621
          %v1623 = vrot.slane %v1500, %v1622
          %vm1624 = vcmask 392512
          %v1625 = vsel %vm1624, %v1623, %v1618
          %v1626 = vadd.s32 %v1586, 4294967248
          %v1627 = vlaneseq
          %v1628 = vshrl.u32 %v1627, 7
          %v1629 = vsub.s32 %v1626, %v1628
          %v1630 = vrot.slane %v1502, %v1629
          %vm1631 = vcmask 458112
          %v1632 = vsel %vm1631, %v1630, %v1625
          %v1633 = vadd.s32 %v1586, 4294967240
          %v1634 = vlaneseq
          %v1635 = vshrl.u32 %v1634, 7
          %v1636 = vsub.s32 %v1633, %v1635
          %v1637 = vrot.slane %v1504, %v1636
          %vm1638 = vcmask 523712
          %v1639 = vsel %vm1638, %v1637, %v1632
          %v1640 = vadd.s32 %v1586, 4294967232
          %v1641 = vlaneseq
          %v1642 = vshrl.u32 %v1641, 7
          %v1643 = vsub.s32 %v1640, %v1642
          %v1644 = vrot.slane %v1506, %v1643
          %vm1645 = vcmask 589312
          %v1646 = vsel %vm1645, %v1644, %v1639
          %v1647 = vadd.s32 %v1586, 4294967224
          %v1648 = vlaneseq
          %v1649 = vshrl.u32 %v1648, 7
          %v1650 = vsub.s32 %v1647, %v1649
          %v1651 = vrot.slane %v1508, %v1650
          %vm1652 = vcmask 654912
          %v1653 = vsel %vm1652, %v1651, %v1646
          %v1654 = vadd.s32 %v1586, 4294967216
          %v1655 = vlaneseq
          %v1656 = vshrl.u32 %v1655, 7
          %v1657 = vsub.s32 %v1654, %v1656
          %v1658 = vrot.slane %v1510, %v1657
          %vm1659 = vcmask 720512
          %v1660 = vsel %vm1659, %v1658, %v1653
          %v1661 = vadd.s32 %v1586, 4294967208
          %v1662 = vlaneseq
          %v1663 = vshrl.u32 %v1662, 7
          %v1664 = vsub.s32 %v1661, %v1663
          %v1665 = vrot.slane %v1512, %v1664
          %vm1666 = vcmask 786112
          %v1667 = vsel %vm1666, %v1665, %v1660
          %v1668 = vadd.s32 %v1586, 4294967200
          %v1669 = vlaneseq
          %v1670 = vshrl.u32 %v1669, 7
          %v1671 = vsub.s32 %v1668, %v1670
          %v1672 = vrot.slane %v1514, %v1671
          %vm1673 = vcmask 851712
          %v1674 = vsel %vm1673, %v1672, %v1667
          %v1675 = vadd.s32 %v1586, 4294967192
          %v1676 = vlaneseq
          %v1677 = vshrl.u32 %v1676, 7
          %v1678 = vsub.s32 %v1675, %v1677
          %v1679 = vrot.slane %v1516, %v1678
          %vm1680 = vcmask 917312
          %v1681 = vsel %vm1680, %v1679, %v1674
          %v1682 = vadd.s32 %v1586, 4294967184
          %v1683 = vlaneseq
          %v1684 = vshrl.u32 %v1683, 7
          %v1685 = vsub.s32 %v1682, %v1684
          %v1686 = vrot.slane %v1518, %v1685
          %vm1687 = vcmask 982912
          %v1688 = vsel %vm1687, %v1686, %v1681
          %v1689 = vadd.s32 %v1586, 4294967176
          %v1690 = vlaneseq
          %v1691 = vshrl.u32 %v1690, 7
          %v1692 = vsub.s32 %v1689, %v1691
          %v1693 = vrot.slane %v1520, %v1692
          %vm1694 = vcmask 1048512
          %v1695 = vsel %vm1694, %v1693, %v1688
          %v1696 = vlaneseq
          %v1697 = vshrl.u32 %v1696, 7
          %v1698 = vsub.s32 %v1586, %v1697
          %v1699 = vrot.slane %v1522, %v1698
          %v1700 = vlaneseq
          %v1701 = vshrl.u32 %v1700, 7
          %v1702 = vsub.s32 %v1591, %v1701
          %v1703 = vrot.slane %v1524, %v1702
          %v1704 = vsel %vm1596, %v1703, %v1699
          %v1705 = vlaneseq
          %v1706 = vshrl.u32 %v1705, 7
          %v1707 = vsub.s32 %v1598, %v1706
          %v1708 = vrot.slane %v1526, %v1707
          %v1709 = vsel %vm1603, %v1708, %v1704
          %v1710 = vlaneseq
          %v1711 = vshrl.u32 %v1710, 7
          %v1712 = vsub.s32 %v1605, %v1711
          %v1713 = vrot.slane %v1528, %v1712
          %v1714 = vsel %vm1610, %v1713, %v1709
          %v1715 = vlaneseq
          %v1716 = vshrl.u32 %v1715, 7
          %v1717 = vsub.s32 %v1612, %v1716
          %v1718 = vrot.slane %v1530, %v1717
          %v1719 = vsel %vm1617, %v1718, %v1714
          %v1720 = vlaneseq
          %v1721 = vshrl.u32 %v1720, 7
          %v1722 = vsub.s32 %v1619, %v1721
          %v1723 = vrot.slane %v1532, %v1722
          %v1724 = vsel %vm1624, %v1723, %v1719
          %v1725 = vlaneseq
          %v1726 = vshrl.u32 %v1725, 7
          %v1727 = vsub.s32 %v1626, %v1726
          %v1728 = vrot.slane %v1534, %v1727
          %v1729 = vsel %vm1631, %v1728, %v1724
          %v1730 = vlaneseq
          %v1731 = vshrl.u32 %v1730, 7
          %v1732 = vsub.s32 %v1633, %v1731
          %v1733 = vrot.slane %v1536, %v1732
          %v1734 = vsel %vm1638, %v1733, %v1729
          %v1735 = vlaneseq
          %v1736 = vshrl.u32 %v1735, 7
          %v1737 = vsub.s32 %v1640, %v1736
          %v1738 = vrot.slane %v1538, %v1737
          %v1739 = vsel %vm1645, %v1738, %v1734
          %v1740 = vlaneseq
          %v1741 = vshrl.u32 %v1740, 7
          %v1742 = vsub.s32 %v1647, %v1741
          %v1743 = vrot.slane %v1540, %v1742
          %v1744 = vsel %vm1652, %v1743, %v1739
          %v1745 = vlaneseq
          %v1746 = vshrl.u32 %v1745, 7
          %v1747 = vsub.s32 %v1654, %v1746
          %v1748 = vrot.slane %v1542, %v1747
          %v1749 = vsel %vm1659, %v1748, %v1744
          %v1750 = vlaneseq
          %v1751 = vshrl.u32 %v1750, 7
          %v1752 = vsub.s32 %v1661, %v1751
          %v1753 = vrot.slane %v1544, %v1752
          %v1754 = vsel %vm1666, %v1753, %v1749
          %v1755 = vlaneseq
          %v1756 = vshrl.u32 %v1755, 7
          %v1757 = vsub.s32 %v1668, %v1756
          %v1758 = vrot.slane %v1546, %v1757
          %v1759 = vsel %vm1673, %v1758, %v1754
          %v1760 = vlaneseq
          %v1761 = vshrl.u32 %v1760, 7
          %v1762 = vsub.s32 %v1675, %v1761
          %v1763 = vrot.slane %v1548, %v1762
          %v1764 = vsel %vm1680, %v1763, %v1759
          %v1765 = vlaneseq
          %v1766 = vshrl.u32 %v1765, 7
          %v1767 = vsub.s32 %v1682, %v1766
          %v1768 = vrot.slane %v1550, %v1767
          %v1769 = vsel %vm1687, %v1768, %v1764
          %v1770 = vlaneseq
          %v1771 = vshrl.u32 %v1770, 7
          %v1772 = vsub.s32 %v1689, %v1771
          %v1773 = vrot.slane %v1552, %v1772
          %v1774 = vsel %vm1694, %v1773, %v1769
          %vm1775 = vcmask 1041409
          %v1776 = vsel %vm1775, %v1774, %v1695
          %v1778 = vadd.f32 %v1380, %v1776
          %1779 = vst [vmem:[#allocation2] sm:$0x3] %v1778
        $region114: #{tpu_custom_call.1} parent=73 // pred_fallthru
          _
        %p1780 = scmp.eq.s32.totalorder %s37, %s36
        // Predicated region
        $region115: #{tpu_custom_call.1} parent=73 // pred_check
          %p1781 = pneg %p1780
        $region116: #{tpu_custom_call.1} parent=73 // pred_check_branch
          %1783 = sbr.rel (%p1781) target = $region118
        $region117: #{tpu_custom_call.1} parent=73 // pred_region
          %v1784 = vlaneseq
          %v1785 = vshrl.u32 %v1784, 7
          %v1786 = vadd.s32 %v1785, 8
          %v1787 = vadd.s32 %v1785, 16
          %v1788 = vadd.s32 %v1785, 24
          %v1789 = vadd.s32 %v1785, 32
          %v1790 = vadd.s32 %v1785, 40
          %v1791 = vadd.s32 %v1785, 48
          %v1792 = vadd.s32 %v1785, 56
          %v1793 = vadd.s32 %v1785, 64
          %v1794 = vadd.s32 %v1785, 72
          %v1795 = vadd.s32 %v1785, 80
          %v1796 = vadd.s32 %v1785, 88
          %v1797 = vadd.s32 %v1785, 96
          %v1798 = vadd.s32 %v1785, 104
          %v1799 = vadd.s32 %v1785, 112
          %v1800 = vadd.s32 %v1785, 120
          %v1801 = vlaneseq
          %v1802 = vand.u32 %v1801, 127
          %v1805 = vlaneseq
          %v1806 = vshrl.u32 %v1805, 7
          %v1807 = vsub.s32 0, %v1806
          %v1808 = vrot.slane %v805, %v1807
          %v1809 = vlaneseq
          %v1810 = vshrl.u32 %v1809, 7
          %v1811 = vsub.s32 0, %v1810
          %v1812 = vrot.slane %v806, %v1811
          %vm1815 = vcmp.gt.f32.partialorder %v1808, %v844
          %vm1816 = vcmp.gt.f32.partialorder %v1808, %v848
          %vm1817 = vcmp.gt.f32.partialorder %v1808, %v852
          %vm1818 = vcmp.gt.f32.partialorder %v1808, %v856
          %vm1819 = vcmp.gt.f32.partialorder %v1808, %v860
          %vm1820 = vcmp.gt.f32.partialorder %v1808, %v864
          %vm1821 = vcmp.gt.f32.partialorder %v1808, %v868
          %vm1822 = vcmp.gt.f32.partialorder %v1808, %v872
          %vm1823 = vcmp.gt.f32.partialorder %v1808, %v876
          %vm1824 = vcmp.gt.f32.partialorder %v1808, %v880
          %vm1825 = vcmp.gt.f32.partialorder %v1808, %v884
          %vm1826 = vcmp.gt.f32.partialorder %v1808, %v888
          %vm1827 = vcmp.gt.f32.partialorder %v1808, %v892
          %vm1828 = vcmp.gt.f32.partialorder %v1808, %v896
          %vm1829 = vcmp.gt.f32.partialorder %v1808, %v900
          %vm1830 = vcmp.gt.f32.partialorder %v1808, %v904
          %vm1831 = vcmp.gt.f32.partialorder %v1812, %v911
          %vm1832 = vcmp.gt.f32.partialorder %v1812, %v915
          %vm1833 = vcmp.gt.f32.partialorder %v1812, %v919
          %vm1834 = vcmp.gt.f32.partialorder %v1812, %v923
          %vm1835 = vcmp.gt.f32.partialorder %v1812, %v927
          %vm1836 = vcmp.gt.f32.partialorder %v1812, %v931
          %vm1837 = vcmp.gt.f32.partialorder %v1812, %v935
          %vm1838 = vcmp.gt.f32.partialorder %v1812, %v939
          %vm1839 = vcmp.gt.f32.partialorder %v1812, %v943
          %vm1840 = vcmp.gt.f32.partialorder %v1812, %v947
          %vm1841 = vcmp.gt.f32.partialorder %v1812, %v951
          %vm1842 = vcmp.gt.f32.partialorder %v1812, %v955
          %vm1843 = vcmp.gt.f32.partialorder %v1812, %v959
          %vm1844 = vcmp.gt.f32.partialorder %v1812, %v963
          %vm1845 = vcmp.gt.f32.partialorder %v1812, %v967
          %vm1846 = vcmp.gt.f32.partialorder %v1812, %v971
          %vm1847 = vcmp.eq.f32.partialorder %v1808, %v844
          %vm1848 = vcmp.eq.f32.partialorder %v1808, %v848
          %vm1849 = vcmp.eq.f32.partialorder %v1808, %v852
          %vm1850 = vcmp.eq.f32.partialorder %v1808, %v856
          %vm1851 = vcmp.eq.f32.partialorder %v1808, %v860
          %vm1852 = vcmp.eq.f32.partialorder %v1808, %v864
          %vm1853 = vcmp.eq.f32.partialorder %v1808, %v868
          %vm1854 = vcmp.eq.f32.partialorder %v1808, %v872
          %vm1855 = vcmp.eq.f32.partialorder %v1808, %v876
          %vm1856 = vcmp.eq.f32.partialorder %v1808, %v880
          %vm1857 = vcmp.eq.f32.partialorder %v1808, %v884
          %vm1858 = vcmp.eq.f32.partialorder %v1808, %v888
          %vm1859 = vcmp.eq.f32.partialorder %v1808, %v892
          %vm1860 = vcmp.eq.f32.partialorder %v1808, %v896
          %vm1861 = vcmp.eq.f32.partialorder %v1808, %v900
          %vm1862 = vcmp.eq.f32.partialorder %v1808, %v904
          %vm1863 = vcmp.eq.f32.partialorder %v1812, %v911
          %vm1864 = vcmp.eq.f32.partialorder %v1812, %v915
          %vm1865 = vcmp.eq.f32.partialorder %v1812, %v919
          %vm1866 = vcmp.eq.f32.partialorder %v1812, %v923
          %vm1867 = vcmp.eq.f32.partialorder %v1812, %v927
          %vm1868 = vcmp.eq.f32.partialorder %v1812, %v931
          %vm1869 = vcmp.eq.f32.partialorder %v1812, %v935
          %vm1870 = vcmp.eq.f32.partialorder %v1812, %v939
          %vm1871 = vcmp.eq.f32.partialorder %v1812, %v943
          %vm1872 = vcmp.eq.f32.partialorder %v1812, %v947
          %vm1873 = vcmp.eq.f32.partialorder %v1812, %v951
          %vm1874 = vcmp.eq.f32.partialorder %v1812, %v955
          %vm1875 = vcmp.eq.f32.partialorder %v1812, %v959
          %vm1876 = vcmp.eq.f32.partialorder %v1812, %v963
          %vm1877 = vcmp.eq.f32.partialorder %v1812, %v967
          %vm1878 = vcmp.eq.f32.partialorder %v1812, %v971
          %vm1879 = vcmp.lt.s32.totalorder %v1802, %v1785
          %vm1880 = vcmp.lt.s32.totalorder %v1802, %v1786
          %vm1881 = vcmp.lt.s32.totalorder %v1802, %v1787
          %vm1882 = vcmp.lt.s32.totalorder %v1802, %v1788
          %vm1883 = vcmp.lt.s32.totalorder %v1802, %v1789
          %vm1884 = vcmp.lt.s32.totalorder %v1802, %v1790
          %vm1885 = vcmp.lt.s32.totalorder %v1802, %v1791
          %vm1886 = vcmp.lt.s32.totalorder %v1802, %v1792
          %vm1887 = vcmp.lt.s32.totalorder %v1802, %v1793
          %vm1888 = vcmp.lt.s32.totalorder %v1802, %v1794
          %vm1889 = vcmp.lt.s32.totalorder %v1802, %v1795
          %vm1890 = vcmp.lt.s32.totalorder %v1802, %v1796
          %vm1891 = vcmp.lt.s32.totalorder %v1802, %v1797
          %vm1892 = vcmp.lt.s32.totalorder %v1802, %v1798
          %vm1893 = vcmp.lt.s32.totalorder %v1802, %v1799
          %vm1894 = vcmp.lt.s32.totalorder %v1802, %v1800
          %vm1895 = vmand %vm1847, %vm1879
          %vm1896 = vmand %vm1848, %vm1880
          %vm1897 = vmand %vm1849, %vm1881
          %vm1898 = vmand %vm1850, %vm1882
          %vm1899 = vmand %vm1851, %vm1883
          %vm1900 = vmand %vm1852, %vm1884
          %vm1901 = vmand %vm1853, %vm1885
          %vm1902 = vmand %vm1854, %vm1886
          %vm1903 = vmand %vm1855, %vm1887
          %vm1904 = vmand %vm1856, %vm1888
          %vm1905 = vmand %vm1857, %vm1889
          %vm1906 = vmand %vm1858, %vm1890
          %vm1907 = vmand %vm1859, %vm1891
          %vm1908 = vmand %vm1860, %vm1892
          %vm1909 = vmand %vm1861, %vm1893
          %vm1910 = vmand %vm1862, %vm1894
          %vm1911 = vmand %vm1863, %vm1879
          %vm1912 = vmand %vm1864, %vm1880
          %vm1913 = vmand %vm1865, %vm1881
          %vm1914 = vmand %vm1866, %vm1882
          %vm1915 = vmand %vm1867, %vm1883
          %vm1916 = vmand %vm1868, %vm1884
          %vm1917 = vmand %vm1869, %vm1885
          %vm1918 = vmand %vm1870, %vm1886
          %vm1919 = vmand %vm1871, %vm1887
          %vm1920 = vmand %vm1872, %vm1888
          %vm1921 = vmand %vm1873, %vm1889
          %vm1922 = vmand %vm1874, %vm1890
          %vm1923 = vmand %vm1875, %vm1891
          %vm1924 = vmand %vm1876, %vm1892
          %vm1925 = vmand %vm1877, %vm1893
          %vm1926 = vmand %vm1878, %vm1894
          %vm1927 = vmor %vm1815, %vm1895
          %vm1928 = vmor %vm1816, %vm1896
          %vm1929 = vmor %vm1817, %vm1897
          %vm1930 = vmor %vm1818, %vm1898
          %vm1931 = vmor %vm1819, %vm1899
          %vm1932 = vmor %vm1820, %vm1900
          %vm1933 = vmor %vm1821, %vm1901
          %vm1934 = vmor %vm1822, %vm1902
          %vm1935 = vmor %vm1823, %vm1903
          %vm1936 = vmor %vm1824, %vm1904
          %vm1937 = vmor %vm1825, %vm1905
          %vm1938 = vmor %vm1826, %vm1906
          %vm1939 = vmor %vm1827, %vm1907
          %vm1940 = vmor %vm1828, %vm1908
          %vm1941 = vmor %vm1829, %vm1909
          %vm1942 = vmor %vm1830, %vm1910
          %vm1943 = vmor %vm1831, %vm1911
          %vm1944 = vmor %vm1832, %vm1912
          %vm1945 = vmor %vm1833, %vm1913
          %vm1946 = vmor %vm1834, %vm1914
          %vm1947 = vmor %vm1835, %vm1915
          %vm1948 = vmor %vm1836, %vm1916
          %vm1949 = vmor %vm1837, %vm1917
          %vm1950 = vmor %vm1838, %vm1918
          %vm1951 = vmor %vm1839, %vm1919
          %vm1952 = vmor %vm1840, %vm1920
          %vm1953 = vmor %vm1841, %vm1921
          %vm1954 = vmor %vm1842, %vm1922
          %vm1955 = vmor %vm1843, %vm1923
          %vm1956 = vmor %vm1844, %vm1924
          %vm1957 = vmor %vm1845, %vm1925
          %vm1958 = vmor %vm1846, %vm1926
          %v1959 = vld [vmem:[#allocation2] sm:$0x3]
          %v1960 = vsel %vm1927, 1, 0
          %v1961 = vsel %vm1928, 1, 0
          %v1962 = vsel %vm1929, 1, 0
          %v1963 = vsel %vm1930, 1, 0
          %v1964 = vsel %vm1931, 1, 0
          %v1965 = vsel %vm1932, 1, 0
          %v1966 = vsel %vm1933, 1, 0
          %v1967 = vsel %vm1934, 1, 0
          %v1968 = vsel %vm1935, 1, 0
          %v1969 = vsel %vm1936, 1, 0
          %v1970 = vsel %vm1937, 1, 0
          %v1971 = vsel %vm1938, 1, 0
          %v1972 = vsel %vm1939, 1, 0
          %v1973 = vsel %vm1940, 1, 0
          %v1974 = vsel %vm1941, 1, 0
          %v1975 = vsel %vm1942, 1, 0
          %v1976 = vsel %vm1943, 1, 0
          %v1977 = vsel %vm1944, 1, 0
          %v1978 = vsel %vm1945, 1, 0
          %v1979 = vsel %vm1946, 1, 0
          %v1980 = vsel %vm1947, 1, 0
          %v1981 = vsel %vm1948, 1, 0
          %v1982 = vsel %vm1949, 1, 0
          %v1983 = vsel %vm1950, 1, 0
          %v1984 = vsel %vm1951, 1, 0
          %v1985 = vsel %vm1952, 1, 0
          %v1986 = vsel %vm1953, 1, 0
          %v1987 = vsel %vm1954, 1, 0
          %v1988 = vsel %vm1955, 1, 0
          %v1989 = vsel %vm1956, 1, 0
          %v1990 = vsel %vm1957, 1, 0
          %v1991 = vsel %vm1958, 1, 0
          %v1992 = vcvt.s32.f32 %v1960
          %v1993 = vcvt.s32.f32 %v1961
          %v1994 = vcvt.s32.f32 %v1962
          %v1995 = vcvt.s32.f32 %v1963
          %v1996 = vcvt.s32.f32 %v1964
          %v1997 = vcvt.s32.f32 %v1965
          %v1998 = vcvt.s32.f32 %v1966
          %v1999 = vcvt.s32.f32 %v1967
          %v2000 = vcvt.s32.f32 %v1968
          %v2001 = vcvt.s32.f32 %v1969
          %v2002 = vcvt.s32.f32 %v1970
          %v2003 = vcvt.s32.f32 %v1971
          %v2004 = vcvt.s32.f32 %v1972
          %v2005 = vcvt.s32.f32 %v1973
          %v2006 = vcvt.s32.f32 %v1974
          %v2007 = vcvt.s32.f32 %v1975
          %v2008 = vcvt.s32.f32 %v1976
          %v2009 = vcvt.s32.f32 %v1977
          %v2010 = vcvt.s32.f32 %v1978
          %v2011 = vcvt.s32.f32 %v1979
          %v2012 = vcvt.s32.f32 %v1980
          %v2013 = vcvt.s32.f32 %v1981
          %v2014 = vcvt.s32.f32 %v1982
          %v2015 = vcvt.s32.f32 %v1983
          %v2016 = vcvt.s32.f32 %v1984
          %v2017 = vcvt.s32.f32 %v1985
          %v2018 = vcvt.s32.f32 %v1986
          %v2019 = vcvt.s32.f32 %v1987
          %v2020 = vcvt.s32.f32 %v1988
          %v2021 = vcvt.s32.f32 %v1989
          %v2022 = vcvt.s32.f32 %v1990
          %v2023 = vcvt.s32.f32 %v1991
          %2024 = vadd.xlane.f32.xlu0 %v1992
          %v2025 = vpop.xlane.xlu0 %2024
          %2026 = vadd.xlane.f32.xlu0 %v1993
          %v2027 = vpop.xlane.xlu0 %2026
          %2028 = vadd.xlane.f32.xlu0 %v1994
          %v2029 = vpop.xlane.xlu0 %2028
          %2030 = vadd.xlane.f32.xlu0 %v1995
          %v2031 = vpop.xlane.xlu0 %2030
          %2032 = vadd.xlane.f32.xlu0 %v1996
          %v2033 = vpop.xlane.xlu0 %2032
          %2034 = vadd.xlane.f32.xlu0 %v1997
          %v2035 = vpop.xlane.xlu0 %2034
          %2036 = vadd.xlane.f32.xlu0 %v1998
          %v2037 = vpop.xlane.xlu0 %2036
          %2038 = vadd.xlane.f32.xlu0 %v1999
          %v2039 = vpop.xlane.xlu0 %2038
          %2040 = vadd.xlane.f32.xlu0 %v2000
          %v2041 = vpop.xlane.xlu0 %2040
          %2042 = vadd.xlane.f32.xlu0 %v2001
          %v2043 = vpop.xlane.xlu0 %2042
          %2044 = vadd.xlane.f32.xlu0 %v2002
          %v2045 = vpop.xlane.xlu0 %2044
          %2046 = vadd.xlane.f32.xlu0 %v2003
          %v2047 = vpop.xlane.xlu0 %2046
          %2048 = vadd.xlane.f32.xlu0 %v2004
          %v2049 = vpop.xlane.xlu0 %2048
          %2050 = vadd.xlane.f32.xlu0 %v2005
          %v2051 = vpop.xlane.xlu0 %2050
          %2052 = vadd.xlane.f32.xlu0 %v2006
          %v2053 = vpop.xlane.xlu0 %2052
          %2054 = vadd.xlane.f32.xlu0 %v2007
          %v2055 = vpop.xlane.xlu0 %2054
          %2056 = vadd.xlane.f32.xlu0 %v2008
          %v2057 = vpop.xlane.xlu0 %2056
          %2058 = vadd.xlane.f32.xlu0 %v2009
          %v2059 = vpop.xlane.xlu0 %2058
          %2060 = vadd.xlane.f32.xlu0 %v2010
          %v2061 = vpop.xlane.xlu0 %2060
          %2062 = vadd.xlane.f32.xlu0 %v2011
          %v2063 = vpop.xlane.xlu0 %2062
          %2064 = vadd.xlane.f32.xlu0 %v2012
          %v2065 = vpop.xlane.xlu0 %2064
          %2066 = vadd.xlane.f32.xlu0 %v2013
          %v2067 = vpop.xlane.xlu0 %2066
          %2068 = vadd.xlane.f32.xlu0 %v2014
          %v2069 = vpop.xlane.xlu0 %2068
          %2070 = vadd.xlane.f32.xlu0 %v2015
          %v2071 = vpop.xlane.xlu0 %2070
          %2072 = vadd.xlane.f32.xlu0 %v2016
          %v2073 = vpop.xlane.xlu0 %2072
          %2074 = vadd.xlane.f32.xlu0 %v2017
          %v2075 = vpop.xlane.xlu0 %2074
          %2076 = vadd.xlane.f32.xlu0 %v2018
          %v2077 = vpop.xlane.xlu0 %2076
          %2078 = vadd.xlane.f32.xlu0 %v2019
          %v2079 = vpop.xlane.xlu0 %2078
          %2080 = vadd.xlane.f32.xlu0 %v2020
          %v2081 = vpop.xlane.xlu0 %2080
          %2082 = vadd.xlane.f32.xlu0 %v2021
          %v2083 = vpop.xlane.xlu0 %2082
          %2084 = vadd.xlane.f32.xlu0 %v2022
          %v2085 = vpop.xlane.xlu0 %2084
          %2086 = vadd.xlane.f32.xlu0 %v2023
          %v2087 = vpop.xlane.xlu0 %2086
          %v2120 = vlaneseq
          %v2121 = vshrl.u32 %v2120, 7
          %v2122 = vsub.s32 %v1802, %v2121
          %v2123 = vrot.slane %v2025, %v2122
          %v2124 = vadd.s32 %v1802, 4294967288
          %v2125 = vlaneseq
          %v2126 = vshrl.u32 %v2125, 7
          %v2127 = vsub.s32 %v2124, %v2126
          %v2128 = vrot.slane %v2027, %v2127
          %vm2129 = vcmask 130112
          %v2130 = vsel %vm2129, %v2128, %v2123
          %v2131 = vadd.s32 %v1802, 4294967280
          %v2132 = vlaneseq
          %v2133 = vshrl.u32 %v2132, 7
          %v2134 = vsub.s32 %v2131, %v2133
          %v2135 = vrot.slane %v2029, %v2134
          %vm2136 = vcmask 195712
          %v2137 = vsel %vm2136, %v2135, %v2130
          %v2138 = vadd.s32 %v1802, 4294967272
          %v2139 = vlaneseq
          %v2140 = vshrl.u32 %v2139, 7
          %v2141 = vsub.s32 %v2138, %v2140
          %v2142 = vrot.slane %v2031, %v2141
          %vm2143 = vcmask 261312
          %v2144 = vsel %vm2143, %v2142, %v2137
          %v2145 = vadd.s32 %v1802, 4294967264
          %v2146 = vlaneseq
          %v2147 = vshrl.u32 %v2146, 7
          %v2148 = vsub.s32 %v2145, %v2147
          %v2149 = vrot.slane %v2033, %v2148
          %vm2150 = vcmask 326912
          %v2151 = vsel %vm2150, %v2149, %v2144
          %v2152 = vadd.s32 %v1802, 4294967256
          %v2153 = vlaneseq
          %v2154 = vshrl.u32 %v2153, 7
          %v2155 = vsub.s32 %v2152, %v2154
          %v2156 = vrot.slane %v2035, %v2155
          %vm2157 = vcmask 392512
          %v2158 = vsel %vm2157, %v2156, %v2151
          %v2159 = vadd.s32 %v1802, 4294967248
          %v2160 = vlaneseq
          %v2161 = vshrl.u32 %v2160, 7
          %v2162 = vsub.s32 %v2159, %v2161
          %v2163 = vrot.slane %v2037, %v2162
          %vm2164 = vcmask 458112
          %v2165 = vsel %vm2164, %v2163, %v2158
          %v2166 = vadd.s32 %v1802, 4294967240
          %v2167 = vlaneseq
          %v2168 = vshrl.u32 %v2167, 7
          %v2169 = vsub.s32 %v2166, %v2168
          %v2170 = vrot.slane %v2039, %v2169
          %vm2171 = vcmask 523712
          %v2172 = vsel %vm2171, %v2170, %v2165
          %v2173 = vadd.s32 %v1802, 4294967232
          %v2174 = vlaneseq
          %v2175 = vshrl.u32 %v2174, 7
          %v2176 = vsub.s32 %v2173, %v2175
          %v2177 = vrot.slane %v2041, %v2176
          %vm2178 = vcmask 589312
          %v2179 = vsel %vm2178, %v2177, %v2172
          %v2180 = vadd.s32 %v1802, 4294967224
          %v2181 = vlaneseq
          %v2182 = vshrl.u32 %v2181, 7
          %v2183 = vsub.s32 %v2180, %v2182
          %v2184 = vrot.slane %v2043, %v2183
          %vm2185 = vcmask 654912
          %v2186 = vsel %vm2185, %v2184, %v2179
          %v2187 = vadd.s32 %v1802, 4294967216
          %v2188 = vlaneseq
          %v2189 = vshrl.u32 %v2188, 7
          %v2190 = vsub.s32 %v2187, %v2189
          %v2191 = vrot.slane %v2045, %v2190
          %vm2192 = vcmask 720512
          %v2193 = vsel %vm2192, %v2191, %v2186
          %v2194 = vadd.s32 %v1802, 4294967208
          %v2195 = vlaneseq
          %v2196 = vshrl.u32 %v2195, 7
          %v2197 = vsub.s32 %v2194, %v2196
          %v2198 = vrot.slane %v2047, %v2197
          %vm2199 = vcmask 786112
          %v2200 = vsel %vm2199, %v2198, %v2193
          %v2201 = vadd.s32 %v1802, 4294967200
          %v2202 = vlaneseq
          %v2203 = vshrl.u32 %v2202, 7
          %v2204 = vsub.s32 %v2201, %v2203
          %v2205 = vrot.slane %v2049, %v2204
          %vm2206 = vcmask 851712
          %v2207 = vsel %vm2206, %v2205, %v2200
          %v2208 = vadd.s32 %v1802, 4294967192
          %v2209 = vlaneseq
          %v2210 = vshrl.u32 %v2209, 7
          %v2211 = vsub.s32 %v2208, %v2210
          %v2212 = vrot.slane %v2051, %v2211
          %vm2213 = vcmask 917312
          %v2214 = vsel %vm2213, %v2212, %v2207
          %v2215 = vadd.s32 %v1802, 4294967184
          %v2216 = vlaneseq
          %v2217 = vshrl.u32 %v2216, 7
          %v2218 = vsub.s32 %v2215, %v2217
          %v2219 = vrot.slane %v2053, %v2218
          %vm2220 = vcmask 982912
          %v2221 = vsel %vm2220, %v2219, %v2214
          %v2222 = vadd.s32 %v1802, 4294967176
          %v2223 = vlaneseq
          %v2224 = vshrl.u32 %v2223, 7
          %v2225 = vsub.s32 %v2222, %v2224
          %v2226 = vrot.slane %v2055, %v2225
          %vm2227 = vcmask 1048512
          %v2228 = vsel %vm2227, %v2226, %v2221
          %v2229 = vlaneseq
          %v2230 = vshrl.u32 %v2229, 7
          %v2231 = vsub.s32 %v1802, %v2230
          %v2232 = vrot.slane %v2057, %v2231
          %v2233 = vlaneseq
          %v2234 = vshrl.u32 %v2233, 7
          %v2235 = vsub.s32 %v2124, %v2234
          %v2236 = vrot.slane %v2059, %v2235
          %v2237 = vsel %vm2129, %v2236, %v2232
          %v2238 = vlaneseq
          %v2239 = vshrl.u32 %v2238, 7
          %v2240 = vsub.s32 %v2131, %v2239
          %v2241 = vrot.slane %v2061, %v2240
          %v2242 = vsel %vm2136, %v2241, %v2237
          %v2243 = vlaneseq
          %v2244 = vshrl.u32 %v2243, 7
          %v2245 = vsub.s32 %v2138, %v2244
          %v2246 = vrot.slane %v2063, %v2245
          %v2247 = vsel %vm2143, %v2246, %v2242
          %v2248 = vlaneseq
          %v2249 = vshrl.u32 %v2248, 7
          %v2250 = vsub.s32 %v2145, %v2249
          %v2251 = vrot.slane %v2065, %v2250
          %v2252 = vsel %vm2150, %v2251, %v2247
          %v2253 = vlaneseq
          %v2254 = vshrl.u32 %v2253, 7
          %v2255 = vsub.s32 %v2152, %v2254
          %v2256 = vrot.slane %v2067, %v2255
          %v2257 = vsel %vm2157, %v2256, %v2252
          %v2258 = vlaneseq
          %v2259 = vshrl.u32 %v2258, 7
          %v2260 = vsub.s32 %v2159, %v2259
          %v2261 = vrot.slane %v2069, %v2260
          %v2262 = vsel %vm2164, %v2261, %v2257
          %v2263 = vlaneseq
          %v2264 = vshrl.u32 %v2263, 7
          %v2265 = vsub.s32 %v2166, %v2264
          %v2266 = vrot.slane %v2071, %v2265
          %v2267 = vsel %vm2171, %v2266, %v2262
          %v2268 = vlaneseq
          %v2269 = vshrl.u32 %v2268, 7
          %v2270 = vsub.s32 %v2173, %v2269
          %v2271 = vrot.slane %v2073, %v2270
          %v2272 = vsel %vm2178, %v2271, %v2267
          %v2273 = vlaneseq
          %v2274 = vshrl.u32 %v2273, 7
          %v2275 = vsub.s32 %v2180, %v2274
          %v2276 = vrot.slane %v2075, %v2275
          %v2277 = vsel %vm2185, %v2276, %v2272
          %v2278 = vlaneseq
          %v2279 = vshrl.u32 %v2278, 7
          %v2280 = vsub.s32 %v2187, %v2279
          %v2281 = vrot.slane %v2077, %v2280
          %v2282 = vsel %vm2192, %v2281, %v2277
          %v2283 = vlaneseq
          %v2284 = vshrl.u32 %v2283, 7
          %v2285 = vsub.s32 %v2194, %v2284
          %v2286 = vrot.slane %v2079, %v2285
          %v2287 = vsel %vm2199, %v2286, %v2282
          %v2288 = vlaneseq
          %v2289 = vshrl.u32 %v2288, 7
          %v2290 = vsub.s32 %v2201, %v2289
          %v2291 = vrot.slane %v2081, %v2290
          %v2292 = vsel %vm2206, %v2291, %v2287
          %v2293 = vlaneseq
          %v2294 = vshrl.u32 %v2293, 7
          %v2295 = vsub.s32 %v2208, %v2294
          %v2296 = vrot.slane %v2083, %v2295
          %v2297 = vsel %vm2213, %v2296, %v2292
          %v2298 = vlaneseq
          %v2299 = vshrl.u32 %v2298, 7
          %v2300 = vsub.s32 %v2215, %v2299
          %v2301 = vrot.slane %v2085, %v2300
          %v2302 = vsel %vm2220, %v2301, %v2297
          %v2303 = vlaneseq
          %v2304 = vshrl.u32 %v2303, 7
          %v2305 = vsub.s32 %v2222, %v2304
          %v2306 = vrot.slane %v2087, %v2305
          %v2307 = vsel %vm2227, %v2306, %v2302
          %vm2308 = vcmask 1041409
          %v2309 = vsel %vm2308, %v2307, %v2228
          %v2311 = vadd.f32 %v1959, %v2309
          %2312 = vst [vmem:[#allocation2] sm:$0x3] %v2311
        $region118: #{tpu_custom_call.1} parent=73 // pred_fallthru
          _
        %p2313 = scmp.eq.s32.totalorder %s37, 1
        // Predicated region
        $region119: #{tpu_custom_call.1} parent=73 // pred_check
          %p2314 = pneg %p2313
        $region120: #{tpu_custom_call.1} parent=73 // pred_check_branch
          %2316 = sbr.rel (%p2314) target = $region122
        $region121: #{tpu_custom_call.1} parent=73 // pred_region
          %v2317 = vld [vmem:[%s456] sm:$0x1]
          %v2318 = vld [vmem:[%s456 + $0x1] sm:$0x1]
          %vm2319 = vcmp.gt.s32.totalorder %v2317, 0
          %vm2320 = vcmp.gt.s32.totalorder %v2318, 0
          %v2321 = vld [vmem:[#allocation5] sm:$0x3]
          %v2322 = vmul.f32 %v2321, 3.0
          %v2323 = vld [vmem:[#allocation2] sm:$0x3]
          %2325 = vset.pattern.permute.xlu0 0
          %2326 = vperm.xlu0 %2325, %v2322
          %v2327 = vpop.permute.xlu0 %2326
          %vm2329 = vcmp.lt.f32.partialorder %v2323, %v2327
          %v2330 = vsel %vm2329, 1, 0
          %v2332 = vunpack.c.l.s4 1966171168
          %v2333 = vunpack.c.0.s8 %v2332
          %v2334 = vlaneseq
          %v2335 = vshrl.u32 %v2334, 7
          %v2336 = vsub.s32 %v2333, %v2335
          %v2337 = vrot.slane %v2330, %v2336
          %v2338 = vcombine.high %v2337, %v2337
          %v2340 = vunpack.c.l.s4 1966171168
          %v2341 = vunpack.c.0.s8 %v2340
          %v2342 = vlaneseq
          %v2343 = vshrl.u32 %v2342, 7
          %v2344 = vsub.s32 %v2341, %v2343
          %v2345 = vrot.slane %v2337, %v2344
          %v2347 = vunpack.c.l.s4 1966171168
          %v2348 = vunpack.c.0.s8 %v2347
          %v2349 = vlaneseq
          %v2350 = vshrl.u32 %v2349, 7
          %v2351 = vsub.s32 %v2348, %v2350
          %v2352 = vrot.slane %v2338, %v2351
          %vm2353 = vcmp.ne.s32.totalorder %v2345, 0
          %vm2354 = vcmp.ne.s32.totalorder %v2352, 0
          %vm2355 = vmor %vm2319, %vm2353
          %vm2356 = vmor %vm2320, %vm2354
          %vm2357 = vcmp.eq.s32.totalorder %v2317, 0
          %vm2358 = vcmp.eq.s32.totalorder %v2318, 0
          %v2359 = vld [vmem:[%s447] sm:$0x1]
          %v2360 = vld [vmem:[%s447 + $0x8] sm:$0x1]
          %v2361 = vsel %vm2357, %v2359, 0.0
          %v2362 = vsel %vm2358, %v2360, 0.0
          %v2363 = vadd.f32 %v2361, 0.0
          %v2364 = vadd.f32 %v2362, 0.0
          %vm2365 = vcmp.eq.s32.totalorder %v2317, 1
          %vm2366 = vcmp.eq.s32.totalorder %v2318, 1
          %v2367 = vld [vmem:[%s447 + $0x1] sm:$0x1]
          %v2368 = vld [vmem:[%s447 + $0x9] sm:$0x1]
          %v2369 = vsel %vm2365, %v2367, 0.0
          %v2370 = vsel %vm2366, %v2368, 0.0
          %v2371 = vadd.f32 %v2363, %v2369
          %v2372 = vadd.f32 %v2364, %v2370
          %vm2373 = vcmp.eq.s32.totalorder %v2317, 2
          %vm2374 = vcmp.eq.s32.totalorder %v2318, 2
          %v2375 = vld [vmem:[%s447 + $0x2] sm:$0x1]
          %v2376 = vld [vmem:[%s447 + $0xa] sm:$0x1]
          %v2377 = vsel %vm2373, %v2375, 0.0
          %v2378 = vsel %vm2374, %v2376, 0.0
          %v2379 = vadd.f32 %v2371, %v2377
          %v2380 = vadd.f32 %v2372, %v2378
          %vm2381 = vcmp.eq.s32.totalorder %v2317, 3
          %vm2382 = vcmp.eq.s32.totalorder %v2318, 3
          %v2383 = vld [vmem:[%s447 + $0x3] sm:$0x1]
          %v2384 = vld [vmem:[%s447 + $0xb] sm:$0x1]
          %v2385 = vsel %vm2381, %v2383, 0.0
          %v2386 = vsel %vm2382, %v2384, 0.0
          %v2387 = vadd.f32 %v2379, %v2385
          %v2388 = vadd.f32 %v2380, %v2386
          %vm2389 = vcmp.eq.s32.totalorder %v2317, 4
          %vm2390 = vcmp.eq.s32.totalorder %v2318, 4
          %v2391 = vld [vmem:[%s447 + $0x4] sm:$0x1]
          %v2392 = vld [vmem:[%s447 + $0xc] sm:$0x1]
          %v2393 = vsel %vm2389, %v2391, 0.0
          %v2394 = vsel %vm2390, %v2392, 0.0
          %v2395 = vadd.f32 %v2387, %v2393
          %v2396 = vadd.f32 %v2388, %v2394
          %vm2397 = vcmp.eq.s32.totalorder %v2317, 5
          %vm2398 = vcmp.eq.s32.totalorder %v2318, 5
          %v2399 = vld [vmem:[%s447 + $0x5] sm:$0x1]
          %v2400 = vld [vmem:[%s447 + $0xd] sm:$0x1]
          %v2401 = vsel %vm2397, %v2399, 0.0
          %v2402 = vsel %vm2398, %v2400, 0.0
          %v2403 = vadd.f32 %v2395, %v2401
          %v2404 = vadd.f32 %v2396, %v2402
          %vm2405 = vcmp.eq.s32.totalorder %v2317, 6
          %vm2406 = vcmp.eq.s32.totalorder %v2318, 6
          %v2407 = vld [vmem:[%s447 + $0x6] sm:$0x1]
          %v2408 = vld [vmem:[%s447 + $0xe] sm:$0x1]
          %v2409 = vsel %vm2405, %v2407, 0.0
          %v2410 = vsel %vm2406, %v2408, 0.0
          %v2411 = vadd.f32 %v2403, %v2409
          %v2412 = vadd.f32 %v2404, %v2410
          %vm2413 = vcmp.eq.s32.totalorder %v2317, 7
          %vm2414 = vcmp.eq.s32.totalorder %v2318, 7
          %v2415 = vld [vmem:[%s447 + $0x7] sm:$0x1]
          %v2416 = vld [vmem:[%s447 + $0xf] sm:$0x1]
          %v2417 = vsel %vm2413, %v2415, 0.0
          %v2418 = vsel %vm2414, %v2416, 0.0
          %v2419 = vadd.f32 %v2411, %v2417
          %v2420 = vadd.f32 %v2412, %v2418
          %v2421 = vld [vmem:[#allocation4] sm:$0x3]
          %v2424 = vcombine.low %v2419, %v2420
          %v2426 = vunpack.c.l.s4 1966171168
          %v2427 = vunpack.c.0.s8 %v2426
          %v2428 = vlaneseq
          %v2429 = vshrl.u32 %v2428, 7
          %v2430 = vsub.s32 %v2427, %v2429
          %v2431 = vrot.slane %v2424, %v2430
          %v2433 = vunpack.c.l.s4 1966171168
          %v2434 = vunpack.c.0.s8 %v2433
          %v2435 = vlaneseq
          %v2436 = vshrl.u32 %v2435, 7
          %v2437 = vsub.s32 %v2434, %v2436
          %v2438 = vrot.slane %v2431, %v2437
          %v2440 = vsub.f32 %v2421, %v2438
          %v2441 = vld [vmem:[#allocation7] sm:$0x1]
          %v2444 = vunpack.c.l.s4 1966171168
          %v2445 = vunpack.c.0.s8 %v2444
          %v2446 = vlaneseq
          %v2447 = vshrl.u32 %v2446, 7
          %v2448 = vsub.s32 %v2445, %v2447
          %v2449 = vrot.slane %v2440, %v2448
          %v2450 = vcombine.high %v2449, %v2449
          %v2452 = vunpack.c.l.s4 1966171168
          %v2453 = vunpack.c.0.s8 %v2452
          %v2454 = vlaneseq
          %v2455 = vshrl.u32 %v2454, 7
          %v2456 = vsub.s32 %v2453, %v2455
          %v2457 = vrot.slane %v2449, %v2456
          %v2459 = vunpack.c.l.s4 1966171168
          %v2460 = vunpack.c.0.s8 %v2459
          %v2461 = vlaneseq
          %v2462 = vshrl.u32 %v2461, 7
          %v2463 = vsub.s32 %v2460, %v2462
          %v2464 = vrot.slane %v2450, %v2463
          %v2467 = vsel %vm2355, %v2457, 0.0
          %v2468 = vsel %vm2356, %v2464, 0.0
          %v2471 = vcombine.low %v2467, %v2468
          %v2473 = vunpack.c.l.s4 1966171168
          %v2474 = vunpack.c.0.s8 %v2473
          %v2475 = vlaneseq
          %v2476 = vshrl.u32 %v2475, 7
          %v2477 = vsub.s32 %v2474, %v2476
          %v2478 = vrot.slane %v2471, %v2477
          %v2480 = vunpack.c.l.s4 1966171168
          %v2481 = vunpack.c.0.s8 %v2480
          %v2482 = vlaneseq
          %v2483 = vshrl.u32 %v2482, 7
          %v2484 = vsub.s32 %v2481, %v2483
          %v2485 = vrot.slane %v2478, %v2484
          %v2487 = vsel %vm830, %v2485, 0.0
          %2488 = vadd.xlane.f32.xlu0 %v2487
          %v2489 = vpop.xlane.xlu0 %2488
          %v2490 = vrot.slane %v2489, 4
          %v2491 = vadd.f32 %v2489, %v2490
          %v2492 = vrot.slane %v2491, 2
          %v2493 = vadd.f32 %v2491, %v2492
          %v2494 = vrot.slane %v2493, 1
          %v2495 = vadd.f32 %v2493, %v2494
          %s2496 = vtos %v2495
          %v2497 = vstv %s2496
          %v2498 = vadd.f32 %v2441, %v2497
          %vm2499 = vcmask 0
          %2500 = vst.msk [vmem:[#allocation7] sm:$0x1] %vm2499, %v2498
          %v2501 = vld [vmem:[%s465] sm:$0x1]
          %v2502 = vld [vmem:[%s465 + $0x4] sm:$0x1]
          %v2503 = vld [vmem:[%s474] sm:$0x1]
          %v2504 = vld [vmem:[%s474 + $0x4] sm:$0x1]
          %v2505 = vsub.f32 %v2501, %v2503
          %v2506 = vsub.f32 %v2502, %v2504
          %v2507 = vand.u32 2147483647, %v2505
          %v2508 = vand.u32 2147483647, %v2506
          %vm2509 = vcmp.lt.f32.partialorder %v2507, 1.0
          %vm2510 = vcmp.lt.f32.partialorder %v2508, 1.0
          %v2511 = vmul.f32 %v2507, 0.5
          %v2512 = vmul.f32 %v2508, 0.5
          %v2513 = vmul.f32 %v2511, %v2507
          %v2514 = vmul.f32 %v2512, %v2508
          %v2515 = vsub.f32 %v2507, 0.5
          %v2516 = vsub.f32 %v2508, 0.5
          %v2517 = vsel %vm2509, %v2513, %v2515
          %v2518 = vsel %vm2510, %v2514, %v2516
          %v2519 = vadd.f32 %v2517, 0.0
          %v2520 = vadd.f32 %v2518, 0.0
          %v2521 = vld [vmem:[%s465 + $0x1] sm:$0x1]
          %v2522 = vld [vmem:[%s465 + $0x5] sm:$0x1]
          %v2523 = vld [vmem:[%s474 + $0x1] sm:$0x1]
          %v2524 = vld [vmem:[%s474 + $0x5] sm:$0x1]
          %v2525 = vsub.f32 %v2521, %v2523
          %v2526 = vsub.f32 %v2522, %v2524
          %v2527 = vand.u32 2147483647, %v2525
          %v2528 = vand.u32 2147483647, %v2526
          %vm2529 = vcmp.lt.f32.partialorder %v2527, 1.0
          %vm2530 = vcmp.lt.f32.partialorder %v2528, 1.0
          %v2531 = vmul.f32 %v2527, 0.5
          %v2532 = vmul.f32 %v2528, 0.5
          %v2533 = vmul.f32 %v2531, %v2527
          %v2534 = vmul.f32 %v2532, %v2528
          %v2535 = vsub.f32 %v2527, 0.5
          %v2536 = vsub.f32 %v2528, 0.5
          %v2537 = vsel %vm2529, %v2533, %v2535
          %v2538 = vsel %vm2530, %v2534, %v2536
          %v2539 = vadd.f32 %v2519, %v2537
          %v2540 = vadd.f32 %v2520, %v2538
          %v2541 = vld [vmem:[%s465 + $0x2] sm:$0x1]
          %v2542 = vld [vmem:[%s465 + $0x6] sm:$0x1]
          %v2543 = vld [vmem:[%s474 + $0x2] sm:$0x1]
          %v2544 = vld [vmem:[%s474 + $0x6] sm:$0x1]
          %v2545 = vsub.f32 %v2541, %v2543
          %v2546 = vsub.f32 %v2542, %v2544
          %v2547 = vand.u32 2147483647, %v2545
          %v2548 = vand.u32 2147483647, %v2546
          %vm2549 = vcmp.lt.f32.partialorder %v2547, 1.0
          %vm2550 = vcmp.lt.f32.partialorder %v2548, 1.0
          %v2551 = vmul.f32 %v2547, 0.5
          %v2552 = vmul.f32 %v2548, 0.5
          %v2553 = vmul.f32 %v2551, %v2547
          %v2554 = vmul.f32 %v2552, %v2548
          %v2555 = vsub.f32 %v2547, 0.5
          %v2556 = vsub.f32 %v2548, 0.5
          %v2557 = vsel %vm2549, %v2553, %v2555
          %v2558 = vsel %vm2550, %v2554, %v2556
          %v2559 = vadd.f32 %v2539, %v2557
          %v2560 = vadd.f32 %v2540, %v2558
          %v2561 = vld [vmem:[%s465 + $0x3] sm:$0x1]
          %v2562 = vld [vmem:[%s465 + $0x7] sm:$0x1]
          %v2563 = vld [vmem:[%s474 + $0x3] sm:$0x1]
          %v2564 = vld [vmem:[%s474 + $0x7] sm:$0x1]
          %v2565 = vsub.f32 %v2561, %v2563
          %v2566 = vsub.f32 %v2562, %v2564
          %v2567 = vand.u32 2147483647, %v2565
          %v2568 = vand.u32 2147483647, %v2566
          %vm2569 = vcmp.lt.f32.partialorder %v2567, 1.0
          %vm2570 = vcmp.lt.f32.partialorder %v2568, 1.0
          %v2571 = vmul.f32 %v2567, 0.5
          %v2572 = vmul.f32 %v2568, 0.5
          %v2573 = vmul.f32 %v2571, %v2567
          %v2574 = vmul.f32 %v2572, %v2568
          %v2575 = vsub.f32 %v2567, 0.5
          %v2576 = vsub.f32 %v2568, 0.5
          %v2577 = vsel %vm2569, %v2573, %v2575
          %v2578 = vsel %vm2570, %v2574, %v2576
          %v2579 = vadd.f32 %v2559, %v2577
          %v2580 = vadd.f32 %v2560, %v2578
          %v2581 = vld [vmem:[#allocation6] sm:$0x1]
          %v2582 = vsel %vm2319, %v2579, 0.0
          %v2583 = vsel %vm2320, %v2580, 0.0
          %v2586 = vcombine.low %v2582, %v2583
          %v2588 = vunpack.c.l.s4 1966171168
          %v2589 = vunpack.c.0.s8 %v2588
          %v2590 = vlaneseq
          %v2591 = vshrl.u32 %v2590, 7
          %v2592 = vsub.s32 %v2589, %v2591
          %v2593 = vrot.slane %v2586, %v2592
          %v2595 = vunpack.c.l.s4 1966171168
          %v2596 = vunpack.c.0.s8 %v2595
          %v2597 = vlaneseq
          %v2598 = vshrl.u32 %v2597, 7
          %v2599 = vsub.s32 %v2596, %v2598
          %v2600 = vrot.slane %v2593, %v2599
          %v2602 = vsel %vm830, %v2600, 0.0
          %2603 = vadd.xlane.f32.xlu0 %v2602
          %v2604 = vpop.xlane.xlu0 %2603
          %v2605 = vrot.slane %v2604, 4
          %v2606 = vadd.f32 %v2604, %v2605
          %v2607 = vrot.slane %v2606, 2
          %v2608 = vadd.f32 %v2606, %v2607
          %v2609 = vrot.slane %v2608, 1
          %v2610 = vadd.f32 %v2608, %v2609
          %s2611 = vtos %v2610
          %v2612 = vstv %s2611
          %v2613 = vadd.f32 %v2581, %v2612
          %2614 = vst.msk [vmem:[#allocation6] sm:$0x1] %vm2499, %v2613
          %v2615 = vld [vmem:[#allocation8] sm:$0x1]
          %v2616 = vsel %vm2319, 1, 0
          %v2617 = vsel %vm2320, 1, 0
          %v2618 = vcvt.s32.f32 %v2616
          %v2619 = vcvt.s32.f32 %v2617
          %v2622 = vcombine.low %v2618, %v2619
          %v2624 = vunpack.c.l.s4 1966171168
          %v2625 = vunpack.c.0.s8 %v2624
          %v2626 = vlaneseq
          %v2627 = vshrl.u32 %v2626, 7
          %v2628 = vsub.s32 %v2625, %v2627
          %v2629 = vrot.slane %v2622, %v2628
          %v2631 = vunpack.c.l.s4 1966171168
          %v2632 = vunpack.c.0.s8 %v2631
          %v2633 = vlaneseq
          %v2634 = vshrl.u32 %v2633, 7
          %v2635 = vsub.s32 %v2632, %v2634
          %v2636 = vrot.slane %v2629, %v2635
          %v2638 = vsel %vm830, %v2636, 0.0
          %2639 = vadd.xlane.f32.xlu0 %v2638
          %v2640 = vpop.xlane.xlu0 %2639
          %v2641 = vrot.slane %v2640, 4
          %v2642 = vadd.f32 %v2640, %v2641
          %v2643 = vrot.slane %v2642, 2
          %v2644 = vadd.f32 %v2642, %v2643
          %v2645 = vrot.slane %v2644, 1
          %v2646 = vadd.f32 %v2644, %v2645
          %s2647 = vtos %v2646
          %v2648 = vstv %s2647
          %v2649 = vadd.f32 %v2615, %v2648
          %2650 = vst.msk [vmem:[#allocation8] sm:$0x1] %vm2499, %v2649
          %p2651 = scmp.eq.s32.totalorder %s36, 1
          %p2652 = pnand %p546, %p2651
          %p2653 = pneg %p2652
          // Predicated region
          $region123: #{tpu_custom_call.1} parent=121 // pred_check
            _
          $region124: #{tpu_custom_call.1} parent=121 // pred_check_branch
            %2655 = sbr.rel (%p2652) target = $region126
          $region125: #{tpu_custom_call.1} parent=121 // pred_region
            %v2656 = vld [vmem:[#allocation8] sm:$0x1]
            %v2657 = vmax.f32 %v2656, 1.0
            %v2658 = vld [vmem:[#allocation6] sm:$0x1]
            %v2659 = vrcp.pop %v2657
            %v2660 = vmul.f32 %v2658, %v2659
            %2661 = vst.msk [vmem:[#allocation19] sm:$0x1] %vm2499, %v2660
            %v2662 = vld [vmem:[#allocation7] sm:$0x1]
            %v2663 = vmul.f32 %v2662, %v2659
            %2664 = vst.msk [vmem:[#allocation20] sm:$0x1] %vm2499, %v2663
          $region126: #{tpu_custom_call.1} parent=121 // pred_fallthru
            _
        $region122: #{tpu_custom_call.1} parent=73 // pred_fallthru
          _
        // Predicated region
        $region127: #{tpu_custom_call.1} parent=73 // pred_check
          %p2665 = pneg %p230
        $region128: #{tpu_custom_call.1} parent=73 // pred_check_branch
          %2667 = sbr.rel (%p2665) target = $region130
        $region129: #{tpu_custom_call.1} parent=73 // pred_region
          %s2669 = ssub.s32 16, 16
          %2670 = vsyncadd [#allocation11], %s2669
          %s2672 = sshll.u32 [#allocation19], 4
          %s2673 = int_to_ptr.vmem [resolvable:$true] %s2672
          %2675 = dma.vmem_to_hbm [thread:$0]  %s2673, 16, %s6, [#allocation11]
        $region130: #{tpu_custom_call.1} parent=73 // pred_fallthru
          _
        // Predicated region
        $region131: #{tpu_custom_call.1} parent=73 // pred_check
          %p2676 = pneg %p251
        $region132: #{tpu_custom_call.1} parent=73 // pred_check_branch
          %2678 = sbr.rel (%p2676) target = $region134
        $region133: #{tpu_custom_call.1} parent=73 // pred_region
          %s2680 = ssub.s32 16, 16
          %2681 = vsyncadd [#allocation21], %s2680
          %s2683 = sshll.u32 [#allocation20], 4
          %s2684 = int_to_ptr.vmem [resolvable:$true] %s2683
          %2686 = dma.vmem_to_hbm [thread:$0]  %s2684, 16, %s7, [#allocation21]
        $region134: #{tpu_custom_call.1} parent=73 // pred_fallthru
          _
        // Predicated region
        $region135: #{tpu_custom_call.1} parent=73 // pred_check
          %p2687 = pneg %p230
        $region136: #{tpu_custom_call.1} parent=73 // pred_check_branch
          %2689 = sbr.rel (%p2687) target = $region138
        $region137: #{tpu_custom_call.1} parent=73 // pred_region
          %2690 = dma.done [#allocation11], 16
        $region138: #{tpu_custom_call.1} parent=73 // pred_fallthru
          _
        // Predicated region
        $region139: #{tpu_custom_call.1} parent=73 // pred_check
          %p2691 = pneg %p251
        $region140: #{tpu_custom_call.1} parent=73 // pred_check_branch
          %2693 = sbr.rel (%p2691) target = $region142
        $region141: #{tpu_custom_call.1} parent=73 // pred_region
          %2694 = dma.done [#allocation21], 16
        $region142: #{tpu_custom_call.1} parent=73 // pred_fallthru
          _
      $region74: #{tpu_custom_call.1} parent=5 // pred_fallthru
        _
      %p2695 = scmp.le.s32.totalorder 2, %s25
      // Predicated region
      $region143: #{tpu_custom_call.1} parent=5 // pred_check
        %p2696 = pneg %p2695
      $region144: #{tpu_custom_call.1} parent=5 // pred_check_branch
        %2698 = sbr.rel (%p2696) target = $region146
      $region145: #{tpu_custom_call.1} parent=5 // pred_region
        %s2699 = ssub.s32 %s25, 2
      $region146: #{tpu_custom_call.1} parent=5 // pred_fallthru
        _
    $region6: #{tpu_custom_call.1} parent=1 // loop_footer
      %s29 = sadd.s32 1, %s25
    $region7: #{tpu_custom_call.1} parent=1 // loop_footer_branch
      %24 = sbr.rel target = $region3
    $region8: #{tpu_custom_call.1} parent=1 // loop_exit
      _
    %2700 = vsyncpa [#allocation10], 1
    %s2701 = scalar_lea.sflag [#allocation10], 1
    %2702 = vsyncpa %s2701, 1
    %2703 = vsyncpa [#allocation13], 1
    %s2704 = scalar_lea.sflag [#allocation13], 1
    %2705 = vsyncpa %s2704, 1
    %2706 = vsyncpa [#allocation16], 1
    %s2707 = scalar_lea.sflag [#allocation16], 1
    %2708 = vsyncpa %s2707, 1
    %2709 = vsyncpa [#allocation11], 1
    %s2710 = scalar_lea.sflag [#allocation11], 1
    %2711 = vsyncpa %s2710, 1
    %2712 = vsyncpa [#allocation21], 1

</llo_original>
